<compile_context>
chip_gen: v5e
topology: v5e:2x2
jax: 0.10.0
libtpu: 0.0.40
codegen_flags: <defaults>
</compile_context>

<pallas_src>
import functools

import jax
import jax.numpy as jnp
from jax.experimental import pallas as pl
from jax.experimental.pallas import tpu as pltpu

LN_EPS = 1e-5  # torch.nn.LayerNorm default


def _layer_norm(x, gamma, beta):
    mu = jnp.mean(x, axis=-1, keepdims=True)
    xc = x - mu
    var = jnp.mean(xc * xc, axis=-1, keepdims=True)
    return xc * jax.lax.rsqrt(var + LN_EPS) * gamma + beta


def _encoder_kernel(x_ref, wqkv_ref, bqkv_ref, wo_ref, w1_ref, b1_ref,
                    w2_ref, vecs_ref, o_ref, act_ref,
                    *, B, L, n_head, d_k, d_v, approx_recip):
    """One grid step == one encoder layer; activation carried in VMEM."""
    layer = pl.program_id(0)

    @pl.when(layer == 0)
    def _():
        act_ref[...] = x_ref[...].astype(jnp.float32)

    x = act_ref[...]                              # (M, D) f32, M = B*L
    cdt = wqkv_ref.dtype                          # matmul operand dtype (f32/bf16)
    M = B * L
    h_qk = n_head * d_k

    # ---- fused QKV projection, M = B*L rows, N = 3*H*dk columns -----------
    # (1/sqrt(d_k) is already folded into the q columns of wqkv/bqkv)
    qkv = jnp.dot(x.astype(cdt), wqkv_ref[0],
                  preferred_element_type=jnp.float32) + bqkv_ref[0]

    wo = wo_ref[0]                                # (H*dv, D)
    vecs = vecs_ref[0]                            # (6, D): bo,g1,b1,b2,g2,b2
    D = wo.shape[-1]

    # ---- attention: per-head static loop, batched over B ------------------
    # Head contexts are folded straight into the output projection, so there
    # is no concat / lane-shuffle; each matmul has M=B*L rows.
    mha = jnp.zeros((M, D), jnp.float32)
    for h in range(n_head):                       # static unroll (n_head small)
        qh = qkv[:, h * d_k:(h + 1) * d_k].reshape(B, L, d_k).astype(cdt)
        kh = qkv[:, h_qk + h * d_k:h_qk + (h + 1) * d_k].reshape(B, L, d_k).astype(cdt)
        vh = qkv[:, 2 * h_qk + h * d_v:2 * h_qk + (h + 1) * d_v].reshape(B, L, d_v).astype(cdt)
        s = jnp.einsum('bqd,bkd->bqk', qh, kh,
                       preferred_element_type=jnp.float32)
        m = jnp.max(s, axis=-1, keepdims=True)
        p = jnp.exp(s - m)
        denom = jnp.sum(p, axis=-1, keepdims=True)
        attn = p * pl.reciprocal(denom, approx=approx_recip)   # EUP slot
        ctx = jnp.einsum('bqk,bkd->bqd', attn.astype(cdt), vh,
                         preferred_element_type=jnp.float32)
        mha = mha + jnp.dot(ctx.reshape(M, d_v).astype(cdt),
                            wo[h * d_v:(h + 1) * d_v, :],
                            preferred_element_type=jnp.float32)
    mha = mha + vecs[0:1, :]                      # bo
    y1 = _layer_norm(mha + x, vecs[1:2, :], vecs[2:3, :])

    # ---- position-wise FFN (1x1 convs == Linears), M = B*L rows -----------
    hid = jnp.maximum(
        jnp.dot(y1.astype(cdt), w1_ref[0],
                preferred_element_type=jnp.float32) + b1_ref[0], 0.0)
    ffn = jnp.dot(hid.astype(cdt), w2_ref[0],
                  preferred_element_type=jnp.float32) + vecs[3:4, :]
    y2 = _layer_norm(ffn + y1, vecs[4:5, :], vecs[5:6, :])

    act_ref[...] = y2                             # carry to next layer
    o_ref[...] = y2.astype(o_ref.dtype)           # last layer's value survives


def pack_encoder_params(layer_params, *, n_head, d_k, d_v,
                        param_dtype=jnp.float32):
    """Stack per-layer params along a leading layer axis and fuse/pack them."""
    scale = 1.0 / (d_k ** 0.5)                    # fold softmax temperature
    wqkv, bqkv, wo, w1, b1, w2, vecs = [], [], [], [], [], [], []
    for p in layer_params:
        wqkv.append(jnp.concatenate([p['wq_t'] * scale, p['wk_t'], p['wv_t']],
                                    axis=1))
        bqkv.append(jnp.concatenate([p['bq'] * scale, p['bk'], p['bv']],
                                    axis=1))
        wo.append(p['wo_t'])
        w1.append(p['w1_t'])
        b1.append(p['b1'])
        w2.append(p['w2_t'])
        vecs.append(jnp.concatenate(
            [p['bo'], p['ln1_g'], p['ln1_b'], p['b2'], p['ln2_g'], p['ln2_b']],
            axis=0))
    return dict(
        wqkv=jnp.stack(wqkv).astype(param_dtype),   # (nl, D, 3*H*dk)
        bqkv=jnp.stack(bqkv),                       # (nl, 1, 3*H*dk)  f32
        wo=jnp.stack(wo).astype(param_dtype),       # (nl, H*dv, D)
        w1=jnp.stack(w1).astype(param_dtype),       # (nl, D, d_inner)
        b1=jnp.stack(b1),                           # (nl, 1, d_inner) f32
        w2=jnp.stack(w2).astype(param_dtype),       # (nl, d_inner, D)
        vecs=jnp.stack(vecs),                       # (nl, 6, D)       f32
    )


def encoder_forward(edges, packed, *, n_head, d_k, d_v, approx_recip=True):
    """Fused Encoder forward: a single pallas_call over all layers."""
    B, L, D = edges.shape
    M = B * L
    n_layers = packed['wqkv'].shape[0]
    x2 = edges.reshape(M, D)                      # fold batch into matmul rows

    def per_layer_spec(arr):
        shp = arr.shape
        return pl.BlockSpec((1,) + shp[1:],
                            lambda l, _n=len(shp) - 1: (l,) + (0,) * _n)

    weights = (packed['wqkv'], packed['bqkv'], packed['wo'],
               packed['w1'], packed['b1'], packed['w2'], packed['vecs'])
    in_specs = ([pl.BlockSpec((M, D), lambda l: (0, 0))] +
                [per_layer_spec(w) for w in weights])

    out = pl.pallas_call(
        functools.partial(_encoder_kernel, B=B, L=L, n_head=n_head,
                          d_k=d_k, d_v=d_v, approx_recip=approx_recip),
        out_shape=jax.ShapeDtypeStruct((M, D), edges.dtype),
        grid_spec=pltpu.PrefetchScalarGridSpec(
            num_scalar_prefetch=0,
            grid=(n_layers,),                     # sequential over layers
            in_specs=in_specs,
            out_specs=pl.BlockSpec((M, D), lambda l: (0, 0)),
            scratch_shapes=[pltpu.VMEM((M, D), jnp.float32)],  # activation carry
        ),
        compiler_params=pltpu.CompilerParams(
            dimension_semantics=("arbitrary",),   # layers are a dependency chain
            vmem_limit_bytes=32 * 1024 * 1024,    # explicit (v5e default is 16 MiB)
        ),
    )(x2, *weights)
    return out.reshape(B, L, D)


# ------------------------- pure-JAX reference -------------------------
def reference_encoder(edges, layer_params, *, n_head, d_k, d_v):
    out = edges
    scale = 1.0 / (d_k ** 0.5)
    for p in layer_params:
        B, L, _ = out.shape
        residual = out
        q = out @ p['wq_t'] + p['bq']
        k = out @ p['wk_t'] + p['bk']
        v = out @ p['wv_t'] + p['bv']
        qh = q.reshape(B, L, n_head, d_k).transpose(0, 2, 1, 3)
        kh = k.reshape(B, L, n_head, d_k).transpose(0, 2, 1, 3)
        vh = v.reshape(B, L, n_head, d_v).transpose(0, 2, 1, 3)
        s = jnp.einsum('bhqd,bhkd->bhqk', qh, kh) * scale
        attn = jax.nn.softmax(s, axis=-1)
        ctx = jnp.einsum('bhqk,bhkd->bhqd', attn, vh)
        ctx = ctx.transpose(0, 2, 1, 3).reshape(B, L, n_head * d_v)
        mha = ctx @ p['wo_t'] + p['bo']
        y1 = _layer_norm(mha + residual, p['ln1_g'], p['ln1_b'])
        hid = jax.nn.relu(y1 @ p['w1_t'] + p['b1'])
        ffn = hid @ p['w2_t'] + p['b2']
        out = _layer_norm(ffn + y1, p['ln2_g'], p['ln2_b'])
    return out


def init_layer_params(key, d_model, d_inner, n_head, d_k, d_v):
    ks = jax.random.split(key, 16)

    def linear(kw, kb, out_dim, in_dim, std):
        w = jax.random.normal(kw, (out_dim, in_dim), jnp.float32) * std
        b = (jax.random.uniform(kb, (1, out_dim), jnp.float32) - 0.5) * 0.1
        return w.T, b                                # pre-transposed (in,out)

    std_qk = (2.0 / (d_model + d_k)) ** 0.5
    std_v = (2.0 / (d_model + d_v)) ** 0.5
    wq_t, bq = linear(ks[0], ks[1], n_head * d_k, d_model, std_qk)
    wk_t, bk = linear(ks[2], ks[3], n_head * d_k, d_model, std_qk)
    wv_t, bv = linear(ks[4], ks[5], n_head * d_v, d_model, std_v)
    wo_t, bo = linear(ks[6], ks[7], d_model, n_head * d_v,
                      (2.0 / (n_head * d_v + d_model)) ** 0.5)
    w1_t, b1 = linear(ks[8], ks[9], d_inner, d_model, (2.0 / d_model) ** 0.5)
    w2_t, b2 = linear(ks[10], ks[11], d_model, d_inner, (2.0 / d_inner) ** 0.5)
    ln1_g = 1.0 + 0.1 * jax.random.normal(ks[12], (1, d_model), jnp.float32)
    ln1_b = 0.1 * jax.random.normal(ks[13], (1, d_model), jnp.float32)
    ln2_g = 1.0 + 0.1 * jax.random.normal(ks[14], (1, d_model), jnp.float32)
    ln2_b = 0.1 * jax.random.normal(ks[15], (1, d_model), jnp.float32)
    return dict(wq_t=wq_t, bq=bq, wk_t=wk_t, bk=bk, wv_t=wv_t, bv=bv,
                wo_t=wo_t, bo=bo, ln1_g=ln1_g, ln1_b=ln1_b,
                w1_t=w1_t, b1=b1, w2_t=w2_t, b2=b2, ln2_g=ln2_g, ln2_b=ln2_b)


if __name__ == "__main__":
    B, L = 2, 8
    d_model, d_inner = 32, 64
    n_head, d_k, d_v = 4, 8, 8
    n_layers = 2

    key = jax.random.PRNGKey(0)
    k_x, *k_layers = jax.random.split(key, 1 + n_layers)
    edges = jax.random.normal(k_x, (B, L, d_model), jnp.float32)
    layer_params = [init_layer_params(k, d_model, d_inner, n_head, d_k, d_v)
                    for k in k_layers]

    # Reference + f32 correctness run use full-f32 matmul precision so the
    # check stays tight; the fast bf16 path below runs at default precision.
    with jax.default_matmul_precision("highest"):
        ref = jax.block_until_ready(
            reference_encoder(edges, layer_params,
                              n_head=n_head, d_k=d_k, d_v=d_v))

        packed_f32 = pack_encoder_params(layer_params, n_head=n_head, d_k=d_k,
                                         d_v=d_v, param_dtype=jnp.float32)
        out_f32 = jax.block_until_ready(
            encoder_forward(edges, packed_f32, n_head=n_head, d_k=d_k,
                            d_v=d_v, approx_recip=False))
    assert out_f32.shape == (B, L, d_model)
    assert jnp.allclose(out_f32, ref, atol=1e-3, rtol=1e-3), "f32 mismatch"

    # Fast path: bf16 matmul operands (MXU-native on v6e/v7x) + approximate
    # EUP reciprocal; looser tolerance vs the f32 reference.
    packed_bf16 = pack_encoder_params(layer_params, n_head=n_head, d_k=d_k,
                                      d_v=d_v, param_dtype=jnp.bfloat16)
    out_bf16 = jax.block_until_ready(
        encoder_forward(edges, packed_bf16, n_head=n_head, d_k=d_k,
                        d_v=d_v, approx_recip=True))
    assert out_bf16.shape == (B, L, d_model)
    assert jnp.allclose(out_bf16, ref, atol=8e-2, rtol=8e-2), "bf16 mismatch"

    print("KERNEL_OK")
</pallas_src>

<mosaic_0001>
module attributes {stable_mosaic.version = 11 : i64} {
  func.func @_encoder_kernel(%arg0: i32, %arg1: memref<16x32xf32, #tpu.memory_space<vmem>>, %arg2: memref<1x32x96xf32, #tpu.memory_space<vmem>>, %arg3: memref<1x1x96xf32, #tpu.memory_space<vmem>>, %arg4: memref<1x32x32xf32, #tpu.memory_space<vmem>>, %arg5: memref<1x32x64xf32, #tpu.memory_space<vmem>>, %arg6: memref<1x1x64xf32, #tpu.memory_space<vmem>>, %arg7: memref<1x64x32xf32, #tpu.memory_space<vmem>>, %arg8: memref<1x6x32xf32, #tpu.memory_space<vmem>>, %arg9: memref<16x32xf32, #tpu.memory_space<vmem>>, %arg10: memref<16x32xf32, #tpu.memory_space<vmem>>) attributes {dimension_semantics = [#tpu.dimension_semantics<arbitrary>], iteration_bounds = array<i64: 2>, scalar_prefetch = 0 : i64, scratch_operands = 1 : i64, tpu.core_type = #tpu.core_type<tc>, window_params = [{pipeline_mode = #tpu.pipeline_mode<synchronous>, transform_indices = @transform_0, window_bounds = array<i64: 16, 32>}, {transform_indices = @transform_1, window_bounds = array<i64: 1, 32, 96>}, {transform_indices = @transform_2, window_bounds = array<i64: 1, 1, 96>}, {transform_indices = @transform_3, window_bounds = array<i64: 1, 32, 32>}, {transform_indices = @transform_4, window_bounds = array<i64: 1, 32, 64>}, {transform_indices = @transform_5, window_bounds = array<i64: 1, 1, 64>}, {transform_indices = @transform_6, window_bounds = array<i64: 1, 64, 32>}, {transform_indices = @transform_7, window_bounds = array<i64: 1, 6, 32>}, {pipeline_mode = #tpu.pipeline_mode<synchronous>, transform_indices = @transform_8, window_bounds = array<i64: 16, 32>}]} {
    %c0_i32 = arith.constant 0 : i32
    %0 = arith.cmpi eq, %arg0, %c0_i32 : i32
    %1 = arith.extui %0 : i1 to i32
    %c0_i32_0 = arith.constant 0 : i32
    %2 = arith.cmpi ne, %1, %c0_i32_0 : i32
    scf.if %2 {
      %c0_61 = arith.constant 0 : index
      %c0_62 = arith.constant 0 : index
      %170 = vector.load %arg1[%c0_61, %c0_62] : memref<16x32xf32, #tpu.memory_space<vmem>>, vector<16x32xf32>
      %c0_63 = arith.constant 0 : index
      %c0_64 = arith.constant 0 : index
      %171 = vector.load %arg10[%c0_63, %c0_64] : memref<16x32xf32, #tpu.memory_space<vmem>>, vector<16x32xf32>
      tpu.vector_store %arg10[%c0_63, %c0_64], %170 {strides = array<i32>} : memref<16x32xf32, #tpu.memory_space<vmem>>, vector<16x32xf32>,
    } else {
    }
    %c0 = arith.constant 0 : index
    %c0_1 = arith.constant 0 : index
    %3 = vector.load %arg10[%c0, %c0_1] : memref<16x32xf32, #tpu.memory_space<vmem>>, vector<16x32xf32>
    %c0_2 = arith.constant 0 : index
    %c0_3 = arith.constant 0 : index
    %c0_4 = arith.constant 0 : index
    %4 = vector.load %arg2[%c0_2, %c0_3, %c0_4] : memref<1x32x96xf32, #tpu.memory_space<vmem>>, vector<1x32x96xf32>
    %5 = vector.shape_cast %4 : vector<1x32x96xf32> to vector<32x96xf32>
    %cst = arith.constant dense<0.000000e+00> : vector<16x96xf32>
    %6 = tpu.matmul %3, %5, %cst {dimension_numbers = #tpu.dot_dimension_numbers<[1], [0], [0], [1], [0, 0, 1, 1], [], []>, precision = #tpu.contract_precision<fp32>} : vector<16x32xf32>, vector<32x96xf32>, vector<16x96xf32> -> vector<16x96xf32>
    %c0_5 = arith.constant 0 : index
    %c0_6 = arith.constant 0 : index
    %c0_7 = arith.constant 0 : index
    %7 = vector.load %arg3[%c0_5, %c0_6, %c0_7] : memref<1x1x96xf32, #tpu.memory_space<vmem>>, vector<1x1x96xf32>
    %8 = vector.shape_cast %7 : vector<1x1x96xf32> to vector<1x96xf32>
    %9 = vector.broadcast %8 : vector<1x96xf32> to vector<16x96xf32>
    %10 = arith.addf %6, %9 : vector<16x96xf32>
    %c0_8 = arith.constant 0 : index
    %c0_9 = arith.constant 0 : index
    %c0_10 = arith.constant 0 : index
    %11 = vector.load %arg4[%c0_8, %c0_9, %c0_10] : memref<1x32x32xf32, #tpu.memory_space<vmem>>, vector<1x32x32xf32>
    %12 = vector.shape_cast %11 : vector<1x32x32xf32> to vector<32x32xf32>
    %c0_11 = arith.constant 0 : index
    %c0_12 = arith.constant 0 : index
    %c0_13 = arith.constant 0 : index
    %13 = vector.load %arg8[%c0_11, %c0_12, %c0_13] : memref<1x6x32xf32, #tpu.memory_space<vmem>>, vector<1x6x32xf32>
    %14 = vector.shape_cast %13 : vector<1x6x32xf32> to vector<6x32xf32>
    %cst_14 = arith.constant 0.000000e+00 : f32
    %15 = vector.broadcast %cst_14 : f32 to vector<16x32xf32>
    %16 = vector.extract_strided_slice %10 {offsets = [0, 0], sizes = [16, 8], strides = [1, 1]} : vector<16x96xf32> to vector<16x8xf32>
    %17 = vector.shape_cast %16 : vector<16x8xf32> to vector<2x8x8xf32>
    %18 = vector.extract_strided_slice %10 {offsets = [0, 32], sizes = [16, 8], strides = [1, 1]} : vector<16x96xf32> to vector<16x8xf32>
    %19 = vector.shape_cast %18 : vector<16x8xf32> to vector<2x8x8xf32>
    %20 = vector.extract_strided_slice %10 {offsets = [0, 64], sizes = [16, 8], strides = [1, 1]} : vector<16x96xf32> to vector<16x8xf32>
    %21 = vector.shape_cast %20 : vector<16x8xf32> to vector<2x8x8xf32>
    "tpu.trace_start"() <{level = 10 : i32, message = "bqd,bkd->bqk"}> : () -> ()
    %cst_15 = arith.constant dense<0.000000e+00> : vector<2x8x8xf32>
    %22 = tpu.matmul %17, %19, %cst_15 {dimension_numbers = #tpu.dot_dimension_numbers<[2], [2], [1], [1], [0, 0, 0, 1, 1, 1], [0], [0]>, precision = #tpu.contract_precision<fp32>} : vector<2x8x8xf32>, vector<2x8x8xf32>, vector<2x8x8xf32> -> vector<2x8x8xf32>
    "tpu.trace_stop"() : () -> ()
    %cst_16 = arith.constant dense<0xFF800000> : vector<2x8xf32>
    %23 = vector.multi_reduction <maximumf>, %22, %cst_16 [2] : vector<2x8x8xf32> to vector<2x8xf32>
    %24 = vector.shape_cast %23 : vector<2x8xf32> to vector<2x8x1xf32>
    %25 = vector.broadcast %24 : vector<2x8x1xf32> to vector<2x8x8xf32>
    %26 = arith.subf %22, %25 : vector<2x8x8xf32>
    %27 = math.exp %26 : vector<2x8x8xf32>
    %cst_17 = arith.constant dense<0.000000e+00> : vector<2x8xf32>
    %28 = vector.multi_reduction <add>, %27, %cst_17 [2] : vector<2x8x8xf32> to vector<2x8xf32>
    %29 = vector.shape_cast %28 : vector<2x8xf32> to vector<2x8x1xf32>
    %30 = tpu.reciprocal %29 : vector<2x8x1xf32> -> vector<2x8x1xf32>
    %31 = vector.broadcast %30 : vector<2x8x1xf32> to vector<2x8x8xf32>
    %32 = arith.mulf %27, %31 : vector<2x8x8xf32>
    "tpu.trace_start"() <{level = 10 : i32, message = "bqk,bkd->bqd"}> : () -> ()
    %cst_18 = arith.constant dense<0.000000e+00> : vector<2x8x8xf32>
    %33 = tpu.matmul %32, %21, %cst_18 {dimension_numbers = #tpu.dot_dimension_numbers<[2], [1], [1], [2], [0, 0, 0, 1, 1, 2], [0], [0]>, precision = #tpu.contract_precision<fp32>} : vector<2x8x8xf32>, vector<2x8x8xf32>, vector<2x8x8xf32> -> vector<2x8x8xf32>
    "tpu.trace_stop"() : () -> ()
    %34 = vector.shape_cast %33 : vector<2x8x8xf32> to vector<16x8xf32>
    %35 = vector.extract_strided_slice %12 {offsets = [0, 0], sizes = [8, 32], strides = [1, 1]} : vector<32x32xf32> to vector<8x32xf32>
    %cst_19 = arith.constant dense<0.000000e+00> : vector<16x32xf32>
    %36 = tpu.matmul %34, %35, %cst_19 {dimension_numbers = #tpu.dot_dimension_numbers<[1], [0], [0], [1], [0, 0, 1, 1], [], []>, precision = #tpu.contract_precision<fp32>} : vector<16x8xf32>, vector<8x32xf32>, vector<16x32xf32> -> vector<16x32xf32>
    %37 = arith.addf %15, %36 : vector<16x32xf32>
    %38 = vector.extract_strided_slice %10 {offsets = [0, 8], sizes = [16, 8], strides = [1, 1]} : vector<16x96xf32> to vector<16x8xf32>
    %39 = vector.shape_cast %38 : vector<16x8xf32> to vector<2x8x8xf32>
    %40 = vector.extract_strided_slice %10 {offsets = [0, 40], sizes = [16, 8], strides = [1, 1]} : vector<16x96xf32> to vector<16x8xf32>
    %41 = vector.shape_cast %40 : vector<16x8xf32> to vector<2x8x8xf32>
    %42 = vector.extract_strided_slice %10 {offsets = [0, 72], sizes = [16, 8], strides = [1, 1]} : vector<16x96xf32> to vector<16x8xf32>
    %43 = vector.shape_cast %42 : vector<16x8xf32> to vector<2x8x8xf32>
    "tpu.trace_start"() <{level = 10 : i32, message = "bqd,bkd->bqk"}> : () -> ()
    %cst_20 = arith.constant dense<0.000000e+00> : vector<2x8x8xf32>
    %44 = tpu.matmul %39, %41, %cst_20 {dimension_numbers = #tpu.dot_dimension_numbers<[2], [2], [1], [1], [0, 0, 0, 1, 1, 1], [0], [0]>, precision = #tpu.contract_precision<fp32>} : vector<2x8x8xf32>, vector<2x8x8xf32>, vector<2x8x8xf32> -> vector<2x8x8xf32>
    "tpu.trace_stop"() : () -> ()
    %cst_21 = arith.constant dense<0xFF800000> : vector<2x8xf32>
    %45 = vector.multi_reduction <maximumf>, %44, %cst_21 [2] : vector<2x8x8xf32> to vector<2x8xf32>
    %46 = vector.shape_cast %45 : vector<2x8xf32> to vector<2x8x1xf32>
    %47 = vector.broadcast %46 : vector<2x8x1xf32> to vector<2x8x8xf32>
    %48 = arith.subf %44, %47 : vector<2x8x8xf32>
    %49 = math.exp %48 : vector<2x8x8xf32>
    %cst_22 = arith.constant dense<0.000000e+00> : vector<2x8xf32>
    %50 = vector.multi_reduction <add>, %49, %cst_22 [2] : vector<2x8x8xf32> to vector<2x8xf32>
    %51 = vector.shape_cast %50 : vector<2x8xf32> to vector<2x8x1xf32>
    %52 = tpu.reciprocal %51 : vector<2x8x1xf32> -> vector<2x8x1xf32>
    %53 = vector.broadcast %52 : vector<2x8x1xf32> to vector<2x8x8xf32>
    %54 = arith.mulf %49, %53 : vector<2x8x8xf32>
    "tpu.trace_start"() <{level = 10 : i32, message = "bqk,bkd->bqd"}> : () -> ()
    %cst_23 = arith.constant dense<0.000000e+00> : vector<2x8x8xf32>
    %55 = tpu.matmul %54, %43, %cst_23 {dimension_numbers = #tpu.dot_dimension_numbers<[2], [1], [1], [2], [0, 0, 0, 1, 1, 2], [0], [0]>, precision = #tpu.contract_precision<fp32>} : vector<2x8x8xf32>, vector<2x8x8xf32>, vector<2x8x8xf32> -> vector<2x8x8xf32>
    "tpu.trace_stop"() : () -> ()
    %56 = vector.shape_cast %55 : vector<2x8x8xf32> to vector<16x8xf32>
    %57 = vector.extract_strided_slice %12 {offsets = [8, 0], sizes = [8, 32], strides = [1, 1]} : vector<32x32xf32> to vector<8x32xf32>
    %cst_24 = arith.constant dense<0.000000e+00> : vector<16x32xf32>
    %58 = tpu.matmul %56, %57, %cst_24 {dimension_numbers = #tpu.dot_dimension_numbers<[1], [0], [0], [1], [0, 0, 1, 1], [], []>, precision = #tpu.contract_precision<fp32>} : vector<16x8xf32>, vector<8x32xf32>, vector<16x32xf32> -> vector<16x32xf32>
    %59 = arith.addf %37, %58 : vector<16x32xf32>
    %60 = vector.extract_strided_slice %10 {offsets = [0, 16], sizes = [16, 8], strides = [1, 1]} : vector<16x96xf32> to vector<16x8xf32>
    %61 = vector.shape_cast %60 : vector<16x8xf32> to vector<2x8x8xf32>
    %62 = vector.extract_strided_slice %10 {offsets = [0, 48], sizes = [16, 8], strides = [1, 1]} : vector<16x96xf32> to vector<16x8xf32>
    %63 = vector.shape_cast %62 : vector<16x8xf32> to vector<2x8x8xf32>
    %64 = vector.extract_strided_slice %10 {offsets = [0, 80], sizes = [16, 8], strides = [1, 1]} : vector<16x96xf32> to vector<16x8xf32>
    %65 = vector.shape_cast %64 : vector<16x8xf32> to vector<2x8x8xf32>
    "tpu.trace_start"() <{level = 10 : i32, message = "bqd,bkd->bqk"}> : () -> ()
    %cst_25 = arith.constant dense<0.000000e+00> : vector<2x8x8xf32>
    %66 = tpu.matmul %61, %63, %cst_25 {dimension_numbers = #tpu.dot_dimension_numbers<[2], [2], [1], [1], [0, 0, 0, 1, 1, 1], [0], [0]>, precision = #tpu.contract_precision<fp32>} : vector<2x8x8xf32>, vector<2x8x8xf32>, vector<2x8x8xf32> -> vector<2x8x8xf32>
    "tpu.trace_stop"() : () -> ()
    %cst_26 = arith.constant dense<0xFF800000> : vector<2x8xf32>
    %67 = vector.multi_reduction <maximumf>, %66, %cst_26 [2] : vector<2x8x8xf32> to vector<2x8xf32>
    %68 = vector.shape_cast %67 : vector<2x8xf32> to vector<2x8x1xf32>
    %69 = vector.broadcast %68 : vector<2x8x1xf32> to vector<2x8x8xf32>
    %70 = arith.subf %66, %69 : vector<2x8x8xf32>
    %71 = math.exp %70 : vector<2x8x8xf32>
    %cst_27 = arith.constant dense<0.000000e+00> : vector<2x8xf32>
    %72 = vector.multi_reduction <add>, %71, %cst_27 [2] : vector<2x8x8xf32> to vector<2x8xf32>
    %73 = vector.shape_cast %72 : vector<2x8xf32> to vector<2x8x1xf32>
    %74 = tpu.reciprocal %73 : vector<2x8x1xf32> -> vector<2x8x1xf32>
    %75 = vector.broadcast %74 : vector<2x8x1xf32> to vector<2x8x8xf32>
    %76 = arith.mulf %71, %75 : vector<2x8x8xf32>
    "tpu.trace_start"() <{level = 10 : i32, message = "bqk,bkd->bqd"}> : () -> ()
    %cst_28 = arith.constant dense<0.000000e+00> : vector<2x8x8xf32>
    %77 = tpu.matmul %76, %65, %cst_28 {dimension_numbers = #tpu.dot_dimension_numbers<[2], [1], [1], [2], [0, 0, 0, 1, 1, 2], [0], [0]>, precision = #tpu.contract_precision<fp32>} : vector<2x8x8xf32>, vector<2x8x8xf32>, vector<2x8x8xf32> -> vector<2x8x8xf32>
    "tpu.trace_stop"() : () -> ()
    %78 = vector.shape_cast %77 : vector<2x8x8xf32> to vector<16x8xf32>
    %79 = vector.extract_strided_slice %12 {offsets = [16, 0], sizes = [8, 32], strides = [1, 1]} : vector<32x32xf32> to vector<8x32xf32>
    %cst_29 = arith.constant dense<0.000000e+00> : vector<16x32xf32>
    %80 = tpu.matmul %78, %79, %cst_29 {dimension_numbers = #tpu.dot_dimension_numbers<[1], [0], [0], [1], [0, 0, 1, 1], [], []>, precision = #tpu.contract_precision<fp32>} : vector<16x8xf32>, vector<8x32xf32>, vector<16x32xf32> -> vector<16x32xf32>
    %81 = arith.addf %59, %80 : vector<16x32xf32>
    %82 = vector.extract_strided_slice %10 {offsets = [0, 24], sizes = [16, 8], strides = [1, 1]} : vector<16x96xf32> to vector<16x8xf32>
    %83 = vector.shape_cast %82 : vector<16x8xf32> to vector<2x8x8xf32>
    %84 = vector.extract_strided_slice %10 {offsets = [0, 56], sizes = [16, 8], strides = [1, 1]} : vector<16x96xf32> to vector<16x8xf32>
    %85 = vector.shape_cast %84 : vector<16x8xf32> to vector<2x8x8xf32>
    %86 = vector.extract_strided_slice %10 {offsets = [0, 88], sizes = [16, 8], strides = [1, 1]} : vector<16x96xf32> to vector<16x8xf32>
    %87 = vector.shape_cast %86 : vector<16x8xf32> to vector<2x8x8xf32>
    "tpu.trace_start"() <{level = 10 : i32, message = "bqd,bkd->bqk"}> : () -> ()
    %cst_30 = arith.constant dense<0.000000e+00> : vector<2x8x8xf32>
    %88 = tpu.matmul %83, %85, %cst_30 {dimension_numbers = #tpu.dot_dimension_numbers<[2], [2], [1], [1], [0, 0, 0, 1, 1, 1], [0], [0]>, precision = #tpu.contract_precision<fp32>} : vector<2x8x8xf32>, vector<2x8x8xf32>, vector<2x8x8xf32> -> vector<2x8x8xf32>
    "tpu.trace_stop"() : () -> ()
    %cst_31 = arith.constant dense<0xFF800000> : vector<2x8xf32>
    %89 = vector.multi_reduction <maximumf>, %88, %cst_31 [2] : vector<2x8x8xf32> to vector<2x8xf32>
    %90 = vector.shape_cast %89 : vector<2x8xf32> to vector<2x8x1xf32>
    %91 = vector.broadcast %90 : vector<2x8x1xf32> to vector<2x8x8xf32>
    %92 = arith.subf %88, %91 : vector<2x8x8xf32>
    %93 = math.exp %92 : vector<2x8x8xf32>
    %cst_32 = arith.constant dense<0.000000e+00> : vector<2x8xf32>
    %94 = vector.multi_reduction <add>, %93, %cst_32 [2] : vector<2x8x8xf32> to vector<2x8xf32>
    %95 = vector.shape_cast %94 : vector<2x8xf32> to vector<2x8x1xf32>
    %96 = tpu.reciprocal %95 : vector<2x8x1xf32> -> vector<2x8x1xf32>
    %97 = vector.broadcast %96 : vector<2x8x1xf32> to vector<2x8x8xf32>
    %98 = arith.mulf %93, %97 : vector<2x8x8xf32>
    "tpu.trace_start"() <{level = 10 : i32, message = "bqk,bkd->bqd"}> : () -> ()
    %cst_33 = arith.constant dense<0.000000e+00> : vector<2x8x8xf32>
    %99 = tpu.matmul %98, %87, %cst_33 {dimension_numbers = #tpu.dot_dimension_numbers<[2], [1], [1], [2], [0, 0, 0, 1, 1, 2], [0], [0]>, precision = #tpu.contract_precision<fp32>} : vector<2x8x8xf32>, vector<2x8x8xf32>, vector<2x8x8xf32> -> vector<2x8x8xf32>
    "tpu.trace_stop"() : () -> ()
    %100 = vector.shape_cast %99 : vector<2x8x8xf32> to vector<16x8xf32>
    %101 = vector.extract_strided_slice %12 {offsets = [24, 0], sizes = [8, 32], strides = [1, 1]} : vector<32x32xf32> to vector<8x32xf32>
    %cst_34 = arith.constant dense<0.000000e+00> : vector<16x32xf32>
    %102 = tpu.matmul %100, %101, %cst_34 {dimension_numbers = #tpu.dot_dimension_numbers<[1], [0], [0], [1], [0, 0, 1, 1], [], []>, precision = #tpu.contract_precision<fp32>} : vector<16x8xf32>, vector<8x32xf32>, vector<16x32xf32> -> vector<16x32xf32>
    %103 = arith.addf %81, %102 : vector<16x32xf32>
    %104 = vector.extract_strided_slice %14 {offsets = [0, 0], sizes = [1, 32], strides = [1, 1]} : vector<6x32xf32> to vector<1x32xf32>
    %105 = vector.broadcast %104 : vector<1x32xf32> to vector<16x32xf32>
    %106 = arith.addf %103, %105 : vector<16x32xf32>
    %107 = arith.addf %106, %3 : vector<16x32xf32>
    %108 = vector.extract_strided_slice %14 {offsets = [1, 0], sizes = [1, 32], strides = [1, 1]} : vector<6x32xf32> to vector<1x32xf32>
    %109 = vector.extract_strided_slice %14 {offsets = [2, 0], sizes = [1, 32], strides = [1, 1]} : vector<6x32xf32> to vector<1x32xf32>
    %cst_35 = arith.constant dense<0.000000e+00> : vector<16xf32>
    %110 = vector.multi_reduction <add>, %107, %cst_35 [1] : vector<16x32xf32> to vector<16xf32>
    %111 = vector.shape_cast %110 : vector<16xf32> to vector<16x1xf32>
    %cst_36 = arith.constant 3.200000e+01 : f32
    %112 = vector.broadcast %cst_36 : f32 to vector<16x1xf32>
    %113 = arith.divf %111, %112 : vector<16x1xf32>
    %114 = vector.broadcast %113 : vector<16x1xf32> to vector<16x32xf32>
    %115 = arith.subf %107, %114 : vector<16x32xf32>
    %116 = arith.mulf %115, %115 : vector<16x32xf32>
    %cst_37 = arith.constant dense<0.000000e+00> : vector<16xf32>
    %117 = vector.multi_reduction <add>, %116, %cst_37 [1] : vector<16x32xf32> to vector<16xf32>
    %118 = vector.shape_cast %117 : vector<16xf32> to vector<16x1xf32>
    %cst_38 = arith.constant 3.200000e+01 : f32
    %119 = vector.broadcast %cst_38 : f32 to vector<16x1xf32>
    %120 = arith.divf %118, %119 : vector<16x1xf32>
    %cst_39 = arith.constant 9.99999974E-6 : f32
    %121 = vector.broadcast %cst_39 : f32 to vector<16x1xf32>
    %122 = arith.addf %120, %121 : vector<16x1xf32>
    %123 = math.rsqrt %122 : vector<16x1xf32>
    %124 = vector.broadcast %123 : vector<16x1xf32> to vector<16x32xf32>
    %125 = arith.mulf %115, %124 : vector<16x32xf32>
    %126 = vector.broadcast %108 : vector<1x32xf32> to vector<16x32xf32>
    %127 = arith.mulf %125, %126 : vector<16x32xf32>
    %128 = vector.broadcast %109 : vector<1x32xf32> to vector<16x32xf32>
    %129 = arith.addf %127, %128 : vector<16x32xf32>
    %c0_40 = arith.constant 0 : index
    %c0_41 = arith.constant 0 : index
    %c0_42 = arith.constant 0 : index
    %130 = vector.load %arg5[%c0_40, %c0_41, %c0_42] : memref<1x32x64xf32, #tpu.memory_space<vmem>>, vector<1x32x64xf32>
    %131 = vector.shape_cast %130 : vector<1x32x64xf32> to vector<32x64xf32>
    %cst_43 = arith.constant dense<0.000000e+00> : vector<16x64xf32>
    %132 = tpu.matmul %129, %131, %cst_43 {dimension_numbers = #tpu.dot_dimension_numbers<[1], [0], [0], [1], [0, 0, 1, 1], [], []>, precision = #tpu.contract_precision<fp32>} : vector<16x32xf32>, vector<32x64xf32>, vector<16x64xf32> -> vector<16x64xf32>
    %c0_44 = arith.constant 0 : index
    %c0_45 = arith.constant 0 : index
    %c0_46 = arith.constant 0 : index
    %133 = vector.load %arg6[%c0_44, %c0_45, %c0_46] : memref<1x1x64xf32, #tpu.memory_space<vmem>>, vector<1x1x64xf32>
    %134 = vector.shape_cast %133 : vector<1x1x64xf32> to vector<1x64xf32>
    %135 = vector.broadcast %134 : vector<1x64xf32> to vector<16x64xf32>
    %136 = arith.addf %132, %135 : vector<16x64xf32>
    %cst_47 = arith.constant 0.000000e+00 : f32
    %137 = vector.broadcast %cst_47 : f32 to vector<16x64xf32>
    %138 = arith.maximumf %136, %137 : vector<16x64xf32>
    %c0_48 = arith.constant 0 : index
    %c0_49 = arith.constant 0 : index
    %c0_50 = arith.constant 0 : index
    %139 = vector.load %arg7[%c0_48, %c0_49, %c0_50] : memref<1x64x32xf32, #tpu.memory_space<vmem>>, vector<1x64x32xf32>
    %140 = vector.shape_cast %139 : vector<1x64x32xf32> to vector<64x32xf32>
    %cst_51 = arith.constant dense<0.000000e+00> : vector<16x32xf32>
    %141 = tpu.matmul %138, %140, %cst_51 {dimension_numbers = #tpu.dot_dimension_numbers<[1], [0], [0], [1], [0, 0, 1, 1], [], []>, precision = #tpu.contract_precision<fp32>} : vector<16x64xf32>, vector<64x32xf32>, vector<16x32xf32> -> vector<16x32xf32>
    %142 = vector.extract_strided_slice %14 {offsets = [3, 0], sizes = [1, 32], strides = [1, 1]} : vector<6x32xf32> to vector<1x32xf32>
    %143 = vector.broadcast %142 : vector<1x32xf32> to vector<16x32xf32>
    %144 = arith.addf %141, %143 : vector<16x32xf32>
    %145 = arith.addf %144, %129 : vector<16x32xf32>
    %146 = vector.extract_strided_slice %14 {offsets = [4, 0], sizes = [1, 32], strides = [1, 1]} : vector<6x32xf32> to vector<1x32xf32>
    %147 = vector.extract_strided_slice %14 {offsets = [5, 0], sizes = [1, 32], strides = [1, 1]} : vector<6x32xf32> to vector<1x32xf32>
    %cst_52 = arith.constant dense<0.000000e+00> : vector<16xf32>
    %148 = vector.multi_reduction <add>, %145, %cst_52 [1] : vector<16x32xf32> to vector<16xf32>
    %149 = vector.shape_cast %148 : vector<16xf32> to vector<16x1xf32>
    %cst_53 = arith.constant 3.200000e+01 : f32
    %150 = vector.broadcast %cst_53 : f32 to vector<16x1xf32>
    %151 = arith.divf %149, %150 : vector<16x1xf32>
    %152 = vector.broadcast %151 : vector<16x1xf32> to vector<16x32xf32>
    %153 = arith.subf %145, %152 : vector<16x32xf32>
    %154 = arith.mulf %153, %153 : vector<16x32xf32>
    %cst_54 = arith.constant dense<0.000000e+00> : vector<16xf32>
    %155 = vector.multi_reduction <add>, %154, %cst_54 [1] : vector<16x32xf32> to vector<16xf32>
    %156 = vector.shape_cast %155 : vector<16xf32> to vector<16x1xf32>
    %cst_55 = arith.constant 3.200000e+01 : f32
    %157 = vector.broadcast %cst_55 : f32 to vector<16x1xf32>
    %158 = arith.divf %156, %157 : vector<16x1xf32>
    %cst_56 = arith.constant 9.99999974E-6 : f32
    %159 = vector.broadcast %cst_56 : f32 to vector<16x1xf32>
    %160 = arith.addf %158, %159 : vector<16x1xf32>
    %161 = math.rsqrt %160 : vector<16x1xf32>
    %162 = vector.broadcast %161 : vector<16x1xf32> to vector<16x32xf32>
    %163 = arith.mulf %153, %162 : vector<16x32xf32>
    %164 = vector.broadcast %146 : vector<1x32xf32> to vector<16x32xf32>
    %165 = arith.mulf %163, %164 : vector<16x32xf32>
    %166 = vector.broadcast %147 : vector<1x32xf32> to vector<16x32xf32>
    %167 = arith.addf %165, %166 : vector<16x32xf32>
    %c0_57 = arith.constant 0 : index
    %c0_58 = arith.constant 0 : index
    %168 = vector.load %arg10[%c0_57, %c0_58] : memref<16x32xf32, #tpu.memory_space<vmem>>, vector<16x32xf32>
    tpu.vector_store %arg10[%c0_57, %c0_58], %167 {strides = array<i32>} : memref<16x32xf32, #tpu.memory_space<vmem>>, vector<16x32xf32>,
    %c0_59 = arith.constant 0 : index
    %c0_60 = arith.constant 0 : index
    %169 = vector.load %arg9[%c0_59, %c0_60] : memref<16x32xf32, #tpu.memory_space<vmem>>, vector<16x32xf32>
    tpu.vector_store %arg9[%c0_59, %c0_60], %167 {strides = array<i32>} : memref<16x32xf32, #tpu.memory_space<vmem>>, vector<16x32xf32>,
    return
  }
  func.func @transform_0(%arg0: i32) -> (i32, i32) {
    %c0_i32 = arith.constant 0 : i32
    %c0_i32_0 = arith.constant 0 : i32
    %c0_i32_1 = arith.constant 0 : i32
    return %c0_i32, %c0_i32_0 : i32, i32
  }
  func.func @transform_1(%arg0: i32) -> (i32, i32, i32) {
    %c0_i32 = arith.constant 0 : i32
    %c0_i32_0 = arith.constant 0 : i32
    %c0_i32_1 = arith.constant 0 : i32
    return %arg0, %c0_i32, %c0_i32_0 : i32, i32, i32
  }
  func.func @transform_2(%arg0: i32) -> (i32, i32, i32) {
    %c0_i32 = arith.constant 0 : i32
    %c0_i32_0 = arith.constant 0 : i32
    %c0_i32_1 = arith.constant 0 : i32
    return %arg0, %c0_i32, %c0_i32_0 : i32, i32, i32
  }
  func.func @transform_3(%arg0: i32) -> (i32, i32, i32) {
    %c0_i32 = arith.constant 0 : i32
    %c0_i32_0 = arith.constant 0 : i32
    %c0_i32_1 = arith.constant 0 : i32
    return %arg0, %c0_i32, %c0_i32_0 : i32, i32, i32
  }
  func.func @transform_4(%arg0: i32) -> (i32, i32, i32) {
    %c0_i32 = arith.constant 0 : i32
    %c0_i32_0 = arith.constant 0 : i32
    %c0_i32_1 = arith.constant 0 : i32
    return %arg0, %c0_i32, %c0_i32_0 : i32, i32, i32
  }
  func.func @transform_5(%arg0: i32) -> (i32, i32, i32) {
    %c0_i32 = arith.constant 0 : i32
    %c0_i32_0 = arith.constant 0 : i32
    %c0_i32_1 = arith.constant 0 : i32
    return %arg0, %c0_i32, %c0_i32_0 : i32, i32, i32
  }
  func.func @transform_6(%arg0: i32) -> (i32, i32, i32) {
    %c0_i32 = arith.constant 0 : i32
    %c0_i32_0 = arith.constant 0 : i32
    %c0_i32_1 = arith.constant 0 : i32
    return %arg0, %c0_i32, %c0_i32_0 : i32, i32, i32
  }
  func.func @transform_7(%arg0: i32) -> (i32, i32, i32) {
    %c0_i32 = arith.constant 0 : i32
    %c0_i32_0 = arith.constant 0 : i32
    %c0_i32_1 = arith.constant 0 : i32
    return %arg0, %c0_i32, %c0_i32_0 : i32, i32, i32
  }
  func.func @transform_8(%arg0: i32) -> (i32, i32) {
    %c0_i32 = arith.constant 0 : i32
    %c0_i32_0 = arith.constant 0 : i32
    %c0_i32_1 = arith.constant 0 : i32
    return %c0_i32, %c0_i32_0 : i32, i32
  }
}

</mosaic_0001>

<llo_original>
// kernel: tpu_custom_call.1
$region0: #{tpu_custom_call.1}
  #allocation0 [shape = 'u32[]', space=smem, size = 0x4, offset = 0x4, fixed_abs, tag = 'smem constant byte address 0x4 - core index']
  #allocation1 [shape = 'u32[72,128]{1,0:T(1,128)}', space=vmem, size = 0x9000, scoped, tag = 'internal scratch']
  #allocation2 [shape = 'f32[16,32]{1,0:T(8,128)}', space=vmem, size = 0x2000, scoped, tag = 'scratch operand']
  %s0 = inlined_call_operand.vmem [shape: f32[16,32], index: 0, kind: input, shape index: {}]
  %s1 = inlined_call_operand.vmem [shape: f32[2,32,96], index: 1, kind: input, shape index: {}]
  %s2 = inlined_call_operand.vmem [shape: f32[2,1,96], index: 2, kind: input, shape index: {}]
  %s3 = inlined_call_operand.vmem [shape: f32[2,32,32], index: 3, kind: input, shape index: {}]
  %s4 = inlined_call_operand.vmem [shape: f32[2,32,64], index: 4, kind: input, shape index: {}]
  %s5 = inlined_call_operand.vmem [shape: f32[2,1,64], index: 5, kind: input, shape index: {}]
  %s6 = inlined_call_operand.vmem [shape: f32[2,64,32], index: 6, kind: input, shape index: {}]
  %s7 = inlined_call_operand.vmem [shape: f32[2,6,32], index: 7, kind: input, shape index: {}]
  %s8 = inlined_call_operand.hbm [shape: f32[16,32], index: 8, kind: output, shape index: {}]
  %s9 = sld [smem:[#allocation0]]
  $region69: #{tpu_custom_call.1} parent=0
    _
  %s11 = ssub.s32 1, %s9
  %s12 = scalar_select 0, %s11, %s9
  $region1: #{tpu_custom_call.1} parent=0
    #allocation3 [shape = 'u8[8192]{0}', space=vmem, size = 0x2000, scoped, tag = 'output window, operand 0, single buffered']
    #allocation4 [shape = 's32[2]{0}', space=sflag, size = 0x8, scoped, tag = 'scoped memory for tpu_custom_call.1']
    %13 = vsyncpa [#allocation4], 0
    loop: start=0, step=1, limit=4
    $region2: #{tpu_custom_call.1} parent=1 // loop_pre_header
      _
    $region3: #{tpu_custom_call.1} parent=1 // loop_header
      %s15 = sphi 0, %s19
      %p16 = scmp.ge.s32.totalorder %s15, 4
      %s23 = sphi 0, %s23
      %s25 = sphi 0, %s23
      %s26 = sphi 0, %s25
      %s40 = sphi 0, %s26
      %s46 = sphi 0, %s48
      %s49 = sphi 0, %s46
      %s50 = sphi 0, %s49
      %s66 = sphi 0, %s50
      %s72 = sphi 0, %s74
      %s75 = sphi 0, %s72
      %s76 = sphi 0, %s75
      %s92 = sphi 0, %s76
      %s98 = sphi 0, %s100
      %s101 = sphi 0, %s98
      %s102 = sphi 0, %s101
      %s118 = sphi 0, %s102
      %s124 = sphi 0, %s126
      %s127 = sphi 0, %s124
      %s128 = sphi 0, %s127
      %s144 = sphi 0, %s128
      %s150 = sphi 0, %s152
      %s153 = sphi 0, %s150
      %s154 = sphi 0, %s153
      %s170 = sphi 0, %s154
      %s176 = sphi 0, %s178
      %s179 = sphi 0, %s176
      %s180 = sphi 0, %s179
      %s196 = sphi 0, %s180
      %s202 = sphi 0, %s204
      %s205 = sphi 0, %s202
      %s206 = sphi 0, %s205
      %s222 = sphi 0, %s206
      %s226 = sphi 0, %s226
      %s228 = sphi 0, %s226
      %s229 = sphi 0, %s228
      %s243 = sphi 0, %s229
    $region4: #{tpu_custom_call.1} parent=1 // loop_header_branch
      %18 = sbr.rel (%p16) target = $region8
    $region5: #{tpu_custom_call.1} parent=1 // loop_body
      %s20 = ssub.s32 %s15, 1
      %s21 = ssub.s32 %s15, 2
      %s22 = sadd.s32 %s15, 1
      %s24 = sadd.s32 %s23, 1
      %p27 = scmp.eq.s32.totalorder %s15, 1
      %p28 = scmp.ne.s32.totalorder %s23, %s25
      %p29 = scmp.eq.s32.totalorder %s15, 0
      %p30 = por %p28, %p29
      %p31 = scmp.ne.s32.totalorder %s23, %s25
      %p32 = scmp.eq.s32.totalorder %s20, 1
      %p33 = por %p31, %p32
      %p34 = scmp.ne.s32.totalorder %s25, %s26
      %p35 = scmp.eq.s32.totalorder %s20, 0
      %p36 = por %p34, %p35
      %p37 = scmp.ne.s32.totalorder %s25, %s26
      %p38 = scmp.eq.s32.totalorder %s21, 1
      %p39 = por %p37, %p38
      %p41 = scmp.ne.s32.totalorder %s26, %s40
      %p42 = scmp.eq.s32.totalorder %s21, 0
      %p43 = por %p41, %p42
      %s44 = ssub.s32 %s15, %s22
      %p45 = scmp.eq.s32.totalorder %s44, 0
      %s47 = sadd.s32 %s46, 1
      %s48 = scalar_select %p45, %s46, %s47
      %p51 = pneg %p45
      %p52 = scmp.eq.s32.totalorder %s15, 1
      %p53 = por %p51, %p52
      %p54 = scmp.ne.s32.totalorder %s46, %s49
      %p55 = scmp.eq.s32.totalorder %s15, 0
      %p56 = por %p54, %p55
      %p57 = scmp.ne.s32.totalorder %s46, %s49
      %p58 = scmp.eq.s32.totalorder %s20, 1
      %p59 = por %p57, %p58
      %p60 = scmp.ne.s32.totalorder %s49, %s50
      %p61 = scmp.eq.s32.totalorder %s20, 0
      %p62 = por %p60, %p61
      %p63 = scmp.ne.s32.totalorder %s49, %s50
      %p64 = scmp.eq.s32.totalorder %s21, 1
      %p65 = por %p63, %p64
      %p67 = scmp.ne.s32.totalorder %s50, %s66
      %p68 = scmp.eq.s32.totalorder %s21, 0
      %p69 = por %p67, %p68
      %s70 = ssub.s32 %s15, %s22
      %p71 = scmp.eq.s32.totalorder %s70, 0
      %s73 = sadd.s32 %s72, 1
      %s74 = scalar_select %p71, %s72, %s73
      %p77 = pneg %p71
      %p78 = scmp.eq.s32.totalorder %s15, 1
      %p79 = por %p77, %p78
      %p80 = scmp.ne.s32.totalorder %s72, %s75
      %p81 = scmp.eq.s32.totalorder %s15, 0
      %p82 = por %p80, %p81
      %p83 = scmp.ne.s32.totalorder %s72, %s75
      %p84 = scmp.eq.s32.totalorder %s20, 1
      %p85 = por %p83, %p84
      %p86 = scmp.ne.s32.totalorder %s75, %s76
      %p87 = scmp.eq.s32.totalorder %s20, 0
      %p88 = por %p86, %p87
      %p89 = scmp.ne.s32.totalorder %s75, %s76
      %p90 = scmp.eq.s32.totalorder %s21, 1
      %p91 = por %p89, %p90
      %p93 = scmp.ne.s32.totalorder %s76, %s92
      %p94 = scmp.eq.s32.totalorder %s21, 0
      %p95 = por %p93, %p94
      %s96 = ssub.s32 %s15, %s22
      %p97 = scmp.eq.s32.totalorder %s96, 0
      %s99 = sadd.s32 %s98, 1
      %s100 = scalar_select %p97, %s98, %s99
      %p103 = pneg %p97
      %p104 = scmp.eq.s32.totalorder %s15, 1
      %p105 = por %p103, %p104
      %p106 = scmp.ne.s32.totalorder %s98, %s101
      %p107 = scmp.eq.s32.totalorder %s15, 0
      %p108 = por %p106, %p107
      %p109 = scmp.ne.s32.totalorder %s98, %s101
      %p110 = scmp.eq.s32.totalorder %s20, 1
      %p111 = por %p109, %p110
      %p112 = scmp.ne.s32.totalorder %s101, %s102
      %p113 = scmp.eq.s32.totalorder %s20, 0
      %p114 = por %p112, %p113
      %p115 = scmp.ne.s32.totalorder %s101, %s102
      %p116 = scmp.eq.s32.totalorder %s21, 1
      %p117 = por %p115, %p116
      %p119 = scmp.ne.s32.totalorder %s102, %s118
      %p120 = scmp.eq.s32.totalorder %s21, 0
      %p121 = por %p119, %p120
      %s122 = ssub.s32 %s15, %s22
      %p123 = scmp.eq.s32.totalorder %s122, 0
      %s125 = sadd.s32 %s124, 1
      %s126 = scalar_select %p123, %s124, %s125
      %p129 = pneg %p123
      %p130 = scmp.eq.s32.totalorder %s15, 1
      %p131 = por %p129, %p130
      %p132 = scmp.ne.s32.totalorder %s124, %s127
      %p133 = scmp.eq.s32.totalorder %s15, 0
      %p134 = por %p132, %p133
      %p135 = scmp.ne.s32.totalorder %s124, %s127
      %p136 = scmp.eq.s32.totalorder %s20, 1
      %p137 = por %p135, %p136
      %p138 = scmp.ne.s32.totalorder %s127, %s128
      %p139 = scmp.eq.s32.totalorder %s20, 0
      %p140 = por %p138, %p139
      %p141 = scmp.ne.s32.totalorder %s127, %s128
      %p142 = scmp.eq.s32.totalorder %s21, 1
      %p143 = por %p141, %p142
      %p145 = scmp.ne.s32.totalorder %s128, %s144
      %p146 = scmp.eq.s32.totalorder %s21, 0
      %p147 = por %p145, %p146
      %s148 = ssub.s32 %s15, %s22
      %p149 = scmp.eq.s32.totalorder %s148, 0
      %s151 = sadd.s32 %s150, 1
      %s152 = scalar_select %p149, %s150, %s151
      %p155 = pneg %p149
      %p156 = scmp.eq.s32.totalorder %s15, 1
      %p157 = por %p155, %p156
      %p158 = scmp.ne.s32.totalorder %s150, %s153
      %p159 = scmp.eq.s32.totalorder %s15, 0
      %p160 = por %p158, %p159
      %p161 = scmp.ne.s32.totalorder %s150, %s153
      %p162 = scmp.eq.s32.totalorder %s20, 1
      %p163 = por %p161, %p162
      %p164 = scmp.ne.s32.totalorder %s153, %s154
      %p165 = scmp.eq.s32.totalorder %s20, 0
      %p166 = por %p164, %p165
      %p167 = scmp.ne.s32.totalorder %s153, %s154
      %p168 = scmp.eq.s32.totalorder %s21, 1
      %p169 = por %p167, %p168
      %p171 = scmp.ne.s32.totalorder %s154, %s170
      %p172 = scmp.eq.s32.totalorder %s21, 0
      %p173 = por %p171, %p172
      %s174 = ssub.s32 %s15, %s22
      %p175 = scmp.eq.s32.totalorder %s174, 0
      %s177 = sadd.s32 %s176, 1
      %s178 = scalar_select %p175, %s176, %s177
      %p181 = pneg %p175
      %p182 = scmp.eq.s32.totalorder %s15, 1
      %p183 = por %p181, %p182
      %p184 = scmp.ne.s32.totalorder %s176, %s179
      %p185 = scmp.eq.s32.totalorder %s15, 0
      %p186 = por %p184, %p185
      %p187 = scmp.ne.s32.totalorder %s176, %s179
      %p188 = scmp.eq.s32.totalorder %s20, 1
      %p189 = por %p187, %p188
      %p190 = scmp.ne.s32.totalorder %s179, %s180
      %p191 = scmp.eq.s32.totalorder %s20, 0
      %p192 = por %p190, %p191
      %p193 = scmp.ne.s32.totalorder %s179, %s180
      %p194 = scmp.eq.s32.totalorder %s21, 1
      %p195 = por %p193, %p194
      %p197 = scmp.ne.s32.totalorder %s180, %s196
      %p198 = scmp.eq.s32.totalorder %s21, 0
      %p199 = por %p197, %p198
      %s200 = ssub.s32 %s15, %s22
      %p201 = scmp.eq.s32.totalorder %s200, 0
      %s203 = sadd.s32 %s202, 1
      %s204 = scalar_select %p201, %s202, %s203
      %p207 = pneg %p201
      %p208 = scmp.eq.s32.totalorder %s15, 1
      %p209 = por %p207, %p208
      %p210 = scmp.ne.s32.totalorder %s202, %s205
      %p211 = scmp.eq.s32.totalorder %s15, 0
      %p212 = por %p210, %p211
      %p213 = scmp.ne.s32.totalorder %s202, %s205
      %p214 = scmp.eq.s32.totalorder %s20, 1
      %p215 = por %p213, %p214
      %p216 = scmp.ne.s32.totalorder %s205, %s206
      %p217 = scmp.eq.s32.totalorder %s20, 0
      %p218 = por %p216, %p217
      %p219 = scmp.ne.s32.totalorder %s205, %s206
      %p220 = scmp.eq.s32.totalorder %s21, 1
      %p221 = por %p219, %p220
      %p223 = scmp.ne.s32.totalorder %s206, %s222
      %p224 = scmp.eq.s32.totalorder %s21, 0
      %p225 = por %p223, %p224
      %s227 = sadd.s32 %s226, 1
      %p230 = scmp.eq.s32.totalorder %s15, 1
      %p231 = scmp.ne.s32.totalorder %s226, %s228
      %p232 = scmp.eq.s32.totalorder %s15, 0
      %p233 = por %p231, %p232
      %p234 = scmp.ne.s32.totalorder %s226, %s228
      %p235 = scmp.eq.s32.totalorder %s20, 1
      %p236 = por %p234, %p235
      %p237 = scmp.ne.s32.totalorder %s228, %s229
      %p238 = scmp.eq.s32.totalorder %s20, 0
      %p239 = por %p237, %p238
      %p240 = scmp.ne.s32.totalorder %s228, %s229
      %p241 = scmp.eq.s32.totalorder %s21, 1
      %p242 = por %p240, %p241
      %p244 = scmp.ne.s32.totalorder %s229, %s243
      %p245 = scmp.eq.s32.totalorder %s21, 0
      %p246 = por %p244, %p245
      %p247 = scmp.le.s32.totalorder 1, %s15
      %p248 = scmp.lt.s32.totalorder %s15, 3
      %p249 = pnand %p247, %p248
      %p250 = pneg %p249
      // Predicated region
      $region9: #{tpu_custom_call.1} parent=5 // pred_check
        _
      $region10: #{tpu_custom_call.1} parent=5 // pred_check_branch
        %252 = sbr.rel (%p249) target = $region12
      $region11: #{tpu_custom_call.1} parent=5 // pred_region
        %s253 = ssub.s32 %s15, 1
        // Predicated region
        $region13: #{tpu_custom_call.1} parent=11 // pred_check
          %p254 = pneg %p36
        $region14: #{tpu_custom_call.1} parent=11 // pred_check_branch
          %256 = sbr.rel (%p254) target = $region16
        $region15: #{tpu_custom_call.1} parent=11 // pred_region
          _
        $region16: #{tpu_custom_call.1} parent=11 // pred_fallthru
          _
      $region12: #{tpu_custom_call.1} parent=5 // pred_fallthru
        _
      %p257 = scmp.lt.s32.totalorder %s15, 2
      // Predicated region
      $region17: #{tpu_custom_call.1} parent=5 // pred_check
        %p258 = pneg %p257
      $region18: #{tpu_custom_call.1} parent=5 // pred_check_branch
        %260 = sbr.rel (%p258) target = $region20
      $region19: #{tpu_custom_call.1} parent=5 // pred_region
        // Predicated region
        $region21: #{tpu_custom_call.1} parent=19 // pred_check
          %p261 = pneg %p56
        $region22: #{tpu_custom_call.1} parent=19 // pred_check_branch
          %263 = sbr.rel (%p261) target = $region24
        $region23: #{tpu_custom_call.1} parent=19 // pred_region
          %p264 = scmp.lt.s32.totalorder %s15, 1
          %s265 = scalar_select %p264, %s15, 1
          %s266 = smul.addr %s265, 4
          %s267 = smul.addr %s266, 8
          %s268 = scalar_lea.vmem %s1, %s267
        $region24: #{tpu_custom_call.1} parent=19 // pred_fallthru
          _
        // Predicated region
        $region25: #{tpu_custom_call.1} parent=19 // pred_check
          %p269 = pneg %p82
        $region26: #{tpu_custom_call.1} parent=19 // pred_check_branch
          %271 = sbr.rel (%p269) target = $region28
        $region27: #{tpu_custom_call.1} parent=19 // pred_region
          %p272 = scmp.lt.s32.totalorder %s15, 1
          %s273 = scalar_select %p272, %s15, 1
          %s274 = scalar_lea.vmem %s2, %s273
        $region28: #{tpu_custom_call.1} parent=19 // pred_fallthru
          _
        // Predicated region
        $region29: #{tpu_custom_call.1} parent=19 // pred_check
          %p275 = pneg %p108
        $region30: #{tpu_custom_call.1} parent=19 // pred_check_branch
          %277 = sbr.rel (%p275) target = $region32
        $region31: #{tpu_custom_call.1} parent=19 // pred_region
          %p278 = scmp.lt.s32.totalorder %s15, 1
          %s279 = scalar_select %p278, %s15, 1
          %s280 = smul.addr %s279, 4
          %s281 = smul.addr %s280, 8
          %s282 = scalar_lea.vmem %s3, %s281
        $region32: #{tpu_custom_call.1} parent=19 // pred_fallthru
          _
        // Predicated region
        $region33: #{tpu_custom_call.1} parent=19 // pred_check
          %p283 = pneg %p134
        $region34: #{tpu_custom_call.1} parent=19 // pred_check_branch
          %285 = sbr.rel (%p283) target = $region36
        $region35: #{tpu_custom_call.1} parent=19 // pred_region
          %p286 = scmp.lt.s32.totalorder %s15, 1
          %s287 = scalar_select %p286, %s15, 1
          %s288 = smul.addr %s287, 4
          %s289 = smul.addr %s288, 8
          %s290 = scalar_lea.vmem %s4, %s289
        $region36: #{tpu_custom_call.1} parent=19 // pred_fallthru
          _
        // Predicated region
        $region37: #{tpu_custom_call.1} parent=19 // pred_check
          %p291 = pneg %p160
        $region38: #{tpu_custom_call.1} parent=19 // pred_check_branch
          %293 = sbr.rel (%p291) target = $region40
        $region39: #{tpu_custom_call.1} parent=19 // pred_region
          %p294 = scmp.lt.s32.totalorder %s15, 1
          %s295 = scalar_select %p294, %s15, 1
          %s296 = scalar_lea.vmem %s5, %s295
        $region40: #{tpu_custom_call.1} parent=19 // pred_fallthru
          _
        // Predicated region
        $region41: #{tpu_custom_call.1} parent=19 // pred_check
          %p297 = pneg %p186
        $region42: #{tpu_custom_call.1} parent=19 // pred_check_branch
          %299 = sbr.rel (%p297) target = $region44
        $region43: #{tpu_custom_call.1} parent=19 // pred_region
          %p300 = scmp.lt.s32.totalorder %s15, 1
          %s301 = scalar_select %p300, %s15, 1
          %s302 = smul.addr %s301, 8
          %s303 = smul.addr %s302, 8
          %s304 = scalar_lea.vmem %s6, %s303
        $region44: #{tpu_custom_call.1} parent=19 // pred_fallthru
          _
        // Predicated region
        $region45: #{tpu_custom_call.1} parent=19 // pred_check
          %p305 = pneg %p212
        $region46: #{tpu_custom_call.1} parent=19 // pred_check_branch
          %307 = sbr.rel (%p305) target = $region48
        $region47: #{tpu_custom_call.1} parent=19 // pred_region
          %p308 = scmp.lt.s32.totalorder %s15, 1
          %s309 = scalar_select %p308, %s15, 1
          %s310 = smul.addr %s309, 8
          %s311 = scalar_lea.vmem %s7, %s310
        $region48: #{tpu_custom_call.1} parent=19 // pred_fallthru
          _
      $region20: #{tpu_custom_call.1} parent=5 // pred_fallthru
        _
      %p312 = scmp.le.s32.totalorder 1, %s15
      %p313 = scmp.lt.s32.totalorder %s15, 3
      %p314 = pnand %p312, %p313
      %p315 = pneg %p314
      // Predicated region
      $region49: #{tpu_custom_call.1} parent=5 // pred_check
        _
      $region50: #{tpu_custom_call.1} parent=5 // pred_check_branch
        %317 = sbr.rel (%p314) target = $region52
      $region51: #{tpu_custom_call.1} parent=5 // pred_region
        %s318 = ssub.s32 %s15, 1
        %p319 = pneg %p36
        %p320 = pneg %p33
        %p321 = scmp.lt.s32.totalorder %s20, 1
        %s322 = scalar_select %p321, %s20, 1
        %s323 = smul.addr %s322, 4
        %s324 = smul.addr %s323, 8
        %s325 = scalar_lea.vmem %s1, %s324
        %p326 = pneg %p62
        %p327 = pneg %p59
        %p328 = scmp.lt.s32.totalorder %s20, 1
        %s329 = scalar_select %p328, %s20, 1
        %s330 = scalar_lea.vmem %s2, %s329
        %p331 = pneg %p88
        %p332 = pneg %p85
        %p333 = scmp.lt.s32.totalorder %s20, 1
        %s334 = scalar_select %p333, %s20, 1
        %s335 = smul.addr %s334, 4
        %s336 = smul.addr %s335, 8
        %s337 = scalar_lea.vmem %s3, %s336
        %p338 = pneg %p114
        %p339 = pneg %p111
        %p340 = scmp.lt.s32.totalorder %s20, 1
        %s341 = scalar_select %p340, %s20, 1
        %s342 = smul.addr %s341, 4
        %s343 = smul.addr %s342, 8
        %s344 = scalar_lea.vmem %s4, %s343
        %p345 = pneg %p140
        %p346 = pneg %p137
        %p347 = scmp.lt.s32.totalorder %s20, 1
        %s348 = scalar_select %p347, %s20, 1
        %s349 = scalar_lea.vmem %s5, %s348
        %p350 = pneg %p166
        %p351 = pneg %p163
        %p352 = scmp.lt.s32.totalorder %s20, 1
        %s353 = scalar_select %p352, %s20, 1
        %s354 = smul.addr %s353, 8
        %s355 = smul.addr %s354, 8
        %s356 = scalar_lea.vmem %s6, %s355
        %p357 = pneg %p192
        %p358 = pneg %p189
        %p359 = scmp.lt.s32.totalorder %s20, 1
        %s360 = scalar_select %p359, %s20, 1
        %s361 = smul.addr %s360, 8
        %s362 = scalar_lea.vmem %s7, %s361
        %p363 = pneg %p218
        %p364 = pneg %p215
        %p365 = pneg %p239
        %p366 = pneg %p236
        %p367 = scmp.lt.s32.totalorder %s20, 1
        %s368 = scalar_select %p367, %s20, 1
        %s369 = smul.addr %s368, 4
        %s370 = smul.addr %s369, 8
        %s371 = scalar_lea.vmem %s1, %s370
        %p372 = scmp.lt.s32.totalorder %s20, 1
        %s373 = scalar_select %p372, %s20, 1
        %s374 = scalar_lea.vmem %s2, %s373
        %p375 = scmp.lt.s32.totalorder %s20, 1
        %s376 = scalar_select %p375, %s20, 1
        %s377 = smul.addr %s376, 4
        %s378 = smul.addr %s377, 8
        %s379 = scalar_lea.vmem %s3, %s378
        %p380 = scmp.lt.s32.totalorder %s20, 1
        %s381 = scalar_select %p380, %s20, 1
        %s382 = smul.addr %s381, 4
        %s383 = smul.addr %s382, 8
        %s384 = scalar_lea.vmem %s4, %s383
        %p385 = scmp.lt.s32.totalorder %s20, 1
        %s386 = scalar_select %p385, %s20, 1
        %s387 = scalar_lea.vmem %s5, %s386
        %p388 = scmp.lt.s32.totalorder %s20, 1
        %s389 = scalar_select %p388, %s20, 1
        %s390 = smul.addr %s389, 8
        %s391 = smul.addr %s390, 8
        %s392 = scalar_lea.vmem %s6, %s391
        %p393 = scmp.lt.s32.totalorder %s20, 1
        %s394 = scalar_select %p393, %s20, 1
        %s395 = smul.addr %s394, 8
        %s396 = scalar_lea.vmem %s7, %s395
        %p397 = scmp.eq.s32.totalorder %s20, 0
        // Predicated region
        $region53: #{tpu_custom_call.1} parent=51 // pred_check
          %p398 = pneg %p397
        $region54: #{tpu_custom_call.1} parent=51 // pred_check_branch
          %400 = sbr.rel (%p398) target = $region56
        $region55: #{tpu_custom_call.1} parent=51 // pred_region
          %v401 = vld [vmem:[%s0] sm:$0xff]
          %v402 = vld [vmem:[%s0 + $0x8] sm:$0xff]
          %vm403 = vcmask 261120
          %404 = vst.msk [vmem:[#allocation2] sm:$0xff] %vm403, %v401
          %405 = vst.msk [vmem:[#allocation2 + $0x8] sm:$0xff] %vm403, %v402
        $region56: #{tpu_custom_call.1} parent=51 // pred_fallthru
          _
        %v406 = vld [vmem:[#allocation2] sm:$0xff]
        %v407 = vld [vmem:[#allocation2 + $0x8] sm:$0xff]
        %v408 = vld [vmem:[%s371] sm:$0xff]
        %v409 = vld [vmem:[%s371 + $0x8] sm:$0xff]
        %v410 = vld [vmem:[%s371 + $0x10] sm:$0xff]
        %v411 = vld [vmem:[%s371 + $0x18] sm:$0xff]
        %v412 = vld [vmem:[%s374] sm:$0x1]
        %v414 = vperm.slane %v412, 0
        %vm416 = vcmask 261120
        %v418 = vsel %vm416, %v406, 0
        %v421 = vsel %vm416, %v407, 0
        %423 = vmatpush.msra.mxu0 0.0
        %424 = vmatpush.msra.mxu0 0.0
        %425 = vmatpush.msra.mxu0 0.0
        %426 = vmatpush.msra.mxu0 0.0
        %427 = vmatpush.msra.mxu0 0.0
        %428 = vmatpush.msra.mxu0 0.0
        %429 = vmatpush.msra.mxu0 0.0
        %430 = vmatpush.msra.mxu0 0.0
        %431 = vmatpush.msra.mxu0 0.0
        %432 = vmatpush.msra.mxu0 0.0
        %433 = vmatpush.msra.mxu0 0.0
        %434 = vmatpush.msra.mxu0 0.0
        %v435 = vand.u32 %v411, 4294901760
        %436 = vmatpush.msra.mxu0 %v435
        %v437 = vand.u32 %v410, 4294901760
        %438 = vmatpush.msra.mxu0 %v437
        %v439 = vand.u32 %v409, 4294901760
        %440 = vmatpush.msra.mxu0 %v439
        %v441 = vand.u32 %v408, 4294901760
        %442 = vmatpush.msra.mxu0 %v441
        %v443 = vand.u32 %v418, 4294901760
        %v444 = vsub.f32 %v418, %v443
        %v445 = vand.u32 %v444, 4294901760
        %v446 = vsub.f32 %v444, %v445
        %v447 = vand.u32 %v446, 4294901760
        %448 = vmatmul.f32.gmra.mxu0 %v447
        %v449 = vpop.f32.mrf.mxu0
        %v450 = vadd.f32 %v414, %v449
        %v451 = vand.u32 %v421, 4294901760
        %v452 = vsub.f32 %v421, %v451
        %v453 = vand.u32 %v452, 4294901760
        %v454 = vsub.f32 %v452, %v453
        %v455 = vand.u32 %v454, 4294901760
        %456 = vmatmul.f32.gmra.mxu0 %v455
        %v457 = vpop.f32.mrf.mxu0
        %v458 = vadd.f32 %v414, %v457
        %459 = vdwg.mxu0
        %460 = vmatpush.msra.mxu0 0.0
        %461 = vmatpush.msra.mxu0 0.0
        %462 = vmatpush.msra.mxu0 0.0
        %463 = vmatpush.msra.mxu0 0.0
        %464 = vmatpush.msra.mxu0 0.0
        %465 = vmatpush.msra.mxu0 0.0
        %466 = vmatpush.msra.mxu0 0.0
        %467 = vmatpush.msra.mxu0 0.0
        %468 = vmatpush.msra.mxu0 0.0
        %469 = vmatpush.msra.mxu0 0.0
        %470 = vmatpush.msra.mxu0 0.0
        %471 = vmatpush.msra.mxu0 0.0
        %v472 = vand.u32 %v411, 4294901760
        %v473 = vsub.f32 %v411, %v472
        %v474 = vand.u32 %v473, 4294901760
        %v475 = vsub.f32 %v473, %v474
        %v476 = vand.u32 %v475, 4294901760
        %477 = vmatpush.msra.mxu0 %v476
        %v478 = vand.u32 %v410, 4294901760
        %v479 = vsub.f32 %v410, %v478
        %v480 = vand.u32 %v479, 4294901760
        %v481 = vsub.f32 %v479, %v480
        %v482 = vand.u32 %v481, 4294901760
        %483 = vmatpush.msra.mxu0 %v482
        %v484 = vand.u32 %v409, 4294901760
        %v485 = vsub.f32 %v409, %v484
        %v486 = vand.u32 %v485, 4294901760
        %v487 = vsub.f32 %v485, %v486
        %v488 = vand.u32 %v487, 4294901760
        %489 = vmatpush.msra.mxu0 %v488
        %v490 = vand.u32 %v408, 4294901760
        %v491 = vsub.f32 %v408, %v490
        %v492 = vand.u32 %v491, 4294901760
        %v493 = vsub.f32 %v491, %v492
        %v494 = vand.u32 %v493, 4294901760
        %495 = vmatpush.msra.mxu0 %v494
        %v496 = vand.u32 %v418, 4294901760
        %497 = vmatmul.f32.gmra.mxu0 %v496
        %v498 = vpop.f32.mrf.mxu0
        %v499 = vadd.f32 %v450, %v498
        %v500 = vand.u32 %v421, 4294901760
        %501 = vmatmul.f32.gmra.mxu0 %v500
        %v502 = vpop.f32.mrf.mxu0
        %v503 = vadd.f32 %v458, %v502
        %504 = vdwg.mxu0
        %505 = vmatpush.msra.mxu0 0.0
        %506 = vmatpush.msra.mxu0 0.0
        %507 = vmatpush.msra.mxu0 0.0
        %508 = vmatpush.msra.mxu0 0.0
        %509 = vmatpush.msra.mxu0 0.0
        %510 = vmatpush.msra.mxu0 0.0
        %511 = vmatpush.msra.mxu0 0.0
        %512 = vmatpush.msra.mxu0 0.0
        %513 = vmatpush.msra.mxu0 0.0
        %514 = vmatpush.msra.mxu0 0.0
        %515 = vmatpush.msra.mxu0 0.0
        %516 = vmatpush.msra.mxu0 0.0
        %v517 = vand.u32 %v411, 4294901760
        %v518 = vsub.f32 %v411, %v517
        %519 = vmatpush.msra.mxu0 %v518
        %v520 = vand.u32 %v410, 4294901760
        %v521 = vsub.f32 %v410, %v520
        %522 = vmatpush.msra.mxu0 %v521
        %v523 = vand.u32 %v409, 4294901760
        %v524 = vsub.f32 %v409, %v523
        %525 = vmatpush.msra.mxu0 %v524
        %v526 = vand.u32 %v408, 4294901760
        %v527 = vsub.f32 %v408, %v526
        %528 = vmatpush.msra.mxu0 %v527
        %v529 = vand.u32 %v418, 4294901760
        %v530 = vsub.f32 %v418, %v529
        %531 = vmatmul.f32.gmra.mxu0 %v530
        %v532 = vpop.f32.mrf.mxu0
        %v533 = vadd.f32 %v499, %v532
        %v534 = vand.u32 %v421, 4294901760
        %v535 = vsub.f32 %v421, %v534
        %536 = vmatmul.f32.gmra.mxu0 %v535
        %v537 = vpop.f32.mrf.mxu0
        %v538 = vadd.f32 %v503, %v537
        %539 = vdwg.mxu0
        %540 = vmatpush.msra.mxu0 0.0
        %541 = vmatpush.msra.mxu0 0.0
        %542 = vmatpush.msra.mxu0 0.0
        %543 = vmatpush.msra.mxu0 0.0
        %544 = vmatpush.msra.mxu0 0.0
        %545 = vmatpush.msra.mxu0 0.0
        %546 = vmatpush.msra.mxu0 0.0
        %547 = vmatpush.msra.mxu0 0.0
        %548 = vmatpush.msra.mxu0 0.0
        %549 = vmatpush.msra.mxu0 0.0
        %550 = vmatpush.msra.mxu0 0.0
        %551 = vmatpush.msra.mxu0 0.0
        %v552 = vand.u32 %v411, 4294901760
        %553 = vmatpush.msra.mxu0 %v552
        %v554 = vand.u32 %v410, 4294901760
        %555 = vmatpush.msra.mxu0 %v554
        %v556 = vand.u32 %v409, 4294901760
        %557 = vmatpush.msra.mxu0 %v556
        %v558 = vand.u32 %v408, 4294901760
        %559 = vmatpush.msra.mxu0 %v558
        %v560 = vand.u32 %v418, 4294901760
        %v561 = vsub.f32 %v418, %v560
        %v562 = vand.u32 %v561, 4294901760
        %563 = vmatmul.f32.gmra.mxu0 %v562
        %v564 = vpop.f32.mrf.mxu0
        %v565 = vadd.f32 %v533, %v564
        %v566 = vand.u32 %v421, 4294901760
        %v567 = vsub.f32 %v421, %v566
        %v568 = vand.u32 %v567, 4294901760
        %569 = vmatmul.f32.gmra.mxu0 %v568
        %v570 = vpop.f32.mrf.mxu0
        %v571 = vadd.f32 %v538, %v570
        %572 = vdwg.mxu0
        %573 = vmatpush.msra.mxu0 0.0
        %574 = vmatpush.msra.mxu0 0.0
        %575 = vmatpush.msra.mxu0 0.0
        %576 = vmatpush.msra.mxu0 0.0
        %577 = vmatpush.msra.mxu0 0.0
        %578 = vmatpush.msra.mxu0 0.0
        %579 = vmatpush.msra.mxu0 0.0
        %580 = vmatpush.msra.mxu0 0.0
        %581 = vmatpush.msra.mxu0 0.0
        %582 = vmatpush.msra.mxu0 0.0
        %583 = vmatpush.msra.mxu0 0.0
        %584 = vmatpush.msra.mxu0 0.0
        %v585 = vand.u32 %v411, 4294901760
        %v586 = vsub.f32 %v411, %v585
        %v587 = vand.u32 %v586, 4294901760
        %588 = vmatpush.msra.mxu0 %v587
        %v589 = vand.u32 %v410, 4294901760
        %v590 = vsub.f32 %v410, %v589
        %v591 = vand.u32 %v590, 4294901760
        %592 = vmatpush.msra.mxu0 %v591
        %v593 = vand.u32 %v409, 4294901760
        %v594 = vsub.f32 %v409, %v593
        %v595 = vand.u32 %v594, 4294901760
        %596 = vmatpush.msra.mxu0 %v595
        %v597 = vand.u32 %v408, 4294901760
        %v598 = vsub.f32 %v408, %v597
        %v599 = vand.u32 %v598, 4294901760
        %600 = vmatpush.msra.mxu0 %v599
        %v601 = vand.u32 %v418, 4294901760
        %602 = vmatmul.f32.gmra.mxu0 %v601
        %v603 = vpop.f32.mrf.mxu0
        %v604 = vadd.f32 %v565, %v603
        %v605 = vand.u32 %v421, 4294901760
        %606 = vmatmul.f32.gmra.mxu0 %v605
        %v607 = vpop.f32.mrf.mxu0
        %v608 = vadd.f32 %v571, %v607
        %609 = vdwg.mxu0
        %610 = vmatpush.msra.mxu0 0.0
        %611 = vmatpush.msra.mxu0 0.0
        %612 = vmatpush.msra.mxu0 0.0
        %613 = vmatpush.msra.mxu0 0.0
        %614 = vmatpush.msra.mxu0 0.0
        %615 = vmatpush.msra.mxu0 0.0
        %616 = vmatpush.msra.mxu0 0.0
        %617 = vmatpush.msra.mxu0 0.0
        %618 = vmatpush.msra.mxu0 0.0
        %619 = vmatpush.msra.mxu0 0.0
        %620 = vmatpush.msra.mxu0 0.0
        %621 = vmatpush.msra.mxu0 0.0
        %v622 = vand.u32 %v411, 4294901760
        %623 = vmatpush.msra.mxu0 %v622
        %v624 = vand.u32 %v410, 4294901760
        %625 = vmatpush.msra.mxu0 %v624
        %v626 = vand.u32 %v409, 4294901760
        %627 = vmatpush.msra.mxu0 %v626
        %v628 = vand.u32 %v408, 4294901760
        %629 = vmatpush.msra.mxu0 %v628
        %v630 = vand.u32 %v418, 4294901760
        %631 = vmatmul.f32.gmra.mxu0 %v630
        %v632 = vpop.f32.mrf.mxu0
        %v633 = vadd.f32 %v604, %v632
        %v634 = vand.u32 %v421, 4294901760
        %635 = vmatmul.f32.gmra.mxu0 %v634
        %v636 = vpop.f32.mrf.mxu0
        %v637 = vadd.f32 %v608, %v636
        %638 = vdwg.mxu0
        %v639 = vld [vmem:[%s379] sm:$0xff]
        %v640 = vld [vmem:[%s379 + $0x8] sm:$0xff]
        %v641 = vld [vmem:[%s379 + $0x10] sm:$0xff]
        %v642 = vld [vmem:[%s379 + $0x18] sm:$0xff]
        %v643 = vld [vmem:[%s396] sm:$0x3f]
        %645 = vrot.lane.b32.xlu0 %v633, 96
        %v646 = vpop.permute.xlu0 %645
        %vm647 = vcmask 64512
        %v648 = vsel %vm647, %v633, 0
        %v650 = vsel %vm647, %v646, 0
        %652 = vmatpush.xpose.msra.mxu0 0.0
        %653 = vmatpush.xpose.msra.mxu0 0.0
        %654 = vmatpush.xpose.msra.mxu0 0.0
        %655 = vmatpush.xpose.msra.mxu0 0.0
        %656 = vmatpush.xpose.msra.mxu0 0.0
        %657 = vmatpush.xpose.msra.mxu0 0.0
        %658 = vmatpush.xpose.msra.mxu0 0.0
        %659 = vmatpush.xpose.msra.mxu0 0.0
        %660 = vmatpush.xpose.msra.mxu0 0.0
        %661 = vmatpush.xpose.msra.mxu0 0.0
        %662 = vmatpush.xpose.msra.mxu0 0.0
        %663 = vmatpush.xpose.msra.mxu0 0.0
        %664 = vmatpush.xpose.msra.mxu0 0.0
        %665 = vmatpush.xpose.msra.mxu0 0.0
        %666 = vmatpush.xpose.msra.mxu0 0.0
        %v667 = vand.u32 %v650, 4294901760
        %668 = vmatpush.xpose.msra.mxu0 %v667
        %v669 = vand.u32 %v648, 4294901760
        %v670 = vsub.f32 %v648, %v669
        %v671 = vand.u32 %v670, 4294901760
        %v672 = vsub.f32 %v670, %v671
        %v673 = vand.u32 %v672, 4294901760
        %674 = vmatmul.f32.gmra.mxu0 %v673
        %v675 = vpop.f32.mrf.mxu0
        %v676 = vadd.f32 0.0, %v675
        %677 = vdwg.mxu0
        %678 = vmatpush.xpose.msra.mxu0 0.0
        %679 = vmatpush.xpose.msra.mxu0 0.0
        %680 = vmatpush.xpose.msra.mxu0 0.0
        %681 = vmatpush.xpose.msra.mxu0 0.0
        %682 = vmatpush.xpose.msra.mxu0 0.0
        %683 = vmatpush.xpose.msra.mxu0 0.0
        %684 = vmatpush.xpose.msra.mxu0 0.0
        %685 = vmatpush.xpose.msra.mxu0 0.0
        %686 = vmatpush.xpose.msra.mxu0 0.0
        %687 = vmatpush.xpose.msra.mxu0 0.0
        %688 = vmatpush.xpose.msra.mxu0 0.0
        %689 = vmatpush.xpose.msra.mxu0 0.0
        %690 = vmatpush.xpose.msra.mxu0 0.0
        %691 = vmatpush.xpose.msra.mxu0 0.0
        %692 = vmatpush.xpose.msra.mxu0 0.0
        %v693 = vand.u32 %v650, 4294901760
        %v694 = vsub.f32 %v650, %v693
        %v695 = vand.u32 %v694, 4294901760
        %v696 = vsub.f32 %v694, %v695
        %v697 = vand.u32 %v696, 4294901760
        %698 = vmatpush.xpose.msra.mxu0 %v697
        %v699 = vand.u32 %v648, 4294901760
        %700 = vmatmul.f32.gmra.mxu0 %v699
        %v701 = vpop.f32.mrf.mxu0
        %v702 = vadd.f32 %v676, %v701
        %703 = vdwg.mxu0
        %704 = vmatpush.xpose.msra.mxu0 0.0
        %705 = vmatpush.xpose.msra.mxu0 0.0
        %706 = vmatpush.xpose.msra.mxu0 0.0
        %707 = vmatpush.xpose.msra.mxu0 0.0
        %708 = vmatpush.xpose.msra.mxu0 0.0
        %709 = vmatpush.xpose.msra.mxu0 0.0
        %710 = vmatpush.xpose.msra.mxu0 0.0
        %711 = vmatpush.xpose.msra.mxu0 0.0
        %712 = vmatpush.xpose.msra.mxu0 0.0
        %713 = vmatpush.xpose.msra.mxu0 0.0
        %714 = vmatpush.xpose.msra.mxu0 0.0
        %715 = vmatpush.xpose.msra.mxu0 0.0
        %716 = vmatpush.xpose.msra.mxu0 0.0
        %717 = vmatpush.xpose.msra.mxu0 0.0
        %718 = vmatpush.xpose.msra.mxu0 0.0
        %v719 = vand.u32 %v650, 4294901760
        %v720 = vsub.f32 %v650, %v719
        %721 = vmatpush.xpose.msra.mxu0 %v720
        %v722 = vand.u32 %v648, 4294901760
        %v723 = vsub.f32 %v648, %v722
        %724 = vmatmul.f32.gmra.mxu0 %v723
        %v725 = vpop.f32.mrf.mxu0
        %v726 = vadd.f32 %v702, %v725
        %727 = vdwg.mxu0
        %728 = vmatpush.xpose.msra.mxu0 0.0
        %729 = vmatpush.xpose.msra.mxu0 0.0
        %730 = vmatpush.xpose.msra.mxu0 0.0
        %731 = vmatpush.xpose.msra.mxu0 0.0
        %732 = vmatpush.xpose.msra.mxu0 0.0
        %733 = vmatpush.xpose.msra.mxu0 0.0
        %734 = vmatpush.xpose.msra.mxu0 0.0
        %735 = vmatpush.xpose.msra.mxu0 0.0
        %736 = vmatpush.xpose.msra.mxu0 0.0
        %737 = vmatpush.xpose.msra.mxu0 0.0
        %738 = vmatpush.xpose.msra.mxu0 0.0
        %739 = vmatpush.xpose.msra.mxu0 0.0
        %740 = vmatpush.xpose.msra.mxu0 0.0
        %741 = vmatpush.xpose.msra.mxu0 0.0
        %742 = vmatpush.xpose.msra.mxu0 0.0
        %v743 = vand.u32 %v650, 4294901760
        %744 = vmatpush.xpose.msra.mxu0 %v743
        %v745 = vand.u32 %v648, 4294901760
        %v746 = vsub.f32 %v648, %v745
        %v747 = vand.u32 %v746, 4294901760
        %748 = vmatmul.f32.gmra.mxu0 %v747
        %v749 = vpop.f32.mrf.mxu0
        %v750 = vadd.f32 %v726, %v749
        %751 = vdwg.mxu0
        %752 = vmatpush.xpose.msra.mxu0 0.0
        %753 = vmatpush.xpose.msra.mxu0 0.0
        %754 = vmatpush.xpose.msra.mxu0 0.0
        %755 = vmatpush.xpose.msra.mxu0 0.0
        %756 = vmatpush.xpose.msra.mxu0 0.0
        %757 = vmatpush.xpose.msra.mxu0 0.0
        %758 = vmatpush.xpose.msra.mxu0 0.0
        %759 = vmatpush.xpose.msra.mxu0 0.0
        %760 = vmatpush.xpose.msra.mxu0 0.0
        %761 = vmatpush.xpose.msra.mxu0 0.0
        %762 = vmatpush.xpose.msra.mxu0 0.0
        %763 = vmatpush.xpose.msra.mxu0 0.0
        %764 = vmatpush.xpose.msra.mxu0 0.0
        %765 = vmatpush.xpose.msra.mxu0 0.0
        %766 = vmatpush.xpose.msra.mxu0 0.0
        %v767 = vand.u32 %v650, 4294901760
        %v768 = vsub.f32 %v650, %v767
        %v769 = vand.u32 %v768, 4294901760
        %770 = vmatpush.xpose.msra.mxu0 %v769
        %v771 = vand.u32 %v648, 4294901760
        %772 = vmatmul.f32.gmra.mxu0 %v771
        %v773 = vpop.f32.mrf.mxu0
        %v774 = vadd.f32 %v750, %v773
        %775 = vdwg.mxu0
        %776 = vmatpush.xpose.msra.mxu0 0.0
        %777 = vmatpush.xpose.msra.mxu0 0.0
        %778 = vmatpush.xpose.msra.mxu0 0.0
        %779 = vmatpush.xpose.msra.mxu0 0.0
        %780 = vmatpush.xpose.msra.mxu0 0.0
        %781 = vmatpush.xpose.msra.mxu0 0.0
        %782 = vmatpush.xpose.msra.mxu0 0.0
        %783 = vmatpush.xpose.msra.mxu0 0.0
        %784 = vmatpush.xpose.msra.mxu0 0.0
        %785 = vmatpush.xpose.msra.mxu0 0.0
        %786 = vmatpush.xpose.msra.mxu0 0.0
        %787 = vmatpush.xpose.msra.mxu0 0.0
        %788 = vmatpush.xpose.msra.mxu0 0.0
        %789 = vmatpush.xpose.msra.mxu0 0.0
        %790 = vmatpush.xpose.msra.mxu0 0.0
        %v791 = vand.u32 %v650, 4294901760
        %792 = vmatpush.xpose.msra.mxu0 %v791
        %v793 = vand.u32 %v648, 4294901760
        %794 = vmatmul.f32.gmra.mxu0 %v793
        %v795 = vpop.f32.mrf.mxu0
        %v796 = vadd.f32 %v774, %v795
        %797 = vdwg.mxu0
        %799 = vrot.lane.b32.xlu0 %v637, 96
        %v800 = vpop.permute.xlu0 %799
        %v801 = vsel %vm647, %v637, 0
        %v803 = vsel %vm647, %v800, 0
        %805 = vmatpush.xpose.msra.mxu0 0.0
        %806 = vmatpush.xpose.msra.mxu0 0.0
        %807 = vmatpush.xpose.msra.mxu0 0.0
        %808 = vmatpush.xpose.msra.mxu0 0.0
        %809 = vmatpush.xpose.msra.mxu0 0.0
        %810 = vmatpush.xpose.msra.mxu0 0.0
        %811 = vmatpush.xpose.msra.mxu0 0.0
        %812 = vmatpush.xpose.msra.mxu0 0.0
        %813 = vmatpush.xpose.msra.mxu0 0.0
        %814 = vmatpush.xpose.msra.mxu0 0.0
        %815 = vmatpush.xpose.msra.mxu0 0.0
        %816 = vmatpush.xpose.msra.mxu0 0.0
        %817 = vmatpush.xpose.msra.mxu0 0.0
        %818 = vmatpush.xpose.msra.mxu0 0.0
        %819 = vmatpush.xpose.msra.mxu0 0.0
        %v820 = vand.u32 %v803, 4294901760
        %821 = vmatpush.xpose.msra.mxu0 %v820
        %v822 = vand.u32 %v801, 4294901760
        %v823 = vsub.f32 %v801, %v822
        %v824 = vand.u32 %v823, 4294901760
        %v825 = vsub.f32 %v823, %v824
        %v826 = vand.u32 %v825, 4294901760
        %827 = vmatmul.f32.gmra.mxu0 %v826
        %v828 = vpop.f32.mrf.mxu0
        %v829 = vadd.f32 0.0, %v828
        %830 = vdwg.mxu0
        %831 = vmatpush.xpose.msra.mxu0 0.0
        %832 = vmatpush.xpose.msra.mxu0 0.0
        %833 = vmatpush.xpose.msra.mxu0 0.0
        %834 = vmatpush.xpose.msra.mxu0 0.0
        %835 = vmatpush.xpose.msra.mxu0 0.0
        %836 = vmatpush.xpose.msra.mxu0 0.0
        %837 = vmatpush.xpose.msra.mxu0 0.0
        %838 = vmatpush.xpose.msra.mxu0 0.0
        %839 = vmatpush.xpose.msra.mxu0 0.0
        %840 = vmatpush.xpose.msra.mxu0 0.0
        %841 = vmatpush.xpose.msra.mxu0 0.0
        %842 = vmatpush.xpose.msra.mxu0 0.0
        %843 = vmatpush.xpose.msra.mxu0 0.0
        %844 = vmatpush.xpose.msra.mxu0 0.0
        %845 = vmatpush.xpose.msra.mxu0 0.0
        %v846 = vand.u32 %v803, 4294901760
        %v847 = vsub.f32 %v803, %v846
        %v848 = vand.u32 %v847, 4294901760
        %v849 = vsub.f32 %v847, %v848
        %v850 = vand.u32 %v849, 4294901760
        %851 = vmatpush.xpose.msra.mxu0 %v850
        %v852 = vand.u32 %v801, 4294901760
        %853 = vmatmul.f32.gmra.mxu0 %v852
        %v854 = vpop.f32.mrf.mxu0
        %v855 = vadd.f32 %v829, %v854
        %856 = vdwg.mxu0
        %857 = vmatpush.xpose.msra.mxu0 0.0
        %858 = vmatpush.xpose.msra.mxu0 0.0
        %859 = vmatpush.xpose.msra.mxu0 0.0
        %860 = vmatpush.xpose.msra.mxu0 0.0
        %861 = vmatpush.xpose.msra.mxu0 0.0
        %862 = vmatpush.xpose.msra.mxu0 0.0
        %863 = vmatpush.xpose.msra.mxu0 0.0
        %864 = vmatpush.xpose.msra.mxu0 0.0
        %865 = vmatpush.xpose.msra.mxu0 0.0
        %866 = vmatpush.xpose.msra.mxu0 0.0
        %867 = vmatpush.xpose.msra.mxu0 0.0
        %868 = vmatpush.xpose.msra.mxu0 0.0
        %869 = vmatpush.xpose.msra.mxu0 0.0
        %870 = vmatpush.xpose.msra.mxu0 0.0
        %871 = vmatpush.xpose.msra.mxu0 0.0
        %v872 = vand.u32 %v803, 4294901760
        %v873 = vsub.f32 %v803, %v872
        %874 = vmatpush.xpose.msra.mxu0 %v873
        %v875 = vand.u32 %v801, 4294901760
        %v876 = vsub.f32 %v801, %v875
        %877 = vmatmul.f32.gmra.mxu0 %v876
        %v878 = vpop.f32.mrf.mxu0
        %v879 = vadd.f32 %v855, %v878
        %880 = vdwg.mxu0
        %881 = vmatpush.xpose.msra.mxu0 0.0
        %882 = vmatpush.xpose.msra.mxu0 0.0
        %883 = vmatpush.xpose.msra.mxu0 0.0
        %884 = vmatpush.xpose.msra.mxu0 0.0
        %885 = vmatpush.xpose.msra.mxu0 0.0
        %886 = vmatpush.xpose.msra.mxu0 0.0
        %887 = vmatpush.xpose.msra.mxu0 0.0
        %888 = vmatpush.xpose.msra.mxu0 0.0
        %889 = vmatpush.xpose.msra.mxu0 0.0
        %890 = vmatpush.xpose.msra.mxu0 0.0
        %891 = vmatpush.xpose.msra.mxu0 0.0
        %892 = vmatpush.xpose.msra.mxu0 0.0
        %893 = vmatpush.xpose.msra.mxu0 0.0
        %894 = vmatpush.xpose.msra.mxu0 0.0
        %895 = vmatpush.xpose.msra.mxu0 0.0
        %v896 = vand.u32 %v803, 4294901760
        %897 = vmatpush.xpose.msra.mxu0 %v896
        %v898 = vand.u32 %v801, 4294901760
        %v899 = vsub.f32 %v801, %v898
        %v900 = vand.u32 %v899, 4294901760
        %901 = vmatmul.f32.gmra.mxu0 %v900
        %v902 = vpop.f32.mrf.mxu0
        %v903 = vadd.f32 %v879, %v902
        %904 = vdwg.mxu0
        %905 = vmatpush.xpose.msra.mxu0 0.0
        %906 = vmatpush.xpose.msra.mxu0 0.0
        %907 = vmatpush.xpose.msra.mxu0 0.0
        %908 = vmatpush.xpose.msra.mxu0 0.0
        %909 = vmatpush.xpose.msra.mxu0 0.0
        %910 = vmatpush.xpose.msra.mxu0 0.0
        %911 = vmatpush.xpose.msra.mxu0 0.0
        %912 = vmatpush.xpose.msra.mxu0 0.0
        %913 = vmatpush.xpose.msra.mxu0 0.0
        %914 = vmatpush.xpose.msra.mxu0 0.0
        %915 = vmatpush.xpose.msra.mxu0 0.0
        %916 = vmatpush.xpose.msra.mxu0 0.0
        %917 = vmatpush.xpose.msra.mxu0 0.0
        %918 = vmatpush.xpose.msra.mxu0 0.0
        %919 = vmatpush.xpose.msra.mxu0 0.0
        %v920 = vand.u32 %v803, 4294901760
        %v921 = vsub.f32 %v803, %v920
        %v922 = vand.u32 %v921, 4294901760
        %923 = vmatpush.xpose.msra.mxu0 %v922
        %v924 = vand.u32 %v801, 4294901760
        %925 = vmatmul.f32.gmra.mxu0 %v924
        %v926 = vpop.f32.mrf.mxu0
        %v927 = vadd.f32 %v903, %v926
        %928 = vdwg.mxu0
        %929 = vmatpush.xpose.msra.mxu0 0.0
        %930 = vmatpush.xpose.msra.mxu0 0.0
        %931 = vmatpush.xpose.msra.mxu0 0.0
        %932 = vmatpush.xpose.msra.mxu0 0.0
        %933 = vmatpush.xpose.msra.mxu0 0.0
        %934 = vmatpush.xpose.msra.mxu0 0.0
        %935 = vmatpush.xpose.msra.mxu0 0.0
        %936 = vmatpush.xpose.msra.mxu0 0.0
        %937 = vmatpush.xpose.msra.mxu0 0.0
        %938 = vmatpush.xpose.msra.mxu0 0.0
        %939 = vmatpush.xpose.msra.mxu0 0.0
        %940 = vmatpush.xpose.msra.mxu0 0.0
        %941 = vmatpush.xpose.msra.mxu0 0.0
        %942 = vmatpush.xpose.msra.mxu0 0.0
        %943 = vmatpush.xpose.msra.mxu0 0.0
        %v944 = vand.u32 %v803, 4294901760
        %945 = vmatpush.xpose.msra.mxu0 %v944
        %v946 = vand.u32 %v801, 4294901760
        %947 = vmatmul.f32.gmra.mxu0 %v946
        %v948 = vpop.f32.mrf.mxu0
        %v949 = vadd.f32 %v927, %v948
        %950 = vdwg.mxu0
        %v951 = vsel %vm647, %v796, -inf
        %952 = vmax.xlane.f32.xlu0 %v951
        %v953 = vpop.xlane.xlu0 %952
        %v954 = vsel %vm647, %v949, -inf
        %955 = vmax.xlane.f32.xlu0 %v954
        %v956 = vpop.xlane.xlu0 %955
        %v957 = vsub.f32 %v796, %v953
        %v958 = vsub.f32 %v949, %v956
        %v959 = vmul.f32 %v957, 1.442695
        %v960 = vpow.pop %v959
        %v961 = vmul.f32 %v958, 1.442695
        %v962 = vpow.pop %v961
        %v963 = vsel %vm647, %v960, 0.0
        %964 = vadd.xlane.f32.xlu0 %v963
        %v965 = vpop.xlane.xlu0 %964
        %v966 = vsel %vm647, %v962, 0.0
        %967 = vadd.xlane.f32.xlu0 %v966
        %v968 = vpop.xlane.xlu0 %967
        %v969 = vrcp.pop %v965
        %v970 = vmul.f32 %v965, %v969
        %v971 = vsub.f32 1.0, %v970
        %v972 = vmul.f32 %v969, %v971
        %v973 = vadd.f32 %v969, %v972
        %vm974 = vweird.f32 %v965
        %vm975 = vweird.f32 %v969
        %vm976 = vmor %vm974, %vm975
        %v977 = vsel %vm976, %v969, %v973
        %v978 = vand.u32 2147483647, %v965
        %vm979 = vcmp.eq.f32.partialorder %v978, 8.507059e+37
        %v980 = vand.u32 %v965, 2147483648
        %v981 = vor.u32 1.1754944e-38, %v980
        %v982 = vsel %vm979, %v981, %v977
        %v983 = vrcp.pop %v968
        %v984 = vmul.f32 %v968, %v983
        %v985 = vsub.f32 1.0, %v984
        %v986 = vmul.f32 %v983, %v985
        %v987 = vadd.f32 %v983, %v986
        %vm988 = vweird.f32 %v968
        %vm989 = vweird.f32 %v983
        %vm990 = vmor %vm988, %vm989
        %v991 = vsel %vm990, %v983, %v987
        %v992 = vand.u32 2147483647, %v968
        %vm993 = vcmp.eq.f32.partialorder %v992, 8.507059e+37
        %v994 = vand.u32 %v968, 2147483648
        %v995 = vor.u32 1.1754944e-38, %v994
        %v996 = vsel %vm993, %v995, %v991
        %v997 = vmul.f32 %v960, %v982
        %v998 = vmul.f32 %v962, %v996
        %999 = vrot.lane.b32.xlu0 %v633, 64
        %v1000 = vpop.permute.xlu0 %999
        %v1003 = vsel %vm647, %v997, 0
        %1005 = vmatpush.msra.mxu0 0.0
        %1006 = vmatpush.msra.mxu0 0.0
        %1007 = vmatpush.msra.mxu0 0.0
        %1008 = vmatpush.msra.mxu0 0.0
        %1009 = vmatpush.msra.mxu0 0.0
        %1010 = vmatpush.msra.mxu0 0.0
        %1011 = vmatpush.msra.mxu0 0.0
        %1012 = vmatpush.msra.mxu0 0.0
        %1013 = vmatpush.msra.mxu0 0.0
        %1014 = vmatpush.msra.mxu0 0.0
        %1015 = vmatpush.msra.mxu0 0.0
        %1016 = vmatpush.msra.mxu0 0.0
        %1017 = vmatpush.msra.mxu0 0.0
        %1018 = vmatpush.msra.mxu0 0.0
        %1019 = vmatpush.msra.mxu0 0.0
        %v1020 = vand.u32 %v1000, 4294901760
        %1021 = vmatpush.msra.mxu0 %v1020
        %v1022 = vand.u32 %v1003, 4294901760
        %v1023 = vsub.f32 %v1003, %v1022
        %v1024 = vand.u32 %v1023, 4294901760
        %v1025 = vsub.f32 %v1023, %v1024
        %v1026 = vand.u32 %v1025, 4294901760
        %1027 = vmatmul.f32.gmra.mxu0 %v1026
        %v1028 = vpop.f32.mrf.mxu0
        %v1029 = vadd.f32 0.0, %v1028
        %1030 = vdwg.mxu0
        %1031 = vmatpush.msra.mxu0 0.0
        %1032 = vmatpush.msra.mxu0 0.0
        %1033 = vmatpush.msra.mxu0 0.0
        %1034 = vmatpush.msra.mxu0 0.0
        %1035 = vmatpush.msra.mxu0 0.0
        %1036 = vmatpush.msra.mxu0 0.0
        %1037 = vmatpush.msra.mxu0 0.0
        %1038 = vmatpush.msra.mxu0 0.0
        %1039 = vmatpush.msra.mxu0 0.0
        %1040 = vmatpush.msra.mxu0 0.0
        %1041 = vmatpush.msra.mxu0 0.0
        %1042 = vmatpush.msra.mxu0 0.0
        %1043 = vmatpush.msra.mxu0 0.0
        %1044 = vmatpush.msra.mxu0 0.0
        %1045 = vmatpush.msra.mxu0 0.0
        %v1046 = vand.u32 %v1000, 4294901760
        %v1047 = vsub.f32 %v1000, %v1046
        %v1048 = vand.u32 %v1047, 4294901760
        %v1049 = vsub.f32 %v1047, %v1048
        %v1050 = vand.u32 %v1049, 4294901760
        %1051 = vmatpush.msra.mxu0 %v1050
        %v1052 = vand.u32 %v1003, 4294901760
        %1053 = vmatmul.f32.gmra.mxu0 %v1052
        %v1054 = vpop.f32.mrf.mxu0
        %v1055 = vadd.f32 %v1029, %v1054
        %1056 = vdwg.mxu0
        %1057 = vmatpush.msra.mxu0 0.0
        %1058 = vmatpush.msra.mxu0 0.0
        %1059 = vmatpush.msra.mxu0 0.0
        %1060 = vmatpush.msra.mxu0 0.0
        %1061 = vmatpush.msra.mxu0 0.0
        %1062 = vmatpush.msra.mxu0 0.0
        %1063 = vmatpush.msra.mxu0 0.0
        %1064 = vmatpush.msra.mxu0 0.0
        %1065 = vmatpush.msra.mxu0 0.0
        %1066 = vmatpush.msra.mxu0 0.0
        %1067 = vmatpush.msra.mxu0 0.0
        %1068 = vmatpush.msra.mxu0 0.0
        %1069 = vmatpush.msra.mxu0 0.0
        %1070 = vmatpush.msra.mxu0 0.0
        %1071 = vmatpush.msra.mxu0 0.0
        %v1072 = vand.u32 %v1000, 4294901760
        %v1073 = vsub.f32 %v1000, %v1072
        %1074 = vmatpush.msra.mxu0 %v1073
        %v1075 = vand.u32 %v1003, 4294901760
        %v1076 = vsub.f32 %v1003, %v1075
        %1077 = vmatmul.f32.gmra.mxu0 %v1076
        %v1078 = vpop.f32.mrf.mxu0
        %v1079 = vadd.f32 %v1055, %v1078
        %1080 = vdwg.mxu0
        %1081 = vmatpush.msra.mxu0 0.0
        %1082 = vmatpush.msra.mxu0 0.0
        %1083 = vmatpush.msra.mxu0 0.0
        %1084 = vmatpush.msra.mxu0 0.0
        %1085 = vmatpush.msra.mxu0 0.0
        %1086 = vmatpush.msra.mxu0 0.0
        %1087 = vmatpush.msra.mxu0 0.0
        %1088 = vmatpush.msra.mxu0 0.0
        %1089 = vmatpush.msra.mxu0 0.0
        %1090 = vmatpush.msra.mxu0 0.0
        %1091 = vmatpush.msra.mxu0 0.0
        %1092 = vmatpush.msra.mxu0 0.0
        %1093 = vmatpush.msra.mxu0 0.0
        %1094 = vmatpush.msra.mxu0 0.0
        %1095 = vmatpush.msra.mxu0 0.0
        %v1096 = vand.u32 %v1000, 4294901760
        %1097 = vmatpush.msra.mxu0 %v1096
        %v1098 = vand.u32 %v1003, 4294901760
        %v1099 = vsub.f32 %v1003, %v1098
        %v1100 = vand.u32 %v1099, 4294901760
        %1101 = vmatmul.f32.gmra.mxu0 %v1100
        %v1102 = vpop.f32.mrf.mxu0
        %v1103 = vadd.f32 %v1079, %v1102
        %1104 = vdwg.mxu0
        %1105 = vmatpush.msra.mxu0 0.0
        %1106 = vmatpush.msra.mxu0 0.0
        %1107 = vmatpush.msra.mxu0 0.0
        %1108 = vmatpush.msra.mxu0 0.0
        %1109 = vmatpush.msra.mxu0 0.0
        %1110 = vmatpush.msra.mxu0 0.0
        %1111 = vmatpush.msra.mxu0 0.0
        %1112 = vmatpush.msra.mxu0 0.0
        %1113 = vmatpush.msra.mxu0 0.0
        %1114 = vmatpush.msra.mxu0 0.0
        %1115 = vmatpush.msra.mxu0 0.0
        %1116 = vmatpush.msra.mxu0 0.0
        %1117 = vmatpush.msra.mxu0 0.0
        %1118 = vmatpush.msra.mxu0 0.0
        %1119 = vmatpush.msra.mxu0 0.0
        %v1120 = vand.u32 %v1000, 4294901760
        %v1121 = vsub.f32 %v1000, %v1120
        %v1122 = vand.u32 %v1121, 4294901760
        %1123 = vmatpush.msra.mxu0 %v1122
        %v1124 = vand.u32 %v1003, 4294901760
        %1125 = vmatmul.f32.gmra.mxu0 %v1124
        %v1126 = vpop.f32.mrf.mxu0
        %v1127 = vadd.f32 %v1103, %v1126
        %1128 = vdwg.mxu0
        %1129 = vmatpush.msra.mxu0 0.0
        %1130 = vmatpush.msra.mxu0 0.0
        %1131 = vmatpush.msra.mxu0 0.0
        %1132 = vmatpush.msra.mxu0 0.0
        %1133 = vmatpush.msra.mxu0 0.0
        %1134 = vmatpush.msra.mxu0 0.0
        %1135 = vmatpush.msra.mxu0 0.0
        %1136 = vmatpush.msra.mxu0 0.0
        %1137 = vmatpush.msra.mxu0 0.0
        %1138 = vmatpush.msra.mxu0 0.0
        %1139 = vmatpush.msra.mxu0 0.0
        %1140 = vmatpush.msra.mxu0 0.0
        %1141 = vmatpush.msra.mxu0 0.0
        %1142 = vmatpush.msra.mxu0 0.0
        %1143 = vmatpush.msra.mxu0 0.0
        %v1144 = vand.u32 %v1000, 4294901760
        %1145 = vmatpush.msra.mxu0 %v1144
        %v1146 = vand.u32 %v1003, 4294901760
        %1147 = vmatmul.f32.gmra.mxu0 %v1146
        %v1148 = vpop.f32.mrf.mxu0
        %v1149 = vadd.f32 %v1127, %v1148
        %1150 = vdwg.mxu0
        %1151 = vrot.lane.b32.xlu0 %v637, 64
        %v1152 = vpop.permute.xlu0 %1151
        %v1155 = vsel %vm647, %v998, 0
        %1157 = vmatpush.msra.mxu0 0.0
        %1158 = vmatpush.msra.mxu0 0.0
        %1159 = vmatpush.msra.mxu0 0.0
        %1160 = vmatpush.msra.mxu0 0.0
        %1161 = vmatpush.msra.mxu0 0.0
        %1162 = vmatpush.msra.mxu0 0.0
        %1163 = vmatpush.msra.mxu0 0.0
        %1164 = vmatpush.msra.mxu0 0.0
        %1165 = vmatpush.msra.mxu0 0.0
        %1166 = vmatpush.msra.mxu0 0.0
        %1167 = vmatpush.msra.mxu0 0.0
        %1168 = vmatpush.msra.mxu0 0.0
        %1169 = vmatpush.msra.mxu0 0.0
        %1170 = vmatpush.msra.mxu0 0.0
        %1171 = vmatpush.msra.mxu0 0.0
        %v1172 = vand.u32 %v1152, 4294901760
        %1173 = vmatpush.msra.mxu0 %v1172
        %v1174 = vand.u32 %v1155, 4294901760
        %v1175 = vsub.f32 %v1155, %v1174
        %v1176 = vand.u32 %v1175, 4294901760
        %v1177 = vsub.f32 %v1175, %v1176
        %v1178 = vand.u32 %v1177, 4294901760
        %1179 = vmatmul.f32.gmra.mxu0 %v1178
        %v1180 = vpop.f32.mrf.mxu0
        %v1181 = vadd.f32 0.0, %v1180
        %1182 = vdwg.mxu0
        %1183 = vmatpush.msra.mxu0 0.0
        %1184 = vmatpush.msra.mxu0 0.0
        %1185 = vmatpush.msra.mxu0 0.0
        %1186 = vmatpush.msra.mxu0 0.0
        %1187 = vmatpush.msra.mxu0 0.0
        %1188 = vmatpush.msra.mxu0 0.0
        %1189 = vmatpush.msra.mxu0 0.0
        %1190 = vmatpush.msra.mxu0 0.0
        %1191 = vmatpush.msra.mxu0 0.0
        %1192 = vmatpush.msra.mxu0 0.0
        %1193 = vmatpush.msra.mxu0 0.0
        %1194 = vmatpush.msra.mxu0 0.0
        %1195 = vmatpush.msra.mxu0 0.0
        %1196 = vmatpush.msra.mxu0 0.0
        %1197 = vmatpush.msra.mxu0 0.0
        %v1198 = vand.u32 %v1152, 4294901760
        %v1199 = vsub.f32 %v1152, %v1198
        %v1200 = vand.u32 %v1199, 4294901760
        %v1201 = vsub.f32 %v1199, %v1200
        %v1202 = vand.u32 %v1201, 4294901760
        %1203 = vmatpush.msra.mxu0 %v1202
        %v1204 = vand.u32 %v1155, 4294901760
        %1205 = vmatmul.f32.gmra.mxu0 %v1204
        %v1206 = vpop.f32.mrf.mxu0
        %v1207 = vadd.f32 %v1181, %v1206
        %1208 = vdwg.mxu0
        %1209 = vmatpush.msra.mxu0 0.0
        %1210 = vmatpush.msra.mxu0 0.0
        %1211 = vmatpush.msra.mxu0 0.0
        %1212 = vmatpush.msra.mxu0 0.0
        %1213 = vmatpush.msra.mxu0 0.0
        %1214 = vmatpush.msra.mxu0 0.0
        %1215 = vmatpush.msra.mxu0 0.0
        %1216 = vmatpush.msra.mxu0 0.0
        %1217 = vmatpush.msra.mxu0 0.0
        %1218 = vmatpush.msra.mxu0 0.0
        %1219 = vmatpush.msra.mxu0 0.0
        %1220 = vmatpush.msra.mxu0 0.0
        %1221 = vmatpush.msra.mxu0 0.0
        %1222 = vmatpush.msra.mxu0 0.0
        %1223 = vmatpush.msra.mxu0 0.0
        %v1224 = vand.u32 %v1152, 4294901760
        %v1225 = vsub.f32 %v1152, %v1224
        %1226 = vmatpush.msra.mxu0 %v1225
        %v1227 = vand.u32 %v1155, 4294901760
        %v1228 = vsub.f32 %v1155, %v1227
        %1229 = vmatmul.f32.gmra.mxu0 %v1228
        %v1230 = vpop.f32.mrf.mxu0
        %v1231 = vadd.f32 %v1207, %v1230
        %1232 = vdwg.mxu0
        %1233 = vmatpush.msra.mxu0 0.0
        %1234 = vmatpush.msra.mxu0 0.0
        %1235 = vmatpush.msra.mxu0 0.0
        %1236 = vmatpush.msra.mxu0 0.0
        %1237 = vmatpush.msra.mxu0 0.0
        %1238 = vmatpush.msra.mxu0 0.0
        %1239 = vmatpush.msra.mxu0 0.0
        %1240 = vmatpush.msra.mxu0 0.0
        %1241 = vmatpush.msra.mxu0 0.0
        %1242 = vmatpush.msra.mxu0 0.0
        %1243 = vmatpush.msra.mxu0 0.0
        %1244 = vmatpush.msra.mxu0 0.0
        %1245 = vmatpush.msra.mxu0 0.0
        %1246 = vmatpush.msra.mxu0 0.0
        %1247 = vmatpush.msra.mxu0 0.0
        %v1248 = vand.u32 %v1152, 4294901760
        %1249 = vmatpush.msra.mxu0 %v1248
        %v1250 = vand.u32 %v1155, 4294901760
        %v1251 = vsub.f32 %v1155, %v1250
        %v1252 = vand.u32 %v1251, 4294901760
        %1253 = vmatmul.f32.gmra.mxu0 %v1252
        %v1254 = vpop.f32.mrf.mxu0
        %v1255 = vadd.f32 %v1231, %v1254
        %1256 = vdwg.mxu0
        %1257 = vmatpush.msra.mxu0 0.0
        %1258 = vmatpush.msra.mxu0 0.0
        %1259 = vmatpush.msra.mxu0 0.0
        %1260 = vmatpush.msra.mxu0 0.0
        %1261 = vmatpush.msra.mxu0 0.0
        %1262 = vmatpush.msra.mxu0 0.0
        %1263 = vmatpush.msra.mxu0 0.0
        %1264 = vmatpush.msra.mxu0 0.0
        %1265 = vmatpush.msra.mxu0 0.0
        %1266 = vmatpush.msra.mxu0 0.0
        %1267 = vmatpush.msra.mxu0 0.0
        %1268 = vmatpush.msra.mxu0 0.0
        %1269 = vmatpush.msra.mxu0 0.0
        %1270 = vmatpush.msra.mxu0 0.0
        %1271 = vmatpush.msra.mxu0 0.0
        %v1272 = vand.u32 %v1152, 4294901760
        %v1273 = vsub.f32 %v1152, %v1272
        %v1274 = vand.u32 %v1273, 4294901760
        %1275 = vmatpush.msra.mxu0 %v1274
        %v1276 = vand.u32 %v1155, 4294901760
        %1277 = vmatmul.f32.gmra.mxu0 %v1276
        %v1278 = vpop.f32.mrf.mxu0
        %v1279 = vadd.f32 %v1255, %v1278
        %1280 = vdwg.mxu0
        %1281 = vmatpush.msra.mxu0 0.0
        %1282 = vmatpush.msra.mxu0 0.0
        %1283 = vmatpush.msra.mxu0 0.0
        %1284 = vmatpush.msra.mxu0 0.0
        %1285 = vmatpush.msra.mxu0 0.0
        %1286 = vmatpush.msra.mxu0 0.0
        %1287 = vmatpush.msra.mxu0 0.0
        %1288 = vmatpush.msra.mxu0 0.0
        %1289 = vmatpush.msra.mxu0 0.0
        %1290 = vmatpush.msra.mxu0 0.0
        %1291 = vmatpush.msra.mxu0 0.0
        %1292 = vmatpush.msra.mxu0 0.0
        %1293 = vmatpush.msra.mxu0 0.0
        %1294 = vmatpush.msra.mxu0 0.0
        %1295 = vmatpush.msra.mxu0 0.0
        %v1296 = vand.u32 %v1152, 4294901760
        %1297 = vmatpush.msra.mxu0 %v1296
        %v1298 = vand.u32 %v1155, 4294901760
        %1299 = vmatmul.f32.gmra.mxu0 %v1298
        %v1300 = vpop.f32.mrf.mxu0
        %v1301 = vadd.f32 %v1279, %v1300
        %1302 = vdwg.mxu0
        %1303 = vrot.lane.b32.xlu0 %v633, 120
        %v1304 = vpop.permute.xlu0 %1303
        %1305 = vrot.lane.b32.xlu0 %v633, 88
        %v1306 = vpop.permute.xlu0 %1305
        %v1307 = vsel %vm647, %v1304, 0
        %v1309 = vsel %vm647, %v1306, 0
        %1311 = vmatpush.xpose.msra.mxu0 0.0
        %1312 = vmatpush.xpose.msra.mxu0 0.0
        %1313 = vmatpush.xpose.msra.mxu0 0.0
        %1314 = vmatpush.xpose.msra.mxu0 0.0
        %1315 = vmatpush.xpose.msra.mxu0 0.0
        %1316 = vmatpush.xpose.msra.mxu0 0.0
        %1317 = vmatpush.xpose.msra.mxu0 0.0
        %1318 = vmatpush.xpose.msra.mxu0 0.0
        %1319 = vmatpush.xpose.msra.mxu0 0.0
        %1320 = vmatpush.xpose.msra.mxu0 0.0
        %1321 = vmatpush.xpose.msra.mxu0 0.0
        %1322 = vmatpush.xpose.msra.mxu0 0.0
        %1323 = vmatpush.xpose.msra.mxu0 0.0
        %1324 = vmatpush.xpose.msra.mxu0 0.0
        %1325 = vmatpush.xpose.msra.mxu0 0.0
        %v1326 = vand.u32 %v1309, 4294901760
        %1327 = vmatpush.xpose.msra.mxu0 %v1326
        %v1328 = vand.u32 %v1307, 4294901760
        %v1329 = vsub.f32 %v1307, %v1328
        %v1330 = vand.u32 %v1329, 4294901760
        %v1331 = vsub.f32 %v1329, %v1330
        %v1332 = vand.u32 %v1331, 4294901760
        %1333 = vmatmul.f32.gmra.mxu0 %v1332
        %v1334 = vpop.f32.mrf.mxu0
        %v1335 = vadd.f32 0.0, %v1334
        %1336 = vdwg.mxu0
        %1337 = vmatpush.xpose.msra.mxu0 0.0
        %1338 = vmatpush.xpose.msra.mxu0 0.0
        %1339 = vmatpush.xpose.msra.mxu0 0.0
        %1340 = vmatpush.xpose.msra.mxu0 0.0
        %1341 = vmatpush.xpose.msra.mxu0 0.0
        %1342 = vmatpush.xpose.msra.mxu0 0.0
        %1343 = vmatpush.xpose.msra.mxu0 0.0
        %1344 = vmatpush.xpose.msra.mxu0 0.0
        %1345 = vmatpush.xpose.msra.mxu0 0.0
        %1346 = vmatpush.xpose.msra.mxu0 0.0
        %1347 = vmatpush.xpose.msra.mxu0 0.0
        %1348 = vmatpush.xpose.msra.mxu0 0.0
        %1349 = vmatpush.xpose.msra.mxu0 0.0
        %1350 = vmatpush.xpose.msra.mxu0 0.0
        %1351 = vmatpush.xpose.msra.mxu0 0.0
        %v1352 = vand.u32 %v1309, 4294901760
        %v1353 = vsub.f32 %v1309, %v1352
        %v1354 = vand.u32 %v1353, 4294901760
        %v1355 = vsub.f32 %v1353, %v1354
        %v1356 = vand.u32 %v1355, 4294901760
        %1357 = vmatpush.xpose.msra.mxu0 %v1356
        %v1358 = vand.u32 %v1307, 4294901760
        %1359 = vmatmul.f32.gmra.mxu0 %v1358
        %v1360 = vpop.f32.mrf.mxu0
        %v1361 = vadd.f32 %v1335, %v1360
        %1362 = vdwg.mxu0
        %1363 = vmatpush.xpose.msra.mxu0 0.0
        %1364 = vmatpush.xpose.msra.mxu0 0.0
        %1365 = vmatpush.xpose.msra.mxu0 0.0
        %1366 = vmatpush.xpose.msra.mxu0 0.0
        %1367 = vmatpush.xpose.msra.mxu0 0.0
        %1368 = vmatpush.xpose.msra.mxu0 0.0
        %1369 = vmatpush.xpose.msra.mxu0 0.0
        %1370 = vmatpush.xpose.msra.mxu0 0.0
        %1371 = vmatpush.xpose.msra.mxu0 0.0
        %1372 = vmatpush.xpose.msra.mxu0 0.0
        %1373 = vmatpush.xpose.msra.mxu0 0.0
        %1374 = vmatpush.xpose.msra.mxu0 0.0
        %1375 = vmatpush.xpose.msra.mxu0 0.0
        %1376 = vmatpush.xpose.msra.mxu0 0.0
        %1377 = vmatpush.xpose.msra.mxu0 0.0
        %v1378 = vand.u32 %v1309, 4294901760
        %v1379 = vsub.f32 %v1309, %v1378
        %1380 = vmatpush.xpose.msra.mxu0 %v1379
        %v1381 = vand.u32 %v1307, 4294901760
        %v1382 = vsub.f32 %v1307, %v1381
        %1383 = vmatmul.f32.gmra.mxu0 %v1382
        %v1384 = vpop.f32.mrf.mxu0
        %v1385 = vadd.f32 %v1361, %v1384
        %1386 = vdwg.mxu0
        %1387 = vmatpush.xpose.msra.mxu0 0.0
        %1388 = vmatpush.xpose.msra.mxu0 0.0
        %1389 = vmatpush.xpose.msra.mxu0 0.0
        %1390 = vmatpush.xpose.msra.mxu0 0.0
        %1391 = vmatpush.xpose.msra.mxu0 0.0
        %1392 = vmatpush.xpose.msra.mxu0 0.0
        %1393 = vmatpush.xpose.msra.mxu0 0.0
        %1394 = vmatpush.xpose.msra.mxu0 0.0
        %1395 = vmatpush.xpose.msra.mxu0 0.0
        %1396 = vmatpush.xpose.msra.mxu0 0.0
        %1397 = vmatpush.xpose.msra.mxu0 0.0
        %1398 = vmatpush.xpose.msra.mxu0 0.0
        %1399 = vmatpush.xpose.msra.mxu0 0.0
        %1400 = vmatpush.xpose.msra.mxu0 0.0
        %1401 = vmatpush.xpose.msra.mxu0 0.0
        %v1402 = vand.u32 %v1309, 4294901760
        %1403 = vmatpush.xpose.msra.mxu0 %v1402
        %v1404 = vand.u32 %v1307, 4294901760
        %v1405 = vsub.f32 %v1307, %v1404
        %v1406 = vand.u32 %v1405, 4294901760
        %1407 = vmatmul.f32.gmra.mxu0 %v1406
        %v1408 = vpop.f32.mrf.mxu0
        %v1409 = vadd.f32 %v1385, %v1408
        %1410 = vdwg.mxu0
        %1411 = vmatpush.xpose.msra.mxu0 0.0
        %1412 = vmatpush.xpose.msra.mxu0 0.0
        %1413 = vmatpush.xpose.msra.mxu0 0.0
        %1414 = vmatpush.xpose.msra.mxu0 0.0
        %1415 = vmatpush.xpose.msra.mxu0 0.0
        %1416 = vmatpush.xpose.msra.mxu0 0.0
        %1417 = vmatpush.xpose.msra.mxu0 0.0
        %1418 = vmatpush.xpose.msra.mxu0 0.0
        %1419 = vmatpush.xpose.msra.mxu0 0.0
        %1420 = vmatpush.xpose.msra.mxu0 0.0
        %1421 = vmatpush.xpose.msra.mxu0 0.0
        %1422 = vmatpush.xpose.msra.mxu0 0.0
        %1423 = vmatpush.xpose.msra.mxu0 0.0
        %1424 = vmatpush.xpose.msra.mxu0 0.0
        %1425 = vmatpush.xpose.msra.mxu0 0.0
        %v1426 = vand.u32 %v1309, 4294901760
        %v1427 = vsub.f32 %v1309, %v1426
        %v1428 = vand.u32 %v1427, 4294901760
        %1429 = vmatpush.xpose.msra.mxu0 %v1428
        %v1430 = vand.u32 %v1307, 4294901760
        %1431 = vmatmul.f32.gmra.mxu0 %v1430
        %v1432 = vpop.f32.mrf.mxu0
        %v1433 = vadd.f32 %v1409, %v1432
        %1434 = vdwg.mxu0
        %1435 = vmatpush.xpose.msra.mxu0 0.0
        %1436 = vmatpush.xpose.msra.mxu0 0.0
        %1437 = vmatpush.xpose.msra.mxu0 0.0
        %1438 = vmatpush.xpose.msra.mxu0 0.0
        %1439 = vmatpush.xpose.msra.mxu0 0.0
        %1440 = vmatpush.xpose.msra.mxu0 0.0
        %1441 = vmatpush.xpose.msra.mxu0 0.0
        %1442 = vmatpush.xpose.msra.mxu0 0.0
        %1443 = vmatpush.xpose.msra.mxu0 0.0
        %1444 = vmatpush.xpose.msra.mxu0 0.0
        %1445 = vmatpush.xpose.msra.mxu0 0.0
        %1446 = vmatpush.xpose.msra.mxu0 0.0
        %1447 = vmatpush.xpose.msra.mxu0 0.0
        %1448 = vmatpush.xpose.msra.mxu0 0.0
        %1449 = vmatpush.xpose.msra.mxu0 0.0
        %v1450 = vand.u32 %v1309, 4294901760
        %1451 = vmatpush.xpose.msra.mxu0 %v1450
        %v1452 = vand.u32 %v1307, 4294901760
        %1453 = vmatmul.f32.gmra.mxu0 %v1452
        %v1454 = vpop.f32.mrf.mxu0
        %v1455 = vadd.f32 %v1433, %v1454
        %1456 = vdwg.mxu0
        %1457 = vrot.lane.b32.xlu0 %v637, 120
        %v1458 = vpop.permute.xlu0 %1457
        %1459 = vrot.lane.b32.xlu0 %v637, 88
        %v1460 = vpop.permute.xlu0 %1459
        %v1461 = vsel %vm647, %v1458, 0
        %v1463 = vsel %vm647, %v1460, 0
        %1465 = vmatpush.xpose.msra.mxu0 0.0
        %1466 = vmatpush.xpose.msra.mxu0 0.0
        %1467 = vmatpush.xpose.msra.mxu0 0.0
        %1468 = vmatpush.xpose.msra.mxu0 0.0
        %1469 = vmatpush.xpose.msra.mxu0 0.0
        %1470 = vmatpush.xpose.msra.mxu0 0.0
        %1471 = vmatpush.xpose.msra.mxu0 0.0
        %1472 = vmatpush.xpose.msra.mxu0 0.0
        %1473 = vmatpush.xpose.msra.mxu0 0.0
        %1474 = vmatpush.xpose.msra.mxu0 0.0
        %1475 = vmatpush.xpose.msra.mxu0 0.0
        %1476 = vmatpush.xpose.msra.mxu0 0.0
        %1477 = vmatpush.xpose.msra.mxu0 0.0
        %1478 = vmatpush.xpose.msra.mxu0 0.0
        %1479 = vmatpush.xpose.msra.mxu0 0.0
        %v1480 = vand.u32 %v1463, 4294901760
        %1481 = vmatpush.xpose.msra.mxu0 %v1480
        %v1482 = vand.u32 %v1461, 4294901760
        %v1483 = vsub.f32 %v1461, %v1482
        %v1484 = vand.u32 %v1483, 4294901760
        %v1485 = vsub.f32 %v1483, %v1484
        %v1486 = vand.u32 %v1485, 4294901760
        %1487 = vmatmul.f32.gmra.mxu0 %v1486
        %v1488 = vpop.f32.mrf.mxu0
        %v1489 = vadd.f32 0.0, %v1488
        %1490 = vdwg.mxu0
        %1491 = vmatpush.xpose.msra.mxu0 0.0
        %1492 = vmatpush.xpose.msra.mxu0 0.0
        %1493 = vmatpush.xpose.msra.mxu0 0.0
        %1494 = vmatpush.xpose.msra.mxu0 0.0
        %1495 = vmatpush.xpose.msra.mxu0 0.0
        %1496 = vmatpush.xpose.msra.mxu0 0.0
        %1497 = vmatpush.xpose.msra.mxu0 0.0
        %1498 = vmatpush.xpose.msra.mxu0 0.0
        %1499 = vmatpush.xpose.msra.mxu0 0.0
        %1500 = vmatpush.xpose.msra.mxu0 0.0
        %1501 = vmatpush.xpose.msra.mxu0 0.0
        %1502 = vmatpush.xpose.msra.mxu0 0.0
        %1503 = vmatpush.xpose.msra.mxu0 0.0
        %1504 = vmatpush.xpose.msra.mxu0 0.0
        %1505 = vmatpush.xpose.msra.mxu0 0.0
        %v1506 = vand.u32 %v1463, 4294901760
        %v1507 = vsub.f32 %v1463, %v1506
        %v1508 = vand.u32 %v1507, 4294901760
        %v1509 = vsub.f32 %v1507, %v1508
        %v1510 = vand.u32 %v1509, 4294901760
        %1511 = vmatpush.xpose.msra.mxu0 %v1510
        %v1512 = vand.u32 %v1461, 4294901760
        %1513 = vmatmul.f32.gmra.mxu0 %v1512
        %v1514 = vpop.f32.mrf.mxu0
        %v1515 = vadd.f32 %v1489, %v1514
        %1516 = vdwg.mxu0
        %1517 = vmatpush.xpose.msra.mxu0 0.0
        %1518 = vmatpush.xpose.msra.mxu0 0.0
        %1519 = vmatpush.xpose.msra.mxu0 0.0
        %1520 = vmatpush.xpose.msra.mxu0 0.0
        %1521 = vmatpush.xpose.msra.mxu0 0.0
        %1522 = vmatpush.xpose.msra.mxu0 0.0
        %1523 = vmatpush.xpose.msra.mxu0 0.0
        %1524 = vmatpush.xpose.msra.mxu0 0.0
        %1525 = vmatpush.xpose.msra.mxu0 0.0
        %1526 = vmatpush.xpose.msra.mxu0 0.0
        %1527 = vmatpush.xpose.msra.mxu0 0.0
        %1528 = vmatpush.xpose.msra.mxu0 0.0
        %1529 = vmatpush.xpose.msra.mxu0 0.0
        %1530 = vmatpush.xpose.msra.mxu0 0.0
        %1531 = vmatpush.xpose.msra.mxu0 0.0
        %v1532 = vand.u32 %v1463, 4294901760
        %v1533 = vsub.f32 %v1463, %v1532
        %1534 = vmatpush.xpose.msra.mxu0 %v1533
        %v1535 = vand.u32 %v1461, 4294901760
        %v1536 = vsub.f32 %v1461, %v1535
        %1537 = vmatmul.f32.gmra.mxu0 %v1536
        %v1538 = vpop.f32.mrf.mxu0
        %v1539 = vadd.f32 %v1515, %v1538
        %1540 = vdwg.mxu0
        %1541 = vmatpush.xpose.msra.mxu0 0.0
        %1542 = vmatpush.xpose.msra.mxu0 0.0
        %1543 = vmatpush.xpose.msra.mxu0 0.0
        %1544 = vmatpush.xpose.msra.mxu0 0.0
        %1545 = vmatpush.xpose.msra.mxu0 0.0
        %1546 = vmatpush.xpose.msra.mxu0 0.0
        %1547 = vmatpush.xpose.msra.mxu0 0.0
        %1548 = vmatpush.xpose.msra.mxu0 0.0
        %1549 = vmatpush.xpose.msra.mxu0 0.0
        %1550 = vmatpush.xpose.msra.mxu0 0.0
        %1551 = vmatpush.xpose.msra.mxu0 0.0
        %1552 = vmatpush.xpose.msra.mxu0 0.0
        %1553 = vmatpush.xpose.msra.mxu0 0.0
        %1554 = vmatpush.xpose.msra.mxu0 0.0
        %1555 = vmatpush.xpose.msra.mxu0 0.0
        %v1556 = vand.u32 %v1463, 4294901760
        %1557 = vmatpush.xpose.msra.mxu0 %v1556
        %v1558 = vand.u32 %v1461, 4294901760
        %v1559 = vsub.f32 %v1461, %v1558
        %v1560 = vand.u32 %v1559, 4294901760
        %1561 = vmatmul.f32.gmra.mxu0 %v1560
        %v1562 = vpop.f32.mrf.mxu0
        %v1563 = vadd.f32 %v1539, %v1562
        %1564 = vdwg.mxu0
        %1565 = vmatpush.xpose.msra.mxu0 0.0
        %1566 = vmatpush.xpose.msra.mxu0 0.0
        %1567 = vmatpush.xpose.msra.mxu0 0.0
        %1568 = vmatpush.xpose.msra.mxu0 0.0
        %1569 = vmatpush.xpose.msra.mxu0 0.0
        %1570 = vmatpush.xpose.msra.mxu0 0.0
        %1571 = vmatpush.xpose.msra.mxu0 0.0
        %1572 = vmatpush.xpose.msra.mxu0 0.0
        %1573 = vmatpush.xpose.msra.mxu0 0.0
        %1574 = vmatpush.xpose.msra.mxu0 0.0
        %1575 = vmatpush.xpose.msra.mxu0 0.0
        %1576 = vmatpush.xpose.msra.mxu0 0.0
        %1577 = vmatpush.xpose.msra.mxu0 0.0
        %1578 = vmatpush.xpose.msra.mxu0 0.0
        %1579 = vmatpush.xpose.msra.mxu0 0.0
        %v1580 = vand.u32 %v1463, 4294901760
        %v1581 = vsub.f32 %v1463, %v1580
        %v1582 = vand.u32 %v1581, 4294901760
        %1583 = vmatpush.xpose.msra.mxu0 %v1582
        %v1584 = vand.u32 %v1461, 4294901760
        %1585 = vmatmul.f32.gmra.mxu0 %v1584
        %v1586 = vpop.f32.mrf.mxu0
        %v1587 = vadd.f32 %v1563, %v1586
        %1588 = vdwg.mxu0
        %1589 = vmatpush.xpose.msra.mxu0 0.0
        %1590 = vmatpush.xpose.msra.mxu0 0.0
        %1591 = vmatpush.xpose.msra.mxu0 0.0
        %1592 = vmatpush.xpose.msra.mxu0 0.0
        %1593 = vmatpush.xpose.msra.mxu0 0.0
        %1594 = vmatpush.xpose.msra.mxu0 0.0
        %1595 = vmatpush.xpose.msra.mxu0 0.0
        %1596 = vmatpush.xpose.msra.mxu0 0.0
        %1597 = vmatpush.xpose.msra.mxu0 0.0
        %1598 = vmatpush.xpose.msra.mxu0 0.0
        %1599 = vmatpush.xpose.msra.mxu0 0.0
        %1600 = vmatpush.xpose.msra.mxu0 0.0
        %1601 = vmatpush.xpose.msra.mxu0 0.0
        %1602 = vmatpush.xpose.msra.mxu0 0.0
        %1603 = vmatpush.xpose.msra.mxu0 0.0
        %v1604 = vand.u32 %v1463, 4294901760
        %1605 = vmatpush.xpose.msra.mxu0 %v1604
        %v1606 = vand.u32 %v1461, 4294901760
        %1607 = vmatmul.f32.gmra.mxu0 %v1606
        %v1608 = vpop.f32.mrf.mxu0
        %v1609 = vadd.f32 %v1587, %v1608
        %1610 = vdwg.mxu0
        %v1611 = vsel %vm647, %v1455, -inf
        %1612 = vmax.xlane.f32.xlu0 %v1611
        %v1613 = vpop.xlane.xlu0 %1612
        %v1614 = vsel %vm647, %v1609, -inf
        %1615 = vmax.xlane.f32.xlu0 %v1614
        %v1616 = vpop.xlane.xlu0 %1615
        %v1617 = vsub.f32 %v1455, %v1613
        %v1618 = vsub.f32 %v1609, %v1616
        %v1619 = vmul.f32 %v1617, 1.442695
        %v1620 = vpow.pop %v1619
        %v1621 = vmul.f32 %v1618, 1.442695
        %v1622 = vpow.pop %v1621
        %v1623 = vsel %vm647, %v1620, 0.0
        %1624 = vadd.xlane.f32.xlu0 %v1623
        %v1625 = vpop.xlane.xlu0 %1624
        %v1626 = vsel %vm647, %v1622, 0.0
        %1627 = vadd.xlane.f32.xlu0 %v1626
        %v1628 = vpop.xlane.xlu0 %1627
        %v1629 = vrcp.pop %v1625
        %v1630 = vmul.f32 %v1625, %v1629
        %v1631 = vsub.f32 1.0, %v1630
        %v1632 = vmul.f32 %v1629, %v1631
        %v1633 = vadd.f32 %v1629, %v1632
        %vm1634 = vweird.f32 %v1625
        %vm1635 = vweird.f32 %v1629
        %vm1636 = vmor %vm1634, %vm1635
        %v1637 = vsel %vm1636, %v1629, %v1633
        %v1638 = vand.u32 2147483647, %v1625
        %vm1639 = vcmp.eq.f32.partialorder %v1638, 8.507059e+37
        %v1640 = vand.u32 %v1625, 2147483648
        %v1641 = vor.u32 1.1754944e-38, %v1640
        %v1642 = vsel %vm1639, %v1641, %v1637
        %v1643 = vrcp.pop %v1628
        %v1644 = vmul.f32 %v1628, %v1643
        %v1645 = vsub.f32 1.0, %v1644
        %v1646 = vmul.f32 %v1643, %v1645
        %v1647 = vadd.f32 %v1643, %v1646
        %vm1648 = vweird.f32 %v1628
        %vm1649 = vweird.f32 %v1643
        %vm1650 = vmor %vm1648, %vm1649
        %v1651 = vsel %vm1650, %v1643, %v1647
        %v1652 = vand.u32 2147483647, %v1628
        %vm1653 = vcmp.eq.f32.partialorder %v1652, 8.507059e+37
        %v1654 = vand.u32 %v1628, 2147483648
        %v1655 = vor.u32 1.1754944e-38, %v1654
        %v1656 = vsel %vm1653, %v1655, %v1651
        %v1657 = vmul.f32 %v1620, %v1642
        %v1658 = vmul.f32 %v1622, %v1656
        %1659 = vrot.lane.b32.xlu0 %v633, 56
        %v1660 = vpop.permute.xlu0 %1659
        %v1663 = vsel %vm647, %v1657, 0
        %1665 = vmatpush.msra.mxu0 0.0
        %1666 = vmatpush.msra.mxu0 0.0
        %1667 = vmatpush.msra.mxu0 0.0
        %1668 = vmatpush.msra.mxu0 0.0
        %1669 = vmatpush.msra.mxu0 0.0
        %1670 = vmatpush.msra.mxu0 0.0
        %1671 = vmatpush.msra.mxu0 0.0
        %1672 = vmatpush.msra.mxu0 0.0
        %1673 = vmatpush.msra.mxu0 0.0
        %1674 = vmatpush.msra.mxu0 0.0
        %1675 = vmatpush.msra.mxu0 0.0
        %1676 = vmatpush.msra.mxu0 0.0
        %1677 = vmatpush.msra.mxu0 0.0
        %1678 = vmatpush.msra.mxu0 0.0
        %1679 = vmatpush.msra.mxu0 0.0
        %v1680 = vand.u32 %v1660, 4294901760
        %1681 = vmatpush.msra.mxu0 %v1680
        %v1682 = vand.u32 %v1663, 4294901760
        %v1683 = vsub.f32 %v1663, %v1682
        %v1684 = vand.u32 %v1683, 4294901760
        %v1685 = vsub.f32 %v1683, %v1684
        %v1686 = vand.u32 %v1685, 4294901760
        %1687 = vmatmul.f32.gmra.mxu0 %v1686
        %v1688 = vpop.f32.mrf.mxu0
        %v1689 = vadd.f32 0.0, %v1688
        %1690 = vdwg.mxu0
        %1691 = vmatpush.msra.mxu0 0.0
        %1692 = vmatpush.msra.mxu0 0.0
        %1693 = vmatpush.msra.mxu0 0.0
        %1694 = vmatpush.msra.mxu0 0.0
        %1695 = vmatpush.msra.mxu0 0.0
        %1696 = vmatpush.msra.mxu0 0.0
        %1697 = vmatpush.msra.mxu0 0.0
        %1698 = vmatpush.msra.mxu0 0.0
        %1699 = vmatpush.msra.mxu0 0.0
        %1700 = vmatpush.msra.mxu0 0.0
        %1701 = vmatpush.msra.mxu0 0.0
        %1702 = vmatpush.msra.mxu0 0.0
        %1703 = vmatpush.msra.mxu0 0.0
        %1704 = vmatpush.msra.mxu0 0.0
        %1705 = vmatpush.msra.mxu0 0.0
        %v1706 = vand.u32 %v1660, 4294901760
        %v1707 = vsub.f32 %v1660, %v1706
        %v1708 = vand.u32 %v1707, 4294901760
        %v1709 = vsub.f32 %v1707, %v1708
        %v1710 = vand.u32 %v1709, 4294901760
        %1711 = vmatpush.msra.mxu0 %v1710
        %v1712 = vand.u32 %v1663, 4294901760
        %1713 = vmatmul.f32.gmra.mxu0 %v1712
        %v1714 = vpop.f32.mrf.mxu0
        %v1715 = vadd.f32 %v1689, %v1714
        %1716 = vdwg.mxu0
        %1717 = vmatpush.msra.mxu0 0.0
        %1718 = vmatpush.msra.mxu0 0.0
        %1719 = vmatpush.msra.mxu0 0.0
        %1720 = vmatpush.msra.mxu0 0.0
        %1721 = vmatpush.msra.mxu0 0.0
        %1722 = vmatpush.msra.mxu0 0.0
        %1723 = vmatpush.msra.mxu0 0.0
        %1724 = vmatpush.msra.mxu0 0.0
        %1725 = vmatpush.msra.mxu0 0.0
        %1726 = vmatpush.msra.mxu0 0.0
        %1727 = vmatpush.msra.mxu0 0.0
        %1728 = vmatpush.msra.mxu0 0.0
        %1729 = vmatpush.msra.mxu0 0.0
        %1730 = vmatpush.msra.mxu0 0.0
        %1731 = vmatpush.msra.mxu0 0.0
        %v1732 = vand.u32 %v1660, 4294901760
        %v1733 = vsub.f32 %v1660, %v1732
        %1734 = vmatpush.msra.mxu0 %v1733
        %v1735 = vand.u32 %v1663, 4294901760
        %v1736 = vsub.f32 %v1663, %v1735
        %1737 = vmatmul.f32.gmra.mxu0 %v1736
        %v1738 = vpop.f32.mrf.mxu0
        %v1739 = vadd.f32 %v1715, %v1738
        %1740 = vdwg.mxu0
        %1741 = vmatpush.msra.mxu0 0.0
        %1742 = vmatpush.msra.mxu0 0.0
        %1743 = vmatpush.msra.mxu0 0.0
        %1744 = vmatpush.msra.mxu0 0.0
        %1745 = vmatpush.msra.mxu0 0.0
        %1746 = vmatpush.msra.mxu0 0.0
        %1747 = vmatpush.msra.mxu0 0.0
        %1748 = vmatpush.msra.mxu0 0.0
        %1749 = vmatpush.msra.mxu0 0.0
        %1750 = vmatpush.msra.mxu0 0.0
        %1751 = vmatpush.msra.mxu0 0.0
        %1752 = vmatpush.msra.mxu0 0.0
        %1753 = vmatpush.msra.mxu0 0.0
        %1754 = vmatpush.msra.mxu0 0.0
        %1755 = vmatpush.msra.mxu0 0.0
        %v1756 = vand.u32 %v1660, 4294901760
        %1757 = vmatpush.msra.mxu0 %v1756
        %v1758 = vand.u32 %v1663, 4294901760
        %v1759 = vsub.f32 %v1663, %v1758
        %v1760 = vand.u32 %v1759, 4294901760
        %1761 = vmatmul.f32.gmra.mxu0 %v1760
        %v1762 = vpop.f32.mrf.mxu0
        %v1763 = vadd.f32 %v1739, %v1762
        %1764 = vdwg.mxu0
        %1765 = vmatpush.msra.mxu0 0.0
        %1766 = vmatpush.msra.mxu0 0.0
        %1767 = vmatpush.msra.mxu0 0.0
        %1768 = vmatpush.msra.mxu0 0.0
        %1769 = vmatpush.msra.mxu0 0.0
        %1770 = vmatpush.msra.mxu0 0.0
        %1771 = vmatpush.msra.mxu0 0.0
        %1772 = vmatpush.msra.mxu0 0.0
        %1773 = vmatpush.msra.mxu0 0.0
        %1774 = vmatpush.msra.mxu0 0.0
        %1775 = vmatpush.msra.mxu0 0.0
        %1776 = vmatpush.msra.mxu0 0.0
        %1777 = vmatpush.msra.mxu0 0.0
        %1778 = vmatpush.msra.mxu0 0.0
        %1779 = vmatpush.msra.mxu0 0.0
        %v1780 = vand.u32 %v1660, 4294901760
        %v1781 = vsub.f32 %v1660, %v1780
        %v1782 = vand.u32 %v1781, 4294901760
        %1783 = vmatpush.msra.mxu0 %v1782
        %v1784 = vand.u32 %v1663, 4294901760
        %1785 = vmatmul.f32.gmra.mxu0 %v1784
        %v1786 = vpop.f32.mrf.mxu0
        %v1787 = vadd.f32 %v1763, %v1786
        %1788 = vdwg.mxu0
        %1789 = vmatpush.msra.mxu0 0.0
        %1790 = vmatpush.msra.mxu0 0.0
        %1791 = vmatpush.msra.mxu0 0.0
        %1792 = vmatpush.msra.mxu0 0.0
        %1793 = vmatpush.msra.mxu0 0.0
        %1794 = vmatpush.msra.mxu0 0.0
        %1795 = vmatpush.msra.mxu0 0.0
        %1796 = vmatpush.msra.mxu0 0.0
        %1797 = vmatpush.msra.mxu0 0.0
        %1798 = vmatpush.msra.mxu0 0.0
        %1799 = vmatpush.msra.mxu0 0.0
        %1800 = vmatpush.msra.mxu0 0.0
        %1801 = vmatpush.msra.mxu0 0.0
        %1802 = vmatpush.msra.mxu0 0.0
        %1803 = vmatpush.msra.mxu0 0.0
        %v1804 = vand.u32 %v1660, 4294901760
        %1805 = vmatpush.msra.mxu0 %v1804
        %v1806 = vand.u32 %v1663, 4294901760
        %1807 = vmatmul.f32.gmra.mxu0 %v1806
        %v1808 = vpop.f32.mrf.mxu0
        %v1809 = vadd.f32 %v1787, %v1808
        %1810 = vdwg.mxu0
        %1811 = vrot.lane.b32.xlu0 %v637, 56
        %v1812 = vpop.permute.xlu0 %1811
        %v1815 = vsel %vm647, %v1658, 0
        %1817 = vmatpush.msra.mxu0 0.0
        %1818 = vmatpush.msra.mxu0 0.0
        %1819 = vmatpush.msra.mxu0 0.0
        %1820 = vmatpush.msra.mxu0 0.0
        %1821 = vmatpush.msra.mxu0 0.0
        %1822 = vmatpush.msra.mxu0 0.0
        %1823 = vmatpush.msra.mxu0 0.0
        %1824 = vmatpush.msra.mxu0 0.0
        %1825 = vmatpush.msra.mxu0 0.0
        %1826 = vmatpush.msra.mxu0 0.0
        %1827 = vmatpush.msra.mxu0 0.0
        %1828 = vmatpush.msra.mxu0 0.0
        %1829 = vmatpush.msra.mxu0 0.0
        %1830 = vmatpush.msra.mxu0 0.0
        %1831 = vmatpush.msra.mxu0 0.0
        %v1832 = vand.u32 %v1812, 4294901760
        %1833 = vmatpush.msra.mxu0 %v1832
        %v1834 = vand.u32 %v1815, 4294901760
        %v1835 = vsub.f32 %v1815, %v1834
        %v1836 = vand.u32 %v1835, 4294901760
        %v1837 = vsub.f32 %v1835, %v1836
        %v1838 = vand.u32 %v1837, 4294901760
        %1839 = vmatmul.f32.gmra.mxu0 %v1838
        %v1840 = vpop.f32.mrf.mxu0
        %v1841 = vadd.f32 0.0, %v1840
        %1842 = vdwg.mxu0
        %1843 = vmatpush.msra.mxu0 0.0
        %1844 = vmatpush.msra.mxu0 0.0
        %1845 = vmatpush.msra.mxu0 0.0
        %1846 = vmatpush.msra.mxu0 0.0
        %1847 = vmatpush.msra.mxu0 0.0
        %1848 = vmatpush.msra.mxu0 0.0
        %1849 = vmatpush.msra.mxu0 0.0
        %1850 = vmatpush.msra.mxu0 0.0
        %1851 = vmatpush.msra.mxu0 0.0
        %1852 = vmatpush.msra.mxu0 0.0
        %1853 = vmatpush.msra.mxu0 0.0
        %1854 = vmatpush.msra.mxu0 0.0
        %1855 = vmatpush.msra.mxu0 0.0
        %1856 = vmatpush.msra.mxu0 0.0
        %1857 = vmatpush.msra.mxu0 0.0
        %v1858 = vand.u32 %v1812, 4294901760
        %v1859 = vsub.f32 %v1812, %v1858
        %v1860 = vand.u32 %v1859, 4294901760
        %v1861 = vsub.f32 %v1859, %v1860
        %v1862 = vand.u32 %v1861, 4294901760
        %1863 = vmatpush.msra.mxu0 %v1862
        %v1864 = vand.u32 %v1815, 4294901760
        %1865 = vmatmul.f32.gmra.mxu0 %v1864
        %v1866 = vpop.f32.mrf.mxu0
        %v1867 = vadd.f32 %v1841, %v1866
        %1868 = vdwg.mxu0
        %1869 = vmatpush.msra.mxu0 0.0
        %1870 = vmatpush.msra.mxu0 0.0
        %1871 = vmatpush.msra.mxu0 0.0
        %1872 = vmatpush.msra.mxu0 0.0
        %1873 = vmatpush.msra.mxu0 0.0
        %1874 = vmatpush.msra.mxu0 0.0
        %1875 = vmatpush.msra.mxu0 0.0
        %1876 = vmatpush.msra.mxu0 0.0
        %1877 = vmatpush.msra.mxu0 0.0
        %1878 = vmatpush.msra.mxu0 0.0
        %1879 = vmatpush.msra.mxu0 0.0
        %1880 = vmatpush.msra.mxu0 0.0
        %1881 = vmatpush.msra.mxu0 0.0
        %1882 = vmatpush.msra.mxu0 0.0
        %1883 = vmatpush.msra.mxu0 0.0
        %v1884 = vand.u32 %v1812, 4294901760
        %v1885 = vsub.f32 %v1812, %v1884
        %1886 = vmatpush.msra.mxu0 %v1885
        %v1887 = vand.u32 %v1815, 4294901760
        %v1888 = vsub.f32 %v1815, %v1887
        %1889 = vmatmul.f32.gmra.mxu0 %v1888
        %v1890 = vpop.f32.mrf.mxu0
        %v1891 = vadd.f32 %v1867, %v1890
        %1892 = vdwg.mxu0
        %1893 = vmatpush.msra.mxu0 0.0
        %1894 = vmatpush.msra.mxu0 0.0
        %1895 = vmatpush.msra.mxu0 0.0
        %1896 = vmatpush.msra.mxu0 0.0
        %1897 = vmatpush.msra.mxu0 0.0
        %1898 = vmatpush.msra.mxu0 0.0
        %1899 = vmatpush.msra.mxu0 0.0
        %1900 = vmatpush.msra.mxu0 0.0
        %1901 = vmatpush.msra.mxu0 0.0
        %1902 = vmatpush.msra.mxu0 0.0
        %1903 = vmatpush.msra.mxu0 0.0
        %1904 = vmatpush.msra.mxu0 0.0
        %1905 = vmatpush.msra.mxu0 0.0
        %1906 = vmatpush.msra.mxu0 0.0
        %1907 = vmatpush.msra.mxu0 0.0
        %v1908 = vand.u32 %v1812, 4294901760
        %1909 = vmatpush.msra.mxu0 %v1908
        %v1910 = vand.u32 %v1815, 4294901760
        %v1911 = vsub.f32 %v1815, %v1910
        %v1912 = vand.u32 %v1911, 4294901760
        %1913 = vmatmul.f32.gmra.mxu0 %v1912
        %v1914 = vpop.f32.mrf.mxu0
        %v1915 = vadd.f32 %v1891, %v1914
        %1916 = vdwg.mxu0
        %1917 = vmatpush.msra.mxu0 0.0
        %1918 = vmatpush.msra.mxu0 0.0
        %1919 = vmatpush.msra.mxu0 0.0
        %1920 = vmatpush.msra.mxu0 0.0
        %1921 = vmatpush.msra.mxu0 0.0
        %1922 = vmatpush.msra.mxu0 0.0
        %1923 = vmatpush.msra.mxu0 0.0
        %1924 = vmatpush.msra.mxu0 0.0
        %1925 = vmatpush.msra.mxu0 0.0
        %1926 = vmatpush.msra.mxu0 0.0
        %1927 = vmatpush.msra.mxu0 0.0
        %1928 = vmatpush.msra.mxu0 0.0
        %1929 = vmatpush.msra.mxu0 0.0
        %1930 = vmatpush.msra.mxu0 0.0
        %1931 = vmatpush.msra.mxu0 0.0
        %v1932 = vand.u32 %v1812, 4294901760
        %v1933 = vsub.f32 %v1812, %v1932
        %v1934 = vand.u32 %v1933, 4294901760
        %1935 = vmatpush.msra.mxu0 %v1934
        %v1936 = vand.u32 %v1815, 4294901760
        %1937 = vmatmul.f32.gmra.mxu0 %v1936
        %v1938 = vpop.f32.mrf.mxu0
        %v1939 = vadd.f32 %v1915, %v1938
        %1940 = vdwg.mxu0
        %1941 = vmatpush.msra.mxu0 0.0
        %1942 = vmatpush.msra.mxu0 0.0
        %1943 = vmatpush.msra.mxu0 0.0
        %1944 = vmatpush.msra.mxu0 0.0
        %1945 = vmatpush.msra.mxu0 0.0
        %1946 = vmatpush.msra.mxu0 0.0
        %1947 = vmatpush.msra.mxu0 0.0
        %1948 = vmatpush.msra.mxu0 0.0
        %1949 = vmatpush.msra.mxu0 0.0
        %1950 = vmatpush.msra.mxu0 0.0
        %1951 = vmatpush.msra.mxu0 0.0
        %1952 = vmatpush.msra.mxu0 0.0
        %1953 = vmatpush.msra.mxu0 0.0
        %1954 = vmatpush.msra.mxu0 0.0
        %1955 = vmatpush.msra.mxu0 0.0
        %v1956 = vand.u32 %v1812, 4294901760
        %1957 = vmatpush.msra.mxu0 %v1956
        %v1958 = vand.u32 %v1815, 4294901760
        %1959 = vmatmul.f32.gmra.mxu0 %v1958
        %v1960 = vpop.f32.mrf.mxu0
        %v1961 = vadd.f32 %v1939, %v1960
        %1962 = vdwg.mxu0
        %v1964 = vsel %vm647, %v1809, 0
        %v1967 = vsel %vm647, %v1961, 0
        %1969 = vmatpush.msra.mxu0 0.0
        %1970 = vmatpush.msra.mxu0 0.0
        %1971 = vmatpush.msra.mxu0 0.0
        %1972 = vmatpush.msra.mxu0 0.0
        %1973 = vmatpush.msra.mxu0 0.0
        %1974 = vmatpush.msra.mxu0 0.0
        %1975 = vmatpush.msra.mxu0 0.0
        %1976 = vmatpush.msra.mxu0 0.0
        %1977 = vmatpush.msra.mxu0 0.0
        %1978 = vmatpush.msra.mxu0 0.0
        %1979 = vmatpush.msra.mxu0 0.0
        %1980 = vmatpush.msra.mxu0 0.0
        %1981 = vmatpush.msra.mxu0 0.0
        %1982 = vmatpush.msra.mxu0 0.0
        %1983 = vmatpush.msra.mxu0 0.0
        %v1984 = vand.u32 %v640, 4294901760
        %1985 = vmatpush.msra.mxu0 %v1984
        %v1986 = vand.u32 %v1964, 4294901760
        %v1987 = vsub.f32 %v1964, %v1986
        %v1988 = vand.u32 %v1987, 4294901760
        %v1989 = vsub.f32 %v1987, %v1988
        %v1990 = vand.u32 %v1989, 4294901760
        %1991 = vmatmul.f32.gmra.mxu0 %v1990
        %v1992 = vpop.f32.mrf.mxu0
        %v1993 = vadd.f32 0.0, %v1992
        %v1994 = vand.u32 %v1967, 4294901760
        %v1995 = vsub.f32 %v1967, %v1994
        %v1996 = vand.u32 %v1995, 4294901760
        %v1997 = vsub.f32 %v1995, %v1996
        %v1998 = vand.u32 %v1997, 4294901760
        %1999 = vmatmul.f32.gmra.mxu0 %v1998
        %v2000 = vpop.f32.mrf.mxu0
        %v2001 = vadd.f32 0.0, %v2000
        %2002 = vdwg.mxu0
        %2003 = vmatpush.msra.mxu0 0.0
        %2004 = vmatpush.msra.mxu0 0.0
        %2005 = vmatpush.msra.mxu0 0.0
        %2006 = vmatpush.msra.mxu0 0.0
        %2007 = vmatpush.msra.mxu0 0.0
        %2008 = vmatpush.msra.mxu0 0.0
        %2009 = vmatpush.msra.mxu0 0.0
        %2010 = vmatpush.msra.mxu0 0.0
        %2011 = vmatpush.msra.mxu0 0.0
        %2012 = vmatpush.msra.mxu0 0.0
        %2013 = vmatpush.msra.mxu0 0.0
        %2014 = vmatpush.msra.mxu0 0.0
        %2015 = vmatpush.msra.mxu0 0.0
        %2016 = vmatpush.msra.mxu0 0.0
        %2017 = vmatpush.msra.mxu0 0.0
        %v2018 = vand.u32 %v640, 4294901760
        %v2019 = vsub.f32 %v640, %v2018
        %v2020 = vand.u32 %v2019, 4294901760
        %v2021 = vsub.f32 %v2019, %v2020
        %v2022 = vand.u32 %v2021, 4294901760
        %2023 = vmatpush.msra.mxu0 %v2022
        %v2024 = vand.u32 %v1964, 4294901760
        %2025 = vmatmul.f32.gmra.mxu0 %v2024
        %v2026 = vpop.f32.mrf.mxu0
        %v2027 = vadd.f32 %v1993, %v2026
        %v2028 = vand.u32 %v1967, 4294901760
        %2029 = vmatmul.f32.gmra.mxu0 %v2028
        %v2030 = vpop.f32.mrf.mxu0
        %v2031 = vadd.f32 %v2001, %v2030
        %2032 = vdwg.mxu0
        %2033 = vmatpush.msra.mxu0 0.0
        %2034 = vmatpush.msra.mxu0 0.0
        %2035 = vmatpush.msra.mxu0 0.0
        %2036 = vmatpush.msra.mxu0 0.0
        %2037 = vmatpush.msra.mxu0 0.0
        %2038 = vmatpush.msra.mxu0 0.0
        %2039 = vmatpush.msra.mxu0 0.0
        %2040 = vmatpush.msra.mxu0 0.0
        %2041 = vmatpush.msra.mxu0 0.0
        %2042 = vmatpush.msra.mxu0 0.0
        %2043 = vmatpush.msra.mxu0 0.0
        %2044 = vmatpush.msra.mxu0 0.0
        %2045 = vmatpush.msra.mxu0 0.0
        %2046 = vmatpush.msra.mxu0 0.0
        %2047 = vmatpush.msra.mxu0 0.0
        %v2048 = vand.u32 %v640, 4294901760
        %v2049 = vsub.f32 %v640, %v2048
        %2050 = vmatpush.msra.mxu0 %v2049
        %v2051 = vand.u32 %v1964, 4294901760
        %v2052 = vsub.f32 %v1964, %v2051
        %2053 = vmatmul.f32.gmra.mxu0 %v2052
        %v2054 = vpop.f32.mrf.mxu0
        %v2055 = vadd.f32 %v2027, %v2054
        %v2056 = vand.u32 %v1967, 4294901760
        %v2057 = vsub.f32 %v1967, %v2056
        %2058 = vmatmul.f32.gmra.mxu0 %v2057
        %v2059 = vpop.f32.mrf.mxu0
        %v2060 = vadd.f32 %v2031, %v2059
        %2061 = vdwg.mxu0
        %2062 = vmatpush.msra.mxu0 0.0
        %2063 = vmatpush.msra.mxu0 0.0
        %2064 = vmatpush.msra.mxu0 0.0
        %2065 = vmatpush.msra.mxu0 0.0
        %2066 = vmatpush.msra.mxu0 0.0
        %2067 = vmatpush.msra.mxu0 0.0
        %2068 = vmatpush.msra.mxu0 0.0
        %2069 = vmatpush.msra.mxu0 0.0
        %2070 = vmatpush.msra.mxu0 0.0
        %2071 = vmatpush.msra.mxu0 0.0
        %2072 = vmatpush.msra.mxu0 0.0
        %2073 = vmatpush.msra.mxu0 0.0
        %2074 = vmatpush.msra.mxu0 0.0
        %2075 = vmatpush.msra.mxu0 0.0
        %2076 = vmatpush.msra.mxu0 0.0
        %v2077 = vand.u32 %v640, 4294901760
        %2078 = vmatpush.msra.mxu0 %v2077
        %v2079 = vand.u32 %v1964, 4294901760
        %v2080 = vsub.f32 %v1964, %v2079
        %v2081 = vand.u32 %v2080, 4294901760
        %2082 = vmatmul.f32.gmra.mxu0 %v2081
        %v2083 = vpop.f32.mrf.mxu0
        %v2084 = vadd.f32 %v2055, %v2083
        %v2085 = vand.u32 %v1967, 4294901760
        %v2086 = vsub.f32 %v1967, %v2085
        %v2087 = vand.u32 %v2086, 4294901760
        %2088 = vmatmul.f32.gmra.mxu0 %v2087
        %v2089 = vpop.f32.mrf.mxu0
        %v2090 = vadd.f32 %v2060, %v2089
        %2091 = vdwg.mxu0
        %2092 = vmatpush.msra.mxu0 0.0
        %2093 = vmatpush.msra.mxu0 0.0
        %2094 = vmatpush.msra.mxu0 0.0
        %2095 = vmatpush.msra.mxu0 0.0
        %2096 = vmatpush.msra.mxu0 0.0
        %2097 = vmatpush.msra.mxu0 0.0
        %2098 = vmatpush.msra.mxu0 0.0
        %2099 = vmatpush.msra.mxu0 0.0
        %2100 = vmatpush.msra.mxu0 0.0
        %2101 = vmatpush.msra.mxu0 0.0
        %2102 = vmatpush.msra.mxu0 0.0
        %2103 = vmatpush.msra.mxu0 0.0
        %2104 = vmatpush.msra.mxu0 0.0
        %2105 = vmatpush.msra.mxu0 0.0
        %2106 = vmatpush.msra.mxu0 0.0
        %v2107 = vand.u32 %v640, 4294901760
        %v2108 = vsub.f32 %v640, %v2107
        %v2109 = vand.u32 %v2108, 4294901760
        %2110 = vmatpush.msra.mxu0 %v2109
        %v2111 = vand.u32 %v1964, 4294901760
        %2112 = vmatmul.f32.gmra.mxu0 %v2111
        %v2113 = vpop.f32.mrf.mxu0
        %v2114 = vadd.f32 %v2084, %v2113
        %v2115 = vand.u32 %v1967, 4294901760
        %2116 = vmatmul.f32.gmra.mxu0 %v2115
        %v2117 = vpop.f32.mrf.mxu0
        %v2118 = vadd.f32 %v2090, %v2117
        %2119 = vdwg.mxu0
        %2120 = vmatpush.msra.mxu0 0.0
        %2121 = vmatpush.msra.mxu0 0.0
        %2122 = vmatpush.msra.mxu0 0.0
        %2123 = vmatpush.msra.mxu0 0.0
        %2124 = vmatpush.msra.mxu0 0.0
        %2125 = vmatpush.msra.mxu0 0.0
        %2126 = vmatpush.msra.mxu0 0.0
        %2127 = vmatpush.msra.mxu0 0.0
        %2128 = vmatpush.msra.mxu0 0.0
        %2129 = vmatpush.msra.mxu0 0.0
        %2130 = vmatpush.msra.mxu0 0.0
        %2131 = vmatpush.msra.mxu0 0.0
        %2132 = vmatpush.msra.mxu0 0.0
        %2133 = vmatpush.msra.mxu0 0.0
        %2134 = vmatpush.msra.mxu0 0.0
        %v2135 = vand.u32 %v640, 4294901760
        %2136 = vmatpush.msra.mxu0 %v2135
        %v2137 = vand.u32 %v1964, 4294901760
        %2138 = vmatmul.f32.gmra.mxu0 %v2137
        %v2139 = vpop.f32.mrf.mxu0
        %v2140 = vadd.f32 %v2114, %v2139
        %v2141 = vand.u32 %v1967, 4294901760
        %2142 = vmatmul.f32.gmra.mxu0 %v2141
        %v2143 = vpop.f32.mrf.mxu0
        %v2144 = vadd.f32 %v2118, %v2143
        %2145 = vdwg.mxu0
        %v2147 = vsel %vm647, %v1149, 0
        %v2150 = vsel %vm647, %v1301, 0
        %2152 = vmatpush.msra.mxu0 0.0
        %2153 = vmatpush.msra.mxu0 0.0
        %2154 = vmatpush.msra.mxu0 0.0
        %2155 = vmatpush.msra.mxu0 0.0
        %2156 = vmatpush.msra.mxu0 0.0
        %2157 = vmatpush.msra.mxu0 0.0
        %2158 = vmatpush.msra.mxu0 0.0
        %2159 = vmatpush.msra.mxu0 0.0
        %2160 = vmatpush.msra.mxu0 0.0
        %2161 = vmatpush.msra.mxu0 0.0
        %2162 = vmatpush.msra.mxu0 0.0
        %2163 = vmatpush.msra.mxu0 0.0
        %2164 = vmatpush.msra.mxu0 0.0
        %2165 = vmatpush.msra.mxu0 0.0
        %2166 = vmatpush.msra.mxu0 0.0
        %v2167 = vand.u32 %v639, 4294901760
        %2168 = vmatpush.msra.mxu0 %v2167
        %v2169 = vand.u32 %v2147, 4294901760
        %v2170 = vsub.f32 %v2147, %v2169
        %v2171 = vand.u32 %v2170, 4294901760
        %v2172 = vsub.f32 %v2170, %v2171
        %v2173 = vand.u32 %v2172, 4294901760
        %2174 = vmatmul.f32.gmra.mxu0 %v2173
        %v2175 = vpop.f32.mrf.mxu0
        %v2176 = vadd.f32 %v2140, %v2175
        %v2177 = vand.u32 %v2150, 4294901760
        %v2178 = vsub.f32 %v2150, %v2177
        %v2179 = vand.u32 %v2178, 4294901760
        %v2180 = vsub.f32 %v2178, %v2179
        %v2181 = vand.u32 %v2180, 4294901760
        %2182 = vmatmul.f32.gmra.mxu0 %v2181
        %v2183 = vpop.f32.mrf.mxu0
        %v2184 = vadd.f32 %v2144, %v2183
        %2185 = vdwg.mxu0
        %2186 = vmatpush.msra.mxu0 0.0
        %2187 = vmatpush.msra.mxu0 0.0
        %2188 = vmatpush.msra.mxu0 0.0
        %2189 = vmatpush.msra.mxu0 0.0
        %2190 = vmatpush.msra.mxu0 0.0
        %2191 = vmatpush.msra.mxu0 0.0
        %2192 = vmatpush.msra.mxu0 0.0
        %2193 = vmatpush.msra.mxu0 0.0
        %2194 = vmatpush.msra.mxu0 0.0
        %2195 = vmatpush.msra.mxu0 0.0
        %2196 = vmatpush.msra.mxu0 0.0
        %2197 = vmatpush.msra.mxu0 0.0
        %2198 = vmatpush.msra.mxu0 0.0
        %2199 = vmatpush.msra.mxu0 0.0
        %2200 = vmatpush.msra.mxu0 0.0
        %v2201 = vand.u32 %v639, 4294901760
        %v2202 = vsub.f32 %v639, %v2201
        %v2203 = vand.u32 %v2202, 4294901760
        %v2204 = vsub.f32 %v2202, %v2203
        %v2205 = vand.u32 %v2204, 4294901760
        %2206 = vmatpush.msra.mxu0 %v2205
        %v2207 = vand.u32 %v2147, 4294901760
        %2208 = vmatmul.f32.gmra.mxu0 %v2207
        %v2209 = vpop.f32.mrf.mxu0
        %v2210 = vadd.f32 %v2176, %v2209
        %v2211 = vand.u32 %v2150, 4294901760
        %2212 = vmatmul.f32.gmra.mxu0 %v2211
        %v2213 = vpop.f32.mrf.mxu0
        %v2214 = vadd.f32 %v2184, %v2213
        %2215 = vdwg.mxu0
        %2216 = vmatpush.msra.mxu0 0.0
        %2217 = vmatpush.msra.mxu0 0.0
        %2218 = vmatpush.msra.mxu0 0.0
        %2219 = vmatpush.msra.mxu0 0.0
        %2220 = vmatpush.msra.mxu0 0.0
        %2221 = vmatpush.msra.mxu0 0.0
        %2222 = vmatpush.msra.mxu0 0.0
        %2223 = vmatpush.msra.mxu0 0.0
        %2224 = vmatpush.msra.mxu0 0.0
        %2225 = vmatpush.msra.mxu0 0.0
        %2226 = vmatpush.msra.mxu0 0.0
        %2227 = vmatpush.msra.mxu0 0.0
        %2228 = vmatpush.msra.mxu0 0.0
        %2229 = vmatpush.msra.mxu0 0.0
        %2230 = vmatpush.msra.mxu0 0.0
        %v2231 = vand.u32 %v639, 4294901760
        %v2232 = vsub.f32 %v639, %v2231
        %2233 = vmatpush.msra.mxu0 %v2232
        %v2234 = vand.u32 %v2147, 4294901760
        %v2235 = vsub.f32 %v2147, %v2234
        %2236 = vmatmul.f32.gmra.mxu0 %v2235
        %v2237 = vpop.f32.mrf.mxu0
        %v2238 = vadd.f32 %v2210, %v2237
        %v2239 = vand.u32 %v2150, 4294901760
        %v2240 = vsub.f32 %v2150, %v2239
        %2241 = vmatmul.f32.gmra.mxu0 %v2240
        %v2242 = vpop.f32.mrf.mxu0
        %v2243 = vadd.f32 %v2214, %v2242
        %2244 = vdwg.mxu0
        %2245 = vmatpush.msra.mxu0 0.0
        %2246 = vmatpush.msra.mxu0 0.0
        %2247 = vmatpush.msra.mxu0 0.0
        %2248 = vmatpush.msra.mxu0 0.0
        %2249 = vmatpush.msra.mxu0 0.0
        %2250 = vmatpush.msra.mxu0 0.0
        %2251 = vmatpush.msra.mxu0 0.0
        %2252 = vmatpush.msra.mxu0 0.0
        %2253 = vmatpush.msra.mxu0 0.0
        %2254 = vmatpush.msra.mxu0 0.0
        %2255 = vmatpush.msra.mxu0 0.0
        %2256 = vmatpush.msra.mxu0 0.0
        %2257 = vmatpush.msra.mxu0 0.0
        %2258 = vmatpush.msra.mxu0 0.0
        %2259 = vmatpush.msra.mxu0 0.0
        %v2260 = vand.u32 %v639, 4294901760
        %2261 = vmatpush.msra.mxu0 %v2260
        %v2262 = vand.u32 %v2147, 4294901760
        %v2263 = vsub.f32 %v2147, %v2262
        %v2264 = vand.u32 %v2263, 4294901760
        %2265 = vmatmul.f32.gmra.mxu0 %v2264
        %v2266 = vpop.f32.mrf.mxu0
        %v2267 = vadd.f32 %v2238, %v2266
        %v2268 = vand.u32 %v2150, 4294901760
        %v2269 = vsub.f32 %v2150, %v2268
        %v2270 = vand.u32 %v2269, 4294901760
        %2271 = vmatmul.f32.gmra.mxu0 %v2270
        %v2272 = vpop.f32.mrf.mxu0
        %v2273 = vadd.f32 %v2243, %v2272
        %2274 = vdwg.mxu0
        %2275 = vmatpush.msra.mxu0 0.0
        %2276 = vmatpush.msra.mxu0 0.0
        %2277 = vmatpush.msra.mxu0 0.0
        %2278 = vmatpush.msra.mxu0 0.0
        %2279 = vmatpush.msra.mxu0 0.0
        %2280 = vmatpush.msra.mxu0 0.0
        %2281 = vmatpush.msra.mxu0 0.0
        %2282 = vmatpush.msra.mxu0 0.0
        %2283 = vmatpush.msra.mxu0 0.0
        %2284 = vmatpush.msra.mxu0 0.0
        %2285 = vmatpush.msra.mxu0 0.0
        %2286 = vmatpush.msra.mxu0 0.0
        %2287 = vmatpush.msra.mxu0 0.0
        %2288 = vmatpush.msra.mxu0 0.0
        %2289 = vmatpush.msra.mxu0 0.0
        %v2290 = vand.u32 %v639, 4294901760
        %v2291 = vsub.f32 %v639, %v2290
        %v2292 = vand.u32 %v2291, 4294901760
        %2293 = vmatpush.msra.mxu0 %v2292
        %v2294 = vand.u32 %v2147, 4294901760
        %2295 = vmatmul.f32.gmra.mxu0 %v2294
        %v2296 = vpop.f32.mrf.mxu0
        %v2297 = vadd.f32 %v2267, %v2296
        %v2298 = vand.u32 %v2150, 4294901760
        %2299 = vmatmul.f32.gmra.mxu0 %v2298
        %v2300 = vpop.f32.mrf.mxu0
        %v2301 = vadd.f32 %v2273, %v2300
        %2302 = vdwg.mxu0
        %2303 = vmatpush.msra.mxu0 0.0
        %2304 = vmatpush.msra.mxu0 0.0
        %2305 = vmatpush.msra.mxu0 0.0
        %2306 = vmatpush.msra.mxu0 0.0
        %2307 = vmatpush.msra.mxu0 0.0
        %2308 = vmatpush.msra.mxu0 0.0
        %2309 = vmatpush.msra.mxu0 0.0
        %2310 = vmatpush.msra.mxu0 0.0
        %2311 = vmatpush.msra.mxu0 0.0
        %2312 = vmatpush.msra.mxu0 0.0
        %2313 = vmatpush.msra.mxu0 0.0
        %2314 = vmatpush.msra.mxu0 0.0
        %2315 = vmatpush.msra.mxu0 0.0
        %2316 = vmatpush.msra.mxu0 0.0
        %2317 = vmatpush.msra.mxu0 0.0
        %v2318 = vand.u32 %v639, 4294901760
        %2319 = vmatpush.msra.mxu0 %v2318
        %v2320 = vand.u32 %v2147, 4294901760
        %2321 = vmatmul.f32.gmra.mxu0 %v2320
        %v2322 = vpop.f32.mrf.mxu0
        %v2323 = vadd.f32 %v2297, %v2322
        %v2324 = vand.u32 %v2150, 4294901760
        %2325 = vmatmul.f32.gmra.mxu0 %v2324
        %v2326 = vpop.f32.mrf.mxu0
        %v2327 = vadd.f32 %v2301, %v2326
        %2328 = vdwg.mxu0
        %2329 = vrot.lane.b32.xlu0 %v633, 112
        %v2330 = vpop.permute.xlu0 %2329
        %2331 = vrot.lane.b32.xlu0 %v633, 80
        %v2332 = vpop.permute.xlu0 %2331
        %v2333 = vsel %vm647, %v2330, 0
        %v2335 = vsel %vm647, %v2332, 0
        %2337 = vmatpush.xpose.msra.mxu0 0.0
        %2338 = vmatpush.xpose.msra.mxu0 0.0
        %2339 = vmatpush.xpose.msra.mxu0 0.0
        %2340 = vmatpush.xpose.msra.mxu0 0.0
        %2341 = vmatpush.xpose.msra.mxu0 0.0
        %2342 = vmatpush.xpose.msra.mxu0 0.0
        %2343 = vmatpush.xpose.msra.mxu0 0.0
        %2344 = vmatpush.xpose.msra.mxu0 0.0
        %2345 = vmatpush.xpose.msra.mxu0 0.0
        %2346 = vmatpush.xpose.msra.mxu0 0.0
        %2347 = vmatpush.xpose.msra.mxu0 0.0
        %2348 = vmatpush.xpose.msra.mxu0 0.0
        %2349 = vmatpush.xpose.msra.mxu0 0.0
        %2350 = vmatpush.xpose.msra.mxu0 0.0
        %2351 = vmatpush.xpose.msra.mxu0 0.0
        %v2352 = vand.u32 %v2335, 4294901760
        %2353 = vmatpush.xpose.msra.mxu0 %v2352
        %v2354 = vand.u32 %v2333, 4294901760
        %v2355 = vsub.f32 %v2333, %v2354
        %v2356 = vand.u32 %v2355, 4294901760
        %v2357 = vsub.f32 %v2355, %v2356
        %v2358 = vand.u32 %v2357, 4294901760
        %2359 = vmatmul.f32.gmra.mxu0 %v2358
        %v2360 = vpop.f32.mrf.mxu0
        %v2361 = vadd.f32 0.0, %v2360
        %2362 = vdwg.mxu0
        %2363 = vmatpush.xpose.msra.mxu0 0.0
        %2364 = vmatpush.xpose.msra.mxu0 0.0
        %2365 = vmatpush.xpose.msra.mxu0 0.0
        %2366 = vmatpush.xpose.msra.mxu0 0.0
        %2367 = vmatpush.xpose.msra.mxu0 0.0
        %2368 = vmatpush.xpose.msra.mxu0 0.0
        %2369 = vmatpush.xpose.msra.mxu0 0.0
        %2370 = vmatpush.xpose.msra.mxu0 0.0
        %2371 = vmatpush.xpose.msra.mxu0 0.0
        %2372 = vmatpush.xpose.msra.mxu0 0.0
        %2373 = vmatpush.xpose.msra.mxu0 0.0
        %2374 = vmatpush.xpose.msra.mxu0 0.0
        %2375 = vmatpush.xpose.msra.mxu0 0.0
        %2376 = vmatpush.xpose.msra.mxu0 0.0
        %2377 = vmatpush.xpose.msra.mxu0 0.0
        %v2378 = vand.u32 %v2335, 4294901760
        %v2379 = vsub.f32 %v2335, %v2378
        %v2380 = vand.u32 %v2379, 4294901760
        %v2381 = vsub.f32 %v2379, %v2380
        %v2382 = vand.u32 %v2381, 4294901760
        %2383 = vmatpush.xpose.msra.mxu0 %v2382
        %v2384 = vand.u32 %v2333, 4294901760
        %2385 = vmatmul.f32.gmra.mxu0 %v2384
        %v2386 = vpop.f32.mrf.mxu0
        %v2387 = vadd.f32 %v2361, %v2386
        %2388 = vdwg.mxu0
        %2389 = vmatpush.xpose.msra.mxu0 0.0
        %2390 = vmatpush.xpose.msra.mxu0 0.0
        %2391 = vmatpush.xpose.msra.mxu0 0.0
        %2392 = vmatpush.xpose.msra.mxu0 0.0
        %2393 = vmatpush.xpose.msra.mxu0 0.0
        %2394 = vmatpush.xpose.msra.mxu0 0.0
        %2395 = vmatpush.xpose.msra.mxu0 0.0
        %2396 = vmatpush.xpose.msra.mxu0 0.0
        %2397 = vmatpush.xpose.msra.mxu0 0.0
        %2398 = vmatpush.xpose.msra.mxu0 0.0
        %2399 = vmatpush.xpose.msra.mxu0 0.0
        %2400 = vmatpush.xpose.msra.mxu0 0.0
        %2401 = vmatpush.xpose.msra.mxu0 0.0
        %2402 = vmatpush.xpose.msra.mxu0 0.0
        %2403 = vmatpush.xpose.msra.mxu0 0.0
        %v2404 = vand.u32 %v2335, 4294901760
        %v2405 = vsub.f32 %v2335, %v2404
        %2406 = vmatpush.xpose.msra.mxu0 %v2405
        %v2407 = vand.u32 %v2333, 4294901760
        %v2408 = vsub.f32 %v2333, %v2407
        %2409 = vmatmul.f32.gmra.mxu0 %v2408
        %v2410 = vpop.f32.mrf.mxu0
        %v2411 = vadd.f32 %v2387, %v2410
        %2412 = vdwg.mxu0
        %2413 = vmatpush.xpose.msra.mxu0 0.0
        %2414 = vmatpush.xpose.msra.mxu0 0.0
        %2415 = vmatpush.xpose.msra.mxu0 0.0
        %2416 = vmatpush.xpose.msra.mxu0 0.0
        %2417 = vmatpush.xpose.msra.mxu0 0.0
        %2418 = vmatpush.xpose.msra.mxu0 0.0
        %2419 = vmatpush.xpose.msra.mxu0 0.0
        %2420 = vmatpush.xpose.msra.mxu0 0.0
        %2421 = vmatpush.xpose.msra.mxu0 0.0
        %2422 = vmatpush.xpose.msra.mxu0 0.0
        %2423 = vmatpush.xpose.msra.mxu0 0.0
        %2424 = vmatpush.xpose.msra.mxu0 0.0
        %2425 = vmatpush.xpose.msra.mxu0 0.0
        %2426 = vmatpush.xpose.msra.mxu0 0.0
        %2427 = vmatpush.xpose.msra.mxu0 0.0
        %v2428 = vand.u32 %v2335, 4294901760
        %2429 = vmatpush.xpose.msra.mxu0 %v2428
        %v2430 = vand.u32 %v2333, 4294901760
        %v2431 = vsub.f32 %v2333, %v2430
        %v2432 = vand.u32 %v2431, 4294901760
        %2433 = vmatmul.f32.gmra.mxu0 %v2432
        %v2434 = vpop.f32.mrf.mxu0
        %v2435 = vadd.f32 %v2411, %v2434
        %2436 = vdwg.mxu0
        %2437 = vmatpush.xpose.msra.mxu0 0.0
        %2438 = vmatpush.xpose.msra.mxu0 0.0
        %2439 = vmatpush.xpose.msra.mxu0 0.0
        %2440 = vmatpush.xpose.msra.mxu0 0.0
        %2441 = vmatpush.xpose.msra.mxu0 0.0
        %2442 = vmatpush.xpose.msra.mxu0 0.0
        %2443 = vmatpush.xpose.msra.mxu0 0.0
        %2444 = vmatpush.xpose.msra.mxu0 0.0
        %2445 = vmatpush.xpose.msra.mxu0 0.0
        %2446 = vmatpush.xpose.msra.mxu0 0.0
        %2447 = vmatpush.xpose.msra.mxu0 0.0
        %2448 = vmatpush.xpose.msra.mxu0 0.0
        %2449 = vmatpush.xpose.msra.mxu0 0.0
        %2450 = vmatpush.xpose.msra.mxu0 0.0
        %2451 = vmatpush.xpose.msra.mxu0 0.0
        %v2452 = vand.u32 %v2335, 4294901760
        %v2453 = vsub.f32 %v2335, %v2452
        %v2454 = vand.u32 %v2453, 4294901760
        %2455 = vmatpush.xpose.msra.mxu0 %v2454
        %v2456 = vand.u32 %v2333, 4294901760
        %2457 = vmatmul.f32.gmra.mxu0 %v2456
        %v2458 = vpop.f32.mrf.mxu0
        %v2459 = vadd.f32 %v2435, %v2458
        %2460 = vdwg.mxu0
        %2461 = vmatpush.xpose.msra.mxu0 0.0
        %2462 = vmatpush.xpose.msra.mxu0 0.0
        %2463 = vmatpush.xpose.msra.mxu0 0.0
        %2464 = vmatpush.xpose.msra.mxu0 0.0
        %2465 = vmatpush.xpose.msra.mxu0 0.0
        %2466 = vmatpush.xpose.msra.mxu0 0.0
        %2467 = vmatpush.xpose.msra.mxu0 0.0
        %2468 = vmatpush.xpose.msra.mxu0 0.0
        %2469 = vmatpush.xpose.msra.mxu0 0.0
        %2470 = vmatpush.xpose.msra.mxu0 0.0
        %2471 = vmatpush.xpose.msra.mxu0 0.0
        %2472 = vmatpush.xpose.msra.mxu0 0.0
        %2473 = vmatpush.xpose.msra.mxu0 0.0
        %2474 = vmatpush.xpose.msra.mxu0 0.0
        %2475 = vmatpush.xpose.msra.mxu0 0.0
        %v2476 = vand.u32 %v2335, 4294901760
        %2477 = vmatpush.xpose.msra.mxu0 %v2476
        %v2478 = vand.u32 %v2333, 4294901760
        %2479 = vmatmul.f32.gmra.mxu0 %v2478
        %v2480 = vpop.f32.mrf.mxu0
        %v2481 = vadd.f32 %v2459, %v2480
        %2482 = vdwg.mxu0
        %2483 = vrot.lane.b32.xlu0 %v637, 112
        %v2484 = vpop.permute.xlu0 %2483
        %2485 = vrot.lane.b32.xlu0 %v637, 80
        %v2486 = vpop.permute.xlu0 %2485
        %v2487 = vsel %vm647, %v2484, 0
        %v2489 = vsel %vm647, %v2486, 0
        %2491 = vmatpush.xpose.msra.mxu0 0.0
        %2492 = vmatpush.xpose.msra.mxu0 0.0
        %2493 = vmatpush.xpose.msra.mxu0 0.0
        %2494 = vmatpush.xpose.msra.mxu0 0.0
        %2495 = vmatpush.xpose.msra.mxu0 0.0
        %2496 = vmatpush.xpose.msra.mxu0 0.0
        %2497 = vmatpush.xpose.msra.mxu0 0.0
        %2498 = vmatpush.xpose.msra.mxu0 0.0
        %2499 = vmatpush.xpose.msra.mxu0 0.0
        %2500 = vmatpush.xpose.msra.mxu0 0.0
        %2501 = vmatpush.xpose.msra.mxu0 0.0
        %2502 = vmatpush.xpose.msra.mxu0 0.0
        %2503 = vmatpush.xpose.msra.mxu0 0.0
        %2504 = vmatpush.xpose.msra.mxu0 0.0
        %2505 = vmatpush.xpose.msra.mxu0 0.0
        %v2506 = vand.u32 %v2489, 4294901760
        %2507 = vmatpush.xpose.msra.mxu0 %v2506
        %v2508 = vand.u32 %v2487, 4294901760
        %v2509 = vsub.f32 %v2487, %v2508
        %v2510 = vand.u32 %v2509, 4294901760
        %v2511 = vsub.f32 %v2509, %v2510
        %v2512 = vand.u32 %v2511, 4294901760
        %2513 = vmatmul.f32.gmra.mxu0 %v2512
        %v2514 = vpop.f32.mrf.mxu0
        %v2515 = vadd.f32 0.0, %v2514
        %2516 = vdwg.mxu0
        %2517 = vmatpush.xpose.msra.mxu0 0.0
        %2518 = vmatpush.xpose.msra.mxu0 0.0
        %2519 = vmatpush.xpose.msra.mxu0 0.0
        %2520 = vmatpush.xpose.msra.mxu0 0.0
        %2521 = vmatpush.xpose.msra.mxu0 0.0
        %2522 = vmatpush.xpose.msra.mxu0 0.0
        %2523 = vmatpush.xpose.msra.mxu0 0.0
        %2524 = vmatpush.xpose.msra.mxu0 0.0
        %2525 = vmatpush.xpose.msra.mxu0 0.0
        %2526 = vmatpush.xpose.msra.mxu0 0.0
        %2527 = vmatpush.xpose.msra.mxu0 0.0
        %2528 = vmatpush.xpose.msra.mxu0 0.0
        %2529 = vmatpush.xpose.msra.mxu0 0.0
        %2530 = vmatpush.xpose.msra.mxu0 0.0
        %2531 = vmatpush.xpose.msra.mxu0 0.0
        %v2532 = vand.u32 %v2489, 4294901760
        %v2533 = vsub.f32 %v2489, %v2532
        %v2534 = vand.u32 %v2533, 4294901760
        %v2535 = vsub.f32 %v2533, %v2534
        %v2536 = vand.u32 %v2535, 4294901760
        %2537 = vmatpush.xpose.msra.mxu0 %v2536
        %v2538 = vand.u32 %v2487, 4294901760
        %2539 = vmatmul.f32.gmra.mxu0 %v2538
        %v2540 = vpop.f32.mrf.mxu0
        %v2541 = vadd.f32 %v2515, %v2540
        %2542 = vdwg.mxu0
        %2543 = vmatpush.xpose.msra.mxu0 0.0
        %2544 = vmatpush.xpose.msra.mxu0 0.0
        %2545 = vmatpush.xpose.msra.mxu0 0.0
        %2546 = vmatpush.xpose.msra.mxu0 0.0
        %2547 = vmatpush.xpose.msra.mxu0 0.0
        %2548 = vmatpush.xpose.msra.mxu0 0.0
        %2549 = vmatpush.xpose.msra.mxu0 0.0
        %2550 = vmatpush.xpose.msra.mxu0 0.0
        %2551 = vmatpush.xpose.msra.mxu0 0.0
        %2552 = vmatpush.xpose.msra.mxu0 0.0
        %2553 = vmatpush.xpose.msra.mxu0 0.0
        %2554 = vmatpush.xpose.msra.mxu0 0.0
        %2555 = vmatpush.xpose.msra.mxu0 0.0
        %2556 = vmatpush.xpose.msra.mxu0 0.0
        %2557 = vmatpush.xpose.msra.mxu0 0.0
        %v2558 = vand.u32 %v2489, 4294901760
        %v2559 = vsub.f32 %v2489, %v2558
        %2560 = vmatpush.xpose.msra.mxu0 %v2559
        %v2561 = vand.u32 %v2487, 4294901760
        %v2562 = vsub.f32 %v2487, %v2561
        %2563 = vmatmul.f32.gmra.mxu0 %v2562
        %v2564 = vpop.f32.mrf.mxu0
        %v2565 = vadd.f32 %v2541, %v2564
        %2566 = vdwg.mxu0
        %2567 = vmatpush.xpose.msra.mxu0 0.0
        %2568 = vmatpush.xpose.msra.mxu0 0.0
        %2569 = vmatpush.xpose.msra.mxu0 0.0
        %2570 = vmatpush.xpose.msra.mxu0 0.0
        %2571 = vmatpush.xpose.msra.mxu0 0.0
        %2572 = vmatpush.xpose.msra.mxu0 0.0
        %2573 = vmatpush.xpose.msra.mxu0 0.0
        %2574 = vmatpush.xpose.msra.mxu0 0.0
        %2575 = vmatpush.xpose.msra.mxu0 0.0
        %2576 = vmatpush.xpose.msra.mxu0 0.0
        %2577 = vmatpush.xpose.msra.mxu0 0.0
        %2578 = vmatpush.xpose.msra.mxu0 0.0
        %2579 = vmatpush.xpose.msra.mxu0 0.0
        %2580 = vmatpush.xpose.msra.mxu0 0.0
        %2581 = vmatpush.xpose.msra.mxu0 0.0
        %v2582 = vand.u32 %v2489, 4294901760
        %2583 = vmatpush.xpose.msra.mxu0 %v2582
        %v2584 = vand.u32 %v2487, 4294901760
        %v2585 = vsub.f32 %v2487, %v2584
        %v2586 = vand.u32 %v2585, 4294901760
        %2587 = vmatmul.f32.gmra.mxu0 %v2586
        %v2588 = vpop.f32.mrf.mxu0
        %v2589 = vadd.f32 %v2565, %v2588
        %2590 = vdwg.mxu0
        %2591 = vmatpush.xpose.msra.mxu0 0.0
        %2592 = vmatpush.xpose.msra.mxu0 0.0
        %2593 = vmatpush.xpose.msra.mxu0 0.0
        %2594 = vmatpush.xpose.msra.mxu0 0.0
        %2595 = vmatpush.xpose.msra.mxu0 0.0
        %2596 = vmatpush.xpose.msra.mxu0 0.0
        %2597 = vmatpush.xpose.msra.mxu0 0.0
        %2598 = vmatpush.xpose.msra.mxu0 0.0
        %2599 = vmatpush.xpose.msra.mxu0 0.0
        %2600 = vmatpush.xpose.msra.mxu0 0.0
        %2601 = vmatpush.xpose.msra.mxu0 0.0
        %2602 = vmatpush.xpose.msra.mxu0 0.0
        %2603 = vmatpush.xpose.msra.mxu0 0.0
        %2604 = vmatpush.xpose.msra.mxu0 0.0
        %2605 = vmatpush.xpose.msra.mxu0 0.0
        %v2606 = vand.u32 %v2489, 4294901760
        %v2607 = vsub.f32 %v2489, %v2606
        %v2608 = vand.u32 %v2607, 4294901760
        %2609 = vmatpush.xpose.msra.mxu0 %v2608
        %v2610 = vand.u32 %v2487, 4294901760
        %2611 = vmatmul.f32.gmra.mxu0 %v2610
        %v2612 = vpop.f32.mrf.mxu0
        %v2613 = vadd.f32 %v2589, %v2612
        %2614 = vdwg.mxu0
        %2615 = vmatpush.xpose.msra.mxu0 0.0
        %2616 = vmatpush.xpose.msra.mxu0 0.0
        %2617 = vmatpush.xpose.msra.mxu0 0.0
        %2618 = vmatpush.xpose.msra.mxu0 0.0
        %2619 = vmatpush.xpose.msra.mxu0 0.0
        %2620 = vmatpush.xpose.msra.mxu0 0.0
        %2621 = vmatpush.xpose.msra.mxu0 0.0
        %2622 = vmatpush.xpose.msra.mxu0 0.0
        %2623 = vmatpush.xpose.msra.mxu0 0.0
        %2624 = vmatpush.xpose.msra.mxu0 0.0
        %2625 = vmatpush.xpose.msra.mxu0 0.0
        %2626 = vmatpush.xpose.msra.mxu0 0.0
        %2627 = vmatpush.xpose.msra.mxu0 0.0
        %2628 = vmatpush.xpose.msra.mxu0 0.0
        %2629 = vmatpush.xpose.msra.mxu0 0.0
        %v2630 = vand.u32 %v2489, 4294901760
        %2631 = vmatpush.xpose.msra.mxu0 %v2630
        %v2632 = vand.u32 %v2487, 4294901760
        %2633 = vmatmul.f32.gmra.mxu0 %v2632
        %v2634 = vpop.f32.mrf.mxu0
        %v2635 = vadd.f32 %v2613, %v2634
        %2636 = vdwg.mxu0
        %v2637 = vsel %vm647, %v2481, -inf
        %2638 = vmax.xlane.f32.xlu0 %v2637
        %v2639 = vpop.xlane.xlu0 %2638
        %v2640 = vsel %vm647, %v2635, -inf
        %2641 = vmax.xlane.f32.xlu0 %v2640
        %v2642 = vpop.xlane.xlu0 %2641
        %v2643 = vsub.f32 %v2481, %v2639
        %v2644 = vsub.f32 %v2635, %v2642
        %v2645 = vmul.f32 %v2643, 1.442695
        %v2646 = vpow.pop %v2645
        %v2647 = vmul.f32 %v2644, 1.442695
        %v2648 = vpow.pop %v2647
        %v2649 = vsel %vm647, %v2646, 0.0
        %2650 = vadd.xlane.f32.xlu0 %v2649
        %v2651 = vpop.xlane.xlu0 %2650
        %v2652 = vsel %vm647, %v2648, 0.0
        %2653 = vadd.xlane.f32.xlu0 %v2652
        %v2654 = vpop.xlane.xlu0 %2653
        %v2655 = vrcp.pop %v2651
        %v2656 = vmul.f32 %v2651, %v2655
        %v2657 = vsub.f32 1.0, %v2656
        %v2658 = vmul.f32 %v2655, %v2657
        %v2659 = vadd.f32 %v2655, %v2658
        %vm2660 = vweird.f32 %v2651
        %vm2661 = vweird.f32 %v2655
        %vm2662 = vmor %vm2660, %vm2661
        %v2663 = vsel %vm2662, %v2655, %v2659
        %v2664 = vand.u32 2147483647, %v2651
        %vm2665 = vcmp.eq.f32.partialorder %v2664, 8.507059e+37
        %v2666 = vand.u32 %v2651, 2147483648
        %v2667 = vor.u32 1.1754944e-38, %v2666
        %v2668 = vsel %vm2665, %v2667, %v2663
        %v2669 = vrcp.pop %v2654
        %v2670 = vmul.f32 %v2654, %v2669
        %v2671 = vsub.f32 1.0, %v2670
        %v2672 = vmul.f32 %v2669, %v2671
        %v2673 = vadd.f32 %v2669, %v2672
        %vm2674 = vweird.f32 %v2654
        %vm2675 = vweird.f32 %v2669
        %vm2676 = vmor %vm2674, %vm2675
        %v2677 = vsel %vm2676, %v2669, %v2673
        %v2678 = vand.u32 2147483647, %v2654
        %vm2679 = vcmp.eq.f32.partialorder %v2678, 8.507059e+37
        %v2680 = vand.u32 %v2654, 2147483648
        %v2681 = vor.u32 1.1754944e-38, %v2680
        %v2682 = vsel %vm2679, %v2681, %v2677
        %v2683 = vmul.f32 %v2646, %v2668
        %v2684 = vmul.f32 %v2648, %v2682
        %2685 = vrot.lane.b32.xlu0 %v633, 48
        %v2686 = vpop.permute.xlu0 %2685
        %v2689 = vsel %vm647, %v2683, 0
        %2691 = vmatpush.msra.mxu0 0.0
        %2692 = vmatpush.msra.mxu0 0.0
        %2693 = vmatpush.msra.mxu0 0.0
        %2694 = vmatpush.msra.mxu0 0.0
        %2695 = vmatpush.msra.mxu0 0.0
        %2696 = vmatpush.msra.mxu0 0.0
        %2697 = vmatpush.msra.mxu0 0.0
        %2698 = vmatpush.msra.mxu0 0.0
        %2699 = vmatpush.msra.mxu0 0.0
        %2700 = vmatpush.msra.mxu0 0.0
        %2701 = vmatpush.msra.mxu0 0.0
        %2702 = vmatpush.msra.mxu0 0.0
        %2703 = vmatpush.msra.mxu0 0.0
        %2704 = vmatpush.msra.mxu0 0.0
        %2705 = vmatpush.msra.mxu0 0.0
        %v2706 = vand.u32 %v2686, 4294901760
        %2707 = vmatpush.msra.mxu0 %v2706
        %v2708 = vand.u32 %v2689, 4294901760
        %v2709 = vsub.f32 %v2689, %v2708
        %v2710 = vand.u32 %v2709, 4294901760
        %v2711 = vsub.f32 %v2709, %v2710
        %v2712 = vand.u32 %v2711, 4294901760
        %2713 = vmatmul.f32.gmra.mxu0 %v2712
        %v2714 = vpop.f32.mrf.mxu0
        %v2715 = vadd.f32 0.0, %v2714
        %2716 = vdwg.mxu0
        %2717 = vmatpush.msra.mxu0 0.0
        %2718 = vmatpush.msra.mxu0 0.0
        %2719 = vmatpush.msra.mxu0 0.0
        %2720 = vmatpush.msra.mxu0 0.0
        %2721 = vmatpush.msra.mxu0 0.0
        %2722 = vmatpush.msra.mxu0 0.0
        %2723 = vmatpush.msra.mxu0 0.0
        %2724 = vmatpush.msra.mxu0 0.0
        %2725 = vmatpush.msra.mxu0 0.0
        %2726 = vmatpush.msra.mxu0 0.0
        %2727 = vmatpush.msra.mxu0 0.0
        %2728 = vmatpush.msra.mxu0 0.0
        %2729 = vmatpush.msra.mxu0 0.0
        %2730 = vmatpush.msra.mxu0 0.0
        %2731 = vmatpush.msra.mxu0 0.0
        %v2732 = vand.u32 %v2686, 4294901760
        %v2733 = vsub.f32 %v2686, %v2732
        %v2734 = vand.u32 %v2733, 4294901760
        %v2735 = vsub.f32 %v2733, %v2734
        %v2736 = vand.u32 %v2735, 4294901760
        %2737 = vmatpush.msra.mxu0 %v2736
        %v2738 = vand.u32 %v2689, 4294901760
        %2739 = vmatmul.f32.gmra.mxu0 %v2738
        %v2740 = vpop.f32.mrf.mxu0
        %v2741 = vadd.f32 %v2715, %v2740
        %2742 = vdwg.mxu0
        %2743 = vmatpush.msra.mxu0 0.0
        %2744 = vmatpush.msra.mxu0 0.0
        %2745 = vmatpush.msra.mxu0 0.0
        %2746 = vmatpush.msra.mxu0 0.0
        %2747 = vmatpush.msra.mxu0 0.0
        %2748 = vmatpush.msra.mxu0 0.0
        %2749 = vmatpush.msra.mxu0 0.0
        %2750 = vmatpush.msra.mxu0 0.0
        %2751 = vmatpush.msra.mxu0 0.0
        %2752 = vmatpush.msra.mxu0 0.0
        %2753 = vmatpush.msra.mxu0 0.0
        %2754 = vmatpush.msra.mxu0 0.0
        %2755 = vmatpush.msra.mxu0 0.0
        %2756 = vmatpush.msra.mxu0 0.0
        %2757 = vmatpush.msra.mxu0 0.0
        %v2758 = vand.u32 %v2686, 4294901760
        %v2759 = vsub.f32 %v2686, %v2758
        %2760 = vmatpush.msra.mxu0 %v2759
        %v2761 = vand.u32 %v2689, 4294901760
        %v2762 = vsub.f32 %v2689, %v2761
        %2763 = vmatmul.f32.gmra.mxu0 %v2762
        %v2764 = vpop.f32.mrf.mxu0
        %v2765 = vadd.f32 %v2741, %v2764
        %2766 = vdwg.mxu0
        %2767 = vmatpush.msra.mxu0 0.0
        %2768 = vmatpush.msra.mxu0 0.0
        %2769 = vmatpush.msra.mxu0 0.0
        %2770 = vmatpush.msra.mxu0 0.0
        %2771 = vmatpush.msra.mxu0 0.0
        %2772 = vmatpush.msra.mxu0 0.0
        %2773 = vmatpush.msra.mxu0 0.0
        %2774 = vmatpush.msra.mxu0 0.0
        %2775 = vmatpush.msra.mxu0 0.0
        %2776 = vmatpush.msra.mxu0 0.0
        %2777 = vmatpush.msra.mxu0 0.0
        %2778 = vmatpush.msra.mxu0 0.0
        %2779 = vmatpush.msra.mxu0 0.0
        %2780 = vmatpush.msra.mxu0 0.0
        %2781 = vmatpush.msra.mxu0 0.0
        %v2782 = vand.u32 %v2686, 4294901760
        %2783 = vmatpush.msra.mxu0 %v2782
        %v2784 = vand.u32 %v2689, 4294901760
        %v2785 = vsub.f32 %v2689, %v2784
        %v2786 = vand.u32 %v2785, 4294901760
        %2787 = vmatmul.f32.gmra.mxu0 %v2786
        %v2788 = vpop.f32.mrf.mxu0
        %v2789 = vadd.f32 %v2765, %v2788
        %2790 = vdwg.mxu0
        %2791 = vmatpush.msra.mxu0 0.0
        %2792 = vmatpush.msra.mxu0 0.0
        %2793 = vmatpush.msra.mxu0 0.0
        %2794 = vmatpush.msra.mxu0 0.0
        %2795 = vmatpush.msra.mxu0 0.0
        %2796 = vmatpush.msra.mxu0 0.0
        %2797 = vmatpush.msra.mxu0 0.0
        %2798 = vmatpush.msra.mxu0 0.0
        %2799 = vmatpush.msra.mxu0 0.0
        %2800 = vmatpush.msra.mxu0 0.0
        %2801 = vmatpush.msra.mxu0 0.0
        %2802 = vmatpush.msra.mxu0 0.0
        %2803 = vmatpush.msra.mxu0 0.0
        %2804 = vmatpush.msra.mxu0 0.0
        %2805 = vmatpush.msra.mxu0 0.0
        %v2806 = vand.u32 %v2686, 4294901760
        %v2807 = vsub.f32 %v2686, %v2806
        %v2808 = vand.u32 %v2807, 4294901760
        %2809 = vmatpush.msra.mxu0 %v2808
        %v2810 = vand.u32 %v2689, 4294901760
        %2811 = vmatmul.f32.gmra.mxu0 %v2810
        %v2812 = vpop.f32.mrf.mxu0
        %v2813 = vadd.f32 %v2789, %v2812
        %2814 = vdwg.mxu0
        %2815 = vmatpush.msra.mxu0 0.0
        %2816 = vmatpush.msra.mxu0 0.0
        %2817 = vmatpush.msra.mxu0 0.0
        %2818 = vmatpush.msra.mxu0 0.0
        %2819 = vmatpush.msra.mxu0 0.0
        %2820 = vmatpush.msra.mxu0 0.0
        %2821 = vmatpush.msra.mxu0 0.0
        %2822 = vmatpush.msra.mxu0 0.0
        %2823 = vmatpush.msra.mxu0 0.0
        %2824 = vmatpush.msra.mxu0 0.0
        %2825 = vmatpush.msra.mxu0 0.0
        %2826 = vmatpush.msra.mxu0 0.0
        %2827 = vmatpush.msra.mxu0 0.0
        %2828 = vmatpush.msra.mxu0 0.0
        %2829 = vmatpush.msra.mxu0 0.0
        %v2830 = vand.u32 %v2686, 4294901760
        %2831 = vmatpush.msra.mxu0 %v2830
        %v2832 = vand.u32 %v2689, 4294901760
        %2833 = vmatmul.f32.gmra.mxu0 %v2832
        %v2834 = vpop.f32.mrf.mxu0
        %v2835 = vadd.f32 %v2813, %v2834
        %2836 = vdwg.mxu0
        %2837 = vrot.lane.b32.xlu0 %v637, 48
        %v2838 = vpop.permute.xlu0 %2837
        %v2841 = vsel %vm647, %v2684, 0
        %2843 = vmatpush.msra.mxu0 0.0
        %2844 = vmatpush.msra.mxu0 0.0
        %2845 = vmatpush.msra.mxu0 0.0
        %2846 = vmatpush.msra.mxu0 0.0
        %2847 = vmatpush.msra.mxu0 0.0
        %2848 = vmatpush.msra.mxu0 0.0
        %2849 = vmatpush.msra.mxu0 0.0
        %2850 = vmatpush.msra.mxu0 0.0
        %2851 = vmatpush.msra.mxu0 0.0
        %2852 = vmatpush.msra.mxu0 0.0
        %2853 = vmatpush.msra.mxu0 0.0
        %2854 = vmatpush.msra.mxu0 0.0
        %2855 = vmatpush.msra.mxu0 0.0
        %2856 = vmatpush.msra.mxu0 0.0
        %2857 = vmatpush.msra.mxu0 0.0
        %v2858 = vand.u32 %v2838, 4294901760
        %2859 = vmatpush.msra.mxu0 %v2858
        %v2860 = vand.u32 %v2841, 4294901760
        %v2861 = vsub.f32 %v2841, %v2860
        %v2862 = vand.u32 %v2861, 4294901760
        %v2863 = vsub.f32 %v2861, %v2862
        %v2864 = vand.u32 %v2863, 4294901760
        %2865 = vmatmul.f32.gmra.mxu0 %v2864
        %v2866 = vpop.f32.mrf.mxu0
        %v2867 = vadd.f32 0.0, %v2866
        %2868 = vdwg.mxu0
        %2869 = vmatpush.msra.mxu0 0.0
        %2870 = vmatpush.msra.mxu0 0.0
        %2871 = vmatpush.msra.mxu0 0.0
        %2872 = vmatpush.msra.mxu0 0.0
        %2873 = vmatpush.msra.mxu0 0.0
        %2874 = vmatpush.msra.mxu0 0.0
        %2875 = vmatpush.msra.mxu0 0.0
        %2876 = vmatpush.msra.mxu0 0.0
        %2877 = vmatpush.msra.mxu0 0.0
        %2878 = vmatpush.msra.mxu0 0.0
        %2879 = vmatpush.msra.mxu0 0.0
        %2880 = vmatpush.msra.mxu0 0.0
        %2881 = vmatpush.msra.mxu0 0.0
        %2882 = vmatpush.msra.mxu0 0.0
        %2883 = vmatpush.msra.mxu0 0.0
        %v2884 = vand.u32 %v2838, 4294901760
        %v2885 = vsub.f32 %v2838, %v2884
        %v2886 = vand.u32 %v2885, 4294901760
        %v2887 = vsub.f32 %v2885, %v2886
        %v2888 = vand.u32 %v2887, 4294901760
        %2889 = vmatpush.msra.mxu0 %v2888
        %v2890 = vand.u32 %v2841, 4294901760
        %2891 = vmatmul.f32.gmra.mxu0 %v2890
        %v2892 = vpop.f32.mrf.mxu0
        %v2893 = vadd.f32 %v2867, %v2892
        %2894 = vdwg.mxu0
        %2895 = vmatpush.msra.mxu0 0.0
        %2896 = vmatpush.msra.mxu0 0.0
        %2897 = vmatpush.msra.mxu0 0.0
        %2898 = vmatpush.msra.mxu0 0.0
        %2899 = vmatpush.msra.mxu0 0.0
        %2900 = vmatpush.msra.mxu0 0.0
        %2901 = vmatpush.msra.mxu0 0.0
        %2902 = vmatpush.msra.mxu0 0.0
        %2903 = vmatpush.msra.mxu0 0.0
        %2904 = vmatpush.msra.mxu0 0.0
        %2905 = vmatpush.msra.mxu0 0.0
        %2906 = vmatpush.msra.mxu0 0.0
        %2907 = vmatpush.msra.mxu0 0.0
        %2908 = vmatpush.msra.mxu0 0.0
        %2909 = vmatpush.msra.mxu0 0.0
        %v2910 = vand.u32 %v2838, 4294901760
        %v2911 = vsub.f32 %v2838, %v2910
        %2912 = vmatpush.msra.mxu0 %v2911
        %v2913 = vand.u32 %v2841, 4294901760
        %v2914 = vsub.f32 %v2841, %v2913
        %2915 = vmatmul.f32.gmra.mxu0 %v2914
        %v2916 = vpop.f32.mrf.mxu0
        %v2917 = vadd.f32 %v2893, %v2916
        %2918 = vdwg.mxu0
        %2919 = vmatpush.msra.mxu0 0.0
        %2920 = vmatpush.msra.mxu0 0.0
        %2921 = vmatpush.msra.mxu0 0.0
        %2922 = vmatpush.msra.mxu0 0.0
        %2923 = vmatpush.msra.mxu0 0.0
        %2924 = vmatpush.msra.mxu0 0.0
        %2925 = vmatpush.msra.mxu0 0.0
        %2926 = vmatpush.msra.mxu0 0.0
        %2927 = vmatpush.msra.mxu0 0.0
        %2928 = vmatpush.msra.mxu0 0.0
        %2929 = vmatpush.msra.mxu0 0.0
        %2930 = vmatpush.msra.mxu0 0.0
        %2931 = vmatpush.msra.mxu0 0.0
        %2932 = vmatpush.msra.mxu0 0.0
        %2933 = vmatpush.msra.mxu0 0.0
        %v2934 = vand.u32 %v2838, 4294901760
        %2935 = vmatpush.msra.mxu0 %v2934
        %v2936 = vand.u32 %v2841, 4294901760
        %v2937 = vsub.f32 %v2841, %v2936
        %v2938 = vand.u32 %v2937, 4294901760
        %2939 = vmatmul.f32.gmra.mxu0 %v2938
        %v2940 = vpop.f32.mrf.mxu0
        %v2941 = vadd.f32 %v2917, %v2940
        %2942 = vdwg.mxu0
        %2943 = vmatpush.msra.mxu0 0.0
        %2944 = vmatpush.msra.mxu0 0.0
        %2945 = vmatpush.msra.mxu0 0.0
        %2946 = vmatpush.msra.mxu0 0.0
        %2947 = vmatpush.msra.mxu0 0.0
        %2948 = vmatpush.msra.mxu0 0.0
        %2949 = vmatpush.msra.mxu0 0.0
        %2950 = vmatpush.msra.mxu0 0.0
        %2951 = vmatpush.msra.mxu0 0.0
        %2952 = vmatpush.msra.mxu0 0.0
        %2953 = vmatpush.msra.mxu0 0.0
        %2954 = vmatpush.msra.mxu0 0.0
        %2955 = vmatpush.msra.mxu0 0.0
        %2956 = vmatpush.msra.mxu0 0.0
        %2957 = vmatpush.msra.mxu0 0.0
        %v2958 = vand.u32 %v2838, 4294901760
        %v2959 = vsub.f32 %v2838, %v2958
        %v2960 = vand.u32 %v2959, 4294901760
        %2961 = vmatpush.msra.mxu0 %v2960
        %v2962 = vand.u32 %v2841, 4294901760
        %2963 = vmatmul.f32.gmra.mxu0 %v2962
        %v2964 = vpop.f32.mrf.mxu0
        %v2965 = vadd.f32 %v2941, %v2964
        %2966 = vdwg.mxu0
        %2967 = vmatpush.msra.mxu0 0.0
        %2968 = vmatpush.msra.mxu0 0.0
        %2969 = vmatpush.msra.mxu0 0.0
        %2970 = vmatpush.msra.mxu0 0.0
        %2971 = vmatpush.msra.mxu0 0.0
        %2972 = vmatpush.msra.mxu0 0.0
        %2973 = vmatpush.msra.mxu0 0.0
        %2974 = vmatpush.msra.mxu0 0.0
        %2975 = vmatpush.msra.mxu0 0.0
        %2976 = vmatpush.msra.mxu0 0.0
        %2977 = vmatpush.msra.mxu0 0.0
        %2978 = vmatpush.msra.mxu0 0.0
        %2979 = vmatpush.msra.mxu0 0.0
        %2980 = vmatpush.msra.mxu0 0.0
        %2981 = vmatpush.msra.mxu0 0.0
        %v2982 = vand.u32 %v2838, 4294901760
        %2983 = vmatpush.msra.mxu0 %v2982
        %v2984 = vand.u32 %v2841, 4294901760
        %2985 = vmatmul.f32.gmra.mxu0 %v2984
        %v2986 = vpop.f32.mrf.mxu0
        %v2987 = vadd.f32 %v2965, %v2986
        %2988 = vdwg.mxu0
        %v2990 = vsel %vm647, %v2835, 0
        %v2993 = vsel %vm647, %v2987, 0
        %2995 = vmatpush.msra.mxu0 0.0
        %2996 = vmatpush.msra.mxu0 0.0
        %2997 = vmatpush.msra.mxu0 0.0
        %2998 = vmatpush.msra.mxu0 0.0
        %2999 = vmatpush.msra.mxu0 0.0
        %3000 = vmatpush.msra.mxu0 0.0
        %3001 = vmatpush.msra.mxu0 0.0
        %3002 = vmatpush.msra.mxu0 0.0
        %3003 = vmatpush.msra.mxu0 0.0
        %3004 = vmatpush.msra.mxu0 0.0
        %3005 = vmatpush.msra.mxu0 0.0
        %3006 = vmatpush.msra.mxu0 0.0
        %3007 = vmatpush.msra.mxu0 0.0
        %3008 = vmatpush.msra.mxu0 0.0
        %3009 = vmatpush.msra.mxu0 0.0
        %v3010 = vand.u32 %v641, 4294901760
        %3011 = vmatpush.msra.mxu0 %v3010
        %v3012 = vand.u32 %v2990, 4294901760
        %v3013 = vsub.f32 %v2990, %v3012
        %v3014 = vand.u32 %v3013, 4294901760
        %v3015 = vsub.f32 %v3013, %v3014
        %v3016 = vand.u32 %v3015, 4294901760
        %3017 = vmatmul.f32.gmra.mxu0 %v3016
        %v3018 = vpop.f32.mrf.mxu0
        %v3019 = vadd.f32 0.0, %v3018
        %v3020 = vand.u32 %v2993, 4294901760
        %v3021 = vsub.f32 %v2993, %v3020
        %v3022 = vand.u32 %v3021, 4294901760
        %v3023 = vsub.f32 %v3021, %v3022
        %v3024 = vand.u32 %v3023, 4294901760
        %3025 = vmatmul.f32.gmra.mxu0 %v3024
        %v3026 = vpop.f32.mrf.mxu0
        %v3027 = vadd.f32 0.0, %v3026
        %3028 = vdwg.mxu0
        %3029 = vmatpush.msra.mxu0 0.0
        %3030 = vmatpush.msra.mxu0 0.0
        %3031 = vmatpush.msra.mxu0 0.0
        %3032 = vmatpush.msra.mxu0 0.0
        %3033 = vmatpush.msra.mxu0 0.0
        %3034 = vmatpush.msra.mxu0 0.0
        %3035 = vmatpush.msra.mxu0 0.0
        %3036 = vmatpush.msra.mxu0 0.0
        %3037 = vmatpush.msra.mxu0 0.0
        %3038 = vmatpush.msra.mxu0 0.0
        %3039 = vmatpush.msra.mxu0 0.0
        %3040 = vmatpush.msra.mxu0 0.0
        %3041 = vmatpush.msra.mxu0 0.0
        %3042 = vmatpush.msra.mxu0 0.0
        %3043 = vmatpush.msra.mxu0 0.0
        %v3044 = vand.u32 %v641, 4294901760
        %v3045 = vsub.f32 %v641, %v3044
        %v3046 = vand.u32 %v3045, 4294901760
        %v3047 = vsub.f32 %v3045, %v3046
        %v3048 = vand.u32 %v3047, 4294901760
        %3049 = vmatpush.msra.mxu0 %v3048
        %v3050 = vand.u32 %v2990, 4294901760
        %3051 = vmatmul.f32.gmra.mxu0 %v3050
        %v3052 = vpop.f32.mrf.mxu0
        %v3053 = vadd.f32 %v3019, %v3052
        %v3054 = vand.u32 %v2993, 4294901760
        %3055 = vmatmul.f32.gmra.mxu0 %v3054
        %v3056 = vpop.f32.mrf.mxu0
        %v3057 = vadd.f32 %v3027, %v3056
        %3058 = vdwg.mxu0
        %3059 = vmatpush.msra.mxu0 0.0
        %3060 = vmatpush.msra.mxu0 0.0
        %3061 = vmatpush.msra.mxu0 0.0
        %3062 = vmatpush.msra.mxu0 0.0
        %3063 = vmatpush.msra.mxu0 0.0
        %3064 = vmatpush.msra.mxu0 0.0
        %3065 = vmatpush.msra.mxu0 0.0
        %3066 = vmatpush.msra.mxu0 0.0
        %3067 = vmatpush.msra.mxu0 0.0
        %3068 = vmatpush.msra.mxu0 0.0
        %3069 = vmatpush.msra.mxu0 0.0
        %3070 = vmatpush.msra.mxu0 0.0
        %3071 = vmatpush.msra.mxu0 0.0
        %3072 = vmatpush.msra.mxu0 0.0
        %3073 = vmatpush.msra.mxu0 0.0
        %v3074 = vand.u32 %v641, 4294901760
        %v3075 = vsub.f32 %v641, %v3074
        %3076 = vmatpush.msra.mxu0 %v3075
        %v3077 = vand.u32 %v2990, 4294901760
        %v3078 = vsub.f32 %v2990, %v3077
        %3079 = vmatmul.f32.gmra.mxu0 %v3078
        %v3080 = vpop.f32.mrf.mxu0
        %v3081 = vadd.f32 %v3053, %v3080
        %v3082 = vand.u32 %v2993, 4294901760
        %v3083 = vsub.f32 %v2993, %v3082
        %3084 = vmatmul.f32.gmra.mxu0 %v3083
        %v3085 = vpop.f32.mrf.mxu0
        %v3086 = vadd.f32 %v3057, %v3085
        %3087 = vdwg.mxu0
        %3088 = vmatpush.msra.mxu0 0.0
        %3089 = vmatpush.msra.mxu0 0.0
        %3090 = vmatpush.msra.mxu0 0.0
        %3091 = vmatpush.msra.mxu0 0.0
        %3092 = vmatpush.msra.mxu0 0.0
        %3093 = vmatpush.msra.mxu0 0.0
        %3094 = vmatpush.msra.mxu0 0.0
        %3095 = vmatpush.msra.mxu0 0.0
        %3096 = vmatpush.msra.mxu0 0.0
        %3097 = vmatpush.msra.mxu0 0.0
        %3098 = vmatpush.msra.mxu0 0.0
        %3099 = vmatpush.msra.mxu0 0.0
        %3100 = vmatpush.msra.mxu0 0.0
        %3101 = vmatpush.msra.mxu0 0.0
        %3102 = vmatpush.msra.mxu0 0.0
        %v3103 = vand.u32 %v641, 4294901760
        %3104 = vmatpush.msra.mxu0 %v3103
        %v3105 = vand.u32 %v2990, 4294901760
        %v3106 = vsub.f32 %v2990, %v3105
        %v3107 = vand.u32 %v3106, 4294901760
        %3108 = vmatmul.f32.gmra.mxu0 %v3107
        %v3109 = vpop.f32.mrf.mxu0
        %v3110 = vadd.f32 %v3081, %v3109
        %v3111 = vand.u32 %v2993, 4294901760
        %v3112 = vsub.f32 %v2993, %v3111
        %v3113 = vand.u32 %v3112, 4294901760
        %3114 = vmatmul.f32.gmra.mxu0 %v3113
        %v3115 = vpop.f32.mrf.mxu0
        %v3116 = vadd.f32 %v3086, %v3115
        %3117 = vdwg.mxu0
        %3118 = vmatpush.msra.mxu0 0.0
        %3119 = vmatpush.msra.mxu0 0.0
        %3120 = vmatpush.msra.mxu0 0.0
        %3121 = vmatpush.msra.mxu0 0.0
        %3122 = vmatpush.msra.mxu0 0.0
        %3123 = vmatpush.msra.mxu0 0.0
        %3124 = vmatpush.msra.mxu0 0.0
        %3125 = vmatpush.msra.mxu0 0.0
        %3126 = vmatpush.msra.mxu0 0.0
        %3127 = vmatpush.msra.mxu0 0.0
        %3128 = vmatpush.msra.mxu0 0.0
        %3129 = vmatpush.msra.mxu0 0.0
        %3130 = vmatpush.msra.mxu0 0.0
        %3131 = vmatpush.msra.mxu0 0.0
        %3132 = vmatpush.msra.mxu0 0.0
        %v3133 = vand.u32 %v641, 4294901760
        %v3134 = vsub.f32 %v641, %v3133
        %v3135 = vand.u32 %v3134, 4294901760
        %3136 = vmatpush.msra.mxu0 %v3135
        %v3137 = vand.u32 %v2990, 4294901760
        %3138 = vmatmul.f32.gmra.mxu0 %v3137
        %v3139 = vpop.f32.mrf.mxu0
        %v3140 = vadd.f32 %v3110, %v3139
        %v3141 = vand.u32 %v2993, 4294901760
        %3142 = vmatmul.f32.gmra.mxu0 %v3141
        %v3143 = vpop.f32.mrf.mxu0
        %v3144 = vadd.f32 %v3116, %v3143
        %3145 = vdwg.mxu0
        %3146 = vmatpush.msra.mxu0 0.0
        %3147 = vmatpush.msra.mxu0 0.0
        %3148 = vmatpush.msra.mxu0 0.0
        %3149 = vmatpush.msra.mxu0 0.0
        %3150 = vmatpush.msra.mxu0 0.0
        %3151 = vmatpush.msra.mxu0 0.0
        %3152 = vmatpush.msra.mxu0 0.0
        %3153 = vmatpush.msra.mxu0 0.0
        %3154 = vmatpush.msra.mxu0 0.0
        %3155 = vmatpush.msra.mxu0 0.0
        %3156 = vmatpush.msra.mxu0 0.0
        %3157 = vmatpush.msra.mxu0 0.0
        %3158 = vmatpush.msra.mxu0 0.0
        %3159 = vmatpush.msra.mxu0 0.0
        %3160 = vmatpush.msra.mxu0 0.0
        %v3161 = vand.u32 %v641, 4294901760
        %3162 = vmatpush.msra.mxu0 %v3161
        %v3163 = vand.u32 %v2990, 4294901760
        %3164 = vmatmul.f32.gmra.mxu0 %v3163
        %v3165 = vpop.f32.mrf.mxu0
        %v3166 = vadd.f32 %v3140, %v3165
        %v3167 = vand.u32 %v2993, 4294901760
        %3168 = vmatmul.f32.gmra.mxu0 %v3167
        %v3169 = vpop.f32.mrf.mxu0
        %v3170 = vadd.f32 %v3144, %v3169
        %3171 = vdwg.mxu0
        %v3172 = vadd.f32 %v2323, %v3166
        %v3173 = vadd.f32 %v2327, %v3170
        %3174 = vrot.lane.b32.xlu0 %v633, 104
        %v3175 = vpop.permute.xlu0 %3174
        %3176 = vrot.lane.b32.xlu0 %v633, 72
        %v3177 = vpop.permute.xlu0 %3176
        %v3178 = vsel %vm647, %v3175, 0
        %v3180 = vsel %vm647, %v3177, 0
        %3182 = vmatpush.xpose.msra.mxu0 0.0
        %3183 = vmatpush.xpose.msra.mxu0 0.0
        %3184 = vmatpush.xpose.msra.mxu0 0.0
        %3185 = vmatpush.xpose.msra.mxu0 0.0
        %3186 = vmatpush.xpose.msra.mxu0 0.0
        %3187 = vmatpush.xpose.msra.mxu0 0.0
        %3188 = vmatpush.xpose.msra.mxu0 0.0
        %3189 = vmatpush.xpose.msra.mxu0 0.0
        %3190 = vmatpush.xpose.msra.mxu0 0.0
        %3191 = vmatpush.xpose.msra.mxu0 0.0
        %3192 = vmatpush.xpose.msra.mxu0 0.0
        %3193 = vmatpush.xpose.msra.mxu0 0.0
        %3194 = vmatpush.xpose.msra.mxu0 0.0
        %3195 = vmatpush.xpose.msra.mxu0 0.0
        %3196 = vmatpush.xpose.msra.mxu0 0.0
        %v3197 = vand.u32 %v3180, 4294901760
        %3198 = vmatpush.xpose.msra.mxu0 %v3197
        %v3199 = vand.u32 %v3178, 4294901760
        %v3200 = vsub.f32 %v3178, %v3199
        %v3201 = vand.u32 %v3200, 4294901760
        %v3202 = vsub.f32 %v3200, %v3201
        %v3203 = vand.u32 %v3202, 4294901760
        %3204 = vmatmul.f32.gmra.mxu0 %v3203
        %v3205 = vpop.f32.mrf.mxu0
        %v3206 = vadd.f32 0.0, %v3205
        %3207 = vdwg.mxu0
        %3208 = vmatpush.xpose.msra.mxu0 0.0
        %3209 = vmatpush.xpose.msra.mxu0 0.0
        %3210 = vmatpush.xpose.msra.mxu0 0.0
        %3211 = vmatpush.xpose.msra.mxu0 0.0
        %3212 = vmatpush.xpose.msra.mxu0 0.0
        %3213 = vmatpush.xpose.msra.mxu0 0.0
        %3214 = vmatpush.xpose.msra.mxu0 0.0
        %3215 = vmatpush.xpose.msra.mxu0 0.0
        %3216 = vmatpush.xpose.msra.mxu0 0.0
        %3217 = vmatpush.xpose.msra.mxu0 0.0
        %3218 = vmatpush.xpose.msra.mxu0 0.0
        %3219 = vmatpush.xpose.msra.mxu0 0.0
        %3220 = vmatpush.xpose.msra.mxu0 0.0
        %3221 = vmatpush.xpose.msra.mxu0 0.0
        %3222 = vmatpush.xpose.msra.mxu0 0.0
        %v3223 = vand.u32 %v3180, 4294901760
        %v3224 = vsub.f32 %v3180, %v3223
        %v3225 = vand.u32 %v3224, 4294901760
        %v3226 = vsub.f32 %v3224, %v3225
        %v3227 = vand.u32 %v3226, 4294901760
        %3228 = vmatpush.xpose.msra.mxu0 %v3227
        %v3229 = vand.u32 %v3178, 4294901760
        %3230 = vmatmul.f32.gmra.mxu0 %v3229
        %v3231 = vpop.f32.mrf.mxu0
        %v3232 = vadd.f32 %v3206, %v3231
        %3233 = vdwg.mxu0
        %3234 = vmatpush.xpose.msra.mxu0 0.0
        %3235 = vmatpush.xpose.msra.mxu0 0.0
        %3236 = vmatpush.xpose.msra.mxu0 0.0
        %3237 = vmatpush.xpose.msra.mxu0 0.0
        %3238 = vmatpush.xpose.msra.mxu0 0.0
        %3239 = vmatpush.xpose.msra.mxu0 0.0
        %3240 = vmatpush.xpose.msra.mxu0 0.0
        %3241 = vmatpush.xpose.msra.mxu0 0.0
        %3242 = vmatpush.xpose.msra.mxu0 0.0
        %3243 = vmatpush.xpose.msra.mxu0 0.0
        %3244 = vmatpush.xpose.msra.mxu0 0.0
        %3245 = vmatpush.xpose.msra.mxu0 0.0
        %3246 = vmatpush.xpose.msra.mxu0 0.0
        %3247 = vmatpush.xpose.msra.mxu0 0.0
        %3248 = vmatpush.xpose.msra.mxu0 0.0
        %v3249 = vand.u32 %v3180, 4294901760
        %v3250 = vsub.f32 %v3180, %v3249
        %3251 = vmatpush.xpose.msra.mxu0 %v3250
        %v3252 = vand.u32 %v3178, 4294901760
        %v3253 = vsub.f32 %v3178, %v3252
        %3254 = vmatmul.f32.gmra.mxu0 %v3253
        %v3255 = vpop.f32.mrf.mxu0
        %v3256 = vadd.f32 %v3232, %v3255
        %3257 = vdwg.mxu0
        %3258 = vmatpush.xpose.msra.mxu0 0.0
        %3259 = vmatpush.xpose.msra.mxu0 0.0
        %3260 = vmatpush.xpose.msra.mxu0 0.0
        %3261 = vmatpush.xpose.msra.mxu0 0.0
        %3262 = vmatpush.xpose.msra.mxu0 0.0
        %3263 = vmatpush.xpose.msra.mxu0 0.0
        %3264 = vmatpush.xpose.msra.mxu0 0.0
        %3265 = vmatpush.xpose.msra.mxu0 0.0
        %3266 = vmatpush.xpose.msra.mxu0 0.0
        %3267 = vmatpush.xpose.msra.mxu0 0.0
        %3268 = vmatpush.xpose.msra.mxu0 0.0
        %3269 = vmatpush.xpose.msra.mxu0 0.0
        %3270 = vmatpush.xpose.msra.mxu0 0.0
        %3271 = vmatpush.xpose.msra.mxu0 0.0
        %3272 = vmatpush.xpose.msra.mxu0 0.0
        %v3273 = vand.u32 %v3180, 4294901760
        %3274 = vmatpush.xpose.msra.mxu0 %v3273
        %v3275 = vand.u32 %v3178, 4294901760
        %v3276 = vsub.f32 %v3178, %v3275
        %v3277 = vand.u32 %v3276, 4294901760
        %3278 = vmatmul.f32.gmra.mxu0 %v3277
        %v3279 = vpop.f32.mrf.mxu0
        %v3280 = vadd.f32 %v3256, %v3279
        %3281 = vdwg.mxu0
        %3282 = vmatpush.xpose.msra.mxu0 0.0
        %3283 = vmatpush.xpose.msra.mxu0 0.0
        %3284 = vmatpush.xpose.msra.mxu0 0.0
        %3285 = vmatpush.xpose.msra.mxu0 0.0
        %3286 = vmatpush.xpose.msra.mxu0 0.0
        %3287 = vmatpush.xpose.msra.mxu0 0.0
        %3288 = vmatpush.xpose.msra.mxu0 0.0
        %3289 = vmatpush.xpose.msra.mxu0 0.0
        %3290 = vmatpush.xpose.msra.mxu0 0.0
        %3291 = vmatpush.xpose.msra.mxu0 0.0
        %3292 = vmatpush.xpose.msra.mxu0 0.0
        %3293 = vmatpush.xpose.msra.mxu0 0.0
        %3294 = vmatpush.xpose.msra.mxu0 0.0
        %3295 = vmatpush.xpose.msra.mxu0 0.0
        %3296 = vmatpush.xpose.msra.mxu0 0.0
        %v3297 = vand.u32 %v3180, 4294901760
        %v3298 = vsub.f32 %v3180, %v3297
        %v3299 = vand.u32 %v3298, 4294901760
        %3300 = vmatpush.xpose.msra.mxu0 %v3299
        %v3301 = vand.u32 %v3178, 4294901760
        %3302 = vmatmul.f32.gmra.mxu0 %v3301
        %v3303 = vpop.f32.mrf.mxu0
        %v3304 = vadd.f32 %v3280, %v3303
        %3305 = vdwg.mxu0
        %3306 = vmatpush.xpose.msra.mxu0 0.0
        %3307 = vmatpush.xpose.msra.mxu0 0.0
        %3308 = vmatpush.xpose.msra.mxu0 0.0
        %3309 = vmatpush.xpose.msra.mxu0 0.0
        %3310 = vmatpush.xpose.msra.mxu0 0.0
        %3311 = vmatpush.xpose.msra.mxu0 0.0
        %3312 = vmatpush.xpose.msra.mxu0 0.0
        %3313 = vmatpush.xpose.msra.mxu0 0.0
        %3314 = vmatpush.xpose.msra.mxu0 0.0
        %3315 = vmatpush.xpose.msra.mxu0 0.0
        %3316 = vmatpush.xpose.msra.mxu0 0.0
        %3317 = vmatpush.xpose.msra.mxu0 0.0
        %3318 = vmatpush.xpose.msra.mxu0 0.0
        %3319 = vmatpush.xpose.msra.mxu0 0.0
        %3320 = vmatpush.xpose.msra.mxu0 0.0
        %v3321 = vand.u32 %v3180, 4294901760
        %3322 = vmatpush.xpose.msra.mxu0 %v3321
        %v3323 = vand.u32 %v3178, 4294901760
        %3324 = vmatmul.f32.gmra.mxu0 %v3323
        %v3325 = vpop.f32.mrf.mxu0
        %v3326 = vadd.f32 %v3304, %v3325
        %3327 = vdwg.mxu0
        %3328 = vrot.lane.b32.xlu0 %v637, 104
        %v3329 = vpop.permute.xlu0 %3328
        %3330 = vrot.lane.b32.xlu0 %v637, 72
        %v3331 = vpop.permute.xlu0 %3330
        %v3332 = vsel %vm647, %v3329, 0
        %v3334 = vsel %vm647, %v3331, 0
        %3336 = vmatpush.xpose.msra.mxu0 0.0
        %3337 = vmatpush.xpose.msra.mxu0 0.0
        %3338 = vmatpush.xpose.msra.mxu0 0.0
        %3339 = vmatpush.xpose.msra.mxu0 0.0
        %3340 = vmatpush.xpose.msra.mxu0 0.0
        %3341 = vmatpush.xpose.msra.mxu0 0.0
        %3342 = vmatpush.xpose.msra.mxu0 0.0
        %3343 = vmatpush.xpose.msra.mxu0 0.0
        %3344 = vmatpush.xpose.msra.mxu0 0.0
        %3345 = vmatpush.xpose.msra.mxu0 0.0
        %3346 = vmatpush.xpose.msra.mxu0 0.0
        %3347 = vmatpush.xpose.msra.mxu0 0.0
        %3348 = vmatpush.xpose.msra.mxu0 0.0
        %3349 = vmatpush.xpose.msra.mxu0 0.0
        %3350 = vmatpush.xpose.msra.mxu0 0.0
        %v3351 = vand.u32 %v3334, 4294901760
        %3352 = vmatpush.xpose.msra.mxu0 %v3351
        %v3353 = vand.u32 %v3332, 4294901760
        %v3354 = vsub.f32 %v3332, %v3353
        %v3355 = vand.u32 %v3354, 4294901760
        %v3356 = vsub.f32 %v3354, %v3355
        %v3357 = vand.u32 %v3356, 4294901760
        %3358 = vmatmul.f32.gmra.mxu0 %v3357
        %v3359 = vpop.f32.mrf.mxu0
        %v3360 = vadd.f32 0.0, %v3359
        %3361 = vdwg.mxu0
        %3362 = vmatpush.xpose.msra.mxu0 0.0
        %3363 = vmatpush.xpose.msra.mxu0 0.0
        %3364 = vmatpush.xpose.msra.mxu0 0.0
        %3365 = vmatpush.xpose.msra.mxu0 0.0
        %3366 = vmatpush.xpose.msra.mxu0 0.0
        %3367 = vmatpush.xpose.msra.mxu0 0.0
        %3368 = vmatpush.xpose.msra.mxu0 0.0
        %3369 = vmatpush.xpose.msra.mxu0 0.0
        %3370 = vmatpush.xpose.msra.mxu0 0.0
        %3371 = vmatpush.xpose.msra.mxu0 0.0
        %3372 = vmatpush.xpose.msra.mxu0 0.0
        %3373 = vmatpush.xpose.msra.mxu0 0.0
        %3374 = vmatpush.xpose.msra.mxu0 0.0
        %3375 = vmatpush.xpose.msra.mxu0 0.0
        %3376 = vmatpush.xpose.msra.mxu0 0.0
        %v3377 = vand.u32 %v3334, 4294901760
        %v3378 = vsub.f32 %v3334, %v3377
        %v3379 = vand.u32 %v3378, 4294901760
        %v3380 = vsub.f32 %v3378, %v3379
        %v3381 = vand.u32 %v3380, 4294901760
        %3382 = vmatpush.xpose.msra.mxu0 %v3381
        %v3383 = vand.u32 %v3332, 4294901760
        %3384 = vmatmul.f32.gmra.mxu0 %v3383
        %v3385 = vpop.f32.mrf.mxu0
        %v3386 = vadd.f32 %v3360, %v3385
        %3387 = vdwg.mxu0
        %3388 = vmatpush.xpose.msra.mxu0 0.0
        %3389 = vmatpush.xpose.msra.mxu0 0.0
        %3390 = vmatpush.xpose.msra.mxu0 0.0
        %3391 = vmatpush.xpose.msra.mxu0 0.0
        %3392 = vmatpush.xpose.msra.mxu0 0.0
        %3393 = vmatpush.xpose.msra.mxu0 0.0
        %3394 = vmatpush.xpose.msra.mxu0 0.0
        %3395 = vmatpush.xpose.msra.mxu0 0.0
        %3396 = vmatpush.xpose.msra.mxu0 0.0
        %3397 = vmatpush.xpose.msra.mxu0 0.0
        %3398 = vmatpush.xpose.msra.mxu0 0.0
        %3399 = vmatpush.xpose.msra.mxu0 0.0
        %3400 = vmatpush.xpose.msra.mxu0 0.0
        %3401 = vmatpush.xpose.msra.mxu0 0.0
        %3402 = vmatpush.xpose.msra.mxu0 0.0
        %v3403 = vand.u32 %v3334, 4294901760
        %v3404 = vsub.f32 %v3334, %v3403
        %3405 = vmatpush.xpose.msra.mxu0 %v3404
        %v3406 = vand.u32 %v3332, 4294901760
        %v3407 = vsub.f32 %v3332, %v3406
        %3408 = vmatmul.f32.gmra.mxu0 %v3407
        %v3409 = vpop.f32.mrf.mxu0
        %v3410 = vadd.f32 %v3386, %v3409
        %3411 = vdwg.mxu0
        %3412 = vmatpush.xpose.msra.mxu0 0.0
        %3413 = vmatpush.xpose.msra.mxu0 0.0
        %3414 = vmatpush.xpose.msra.mxu0 0.0
        %3415 = vmatpush.xpose.msra.mxu0 0.0
        %3416 = vmatpush.xpose.msra.mxu0 0.0
        %3417 = vmatpush.xpose.msra.mxu0 0.0
        %3418 = vmatpush.xpose.msra.mxu0 0.0
        %3419 = vmatpush.xpose.msra.mxu0 0.0
        %3420 = vmatpush.xpose.msra.mxu0 0.0
        %3421 = vmatpush.xpose.msra.mxu0 0.0
        %3422 = vmatpush.xpose.msra.mxu0 0.0
        %3423 = vmatpush.xpose.msra.mxu0 0.0
        %3424 = vmatpush.xpose.msra.mxu0 0.0
        %3425 = vmatpush.xpose.msra.mxu0 0.0
        %3426 = vmatpush.xpose.msra.mxu0 0.0
        %v3427 = vand.u32 %v3334, 4294901760
        %3428 = vmatpush.xpose.msra.mxu0 %v3427
        %v3429 = vand.u32 %v3332, 4294901760
        %v3430 = vsub.f32 %v3332, %v3429
        %v3431 = vand.u32 %v3430, 4294901760
        %3432 = vmatmul.f32.gmra.mxu0 %v3431
        %v3433 = vpop.f32.mrf.mxu0
        %v3434 = vadd.f32 %v3410, %v3433
        %3435 = vdwg.mxu0
        %3436 = vmatpush.xpose.msra.mxu0 0.0
        %3437 = vmatpush.xpose.msra.mxu0 0.0
        %3438 = vmatpush.xpose.msra.mxu0 0.0
        %3439 = vmatpush.xpose.msra.mxu0 0.0
        %3440 = vmatpush.xpose.msra.mxu0 0.0
        %3441 = vmatpush.xpose.msra.mxu0 0.0
        %3442 = vmatpush.xpose.msra.mxu0 0.0
        %3443 = vmatpush.xpose.msra.mxu0 0.0
        %3444 = vmatpush.xpose.msra.mxu0 0.0
        %3445 = vmatpush.xpose.msra.mxu0 0.0
        %3446 = vmatpush.xpose.msra.mxu0 0.0
        %3447 = vmatpush.xpose.msra.mxu0 0.0
        %3448 = vmatpush.xpose.msra.mxu0 0.0
        %3449 = vmatpush.xpose.msra.mxu0 0.0
        %3450 = vmatpush.xpose.msra.mxu0 0.0
        %v3451 = vand.u32 %v3334, 4294901760
        %v3452 = vsub.f32 %v3334, %v3451
        %v3453 = vand.u32 %v3452, 4294901760
        %3454 = vmatpush.xpose.msra.mxu0 %v3453
        %v3455 = vand.u32 %v3332, 4294901760
        %3456 = vmatmul.f32.gmra.mxu0 %v3455
        %v3457 = vpop.f32.mrf.mxu0
        %v3458 = vadd.f32 %v3434, %v3457
        %3459 = vdwg.mxu0
        %3460 = vmatpush.xpose.msra.mxu0 0.0
        %3461 = vmatpush.xpose.msra.mxu0 0.0
        %3462 = vmatpush.xpose.msra.mxu0 0.0
        %3463 = vmatpush.xpose.msra.mxu0 0.0
        %3464 = vmatpush.xpose.msra.mxu0 0.0
        %3465 = vmatpush.xpose.msra.mxu0 0.0
        %3466 = vmatpush.xpose.msra.mxu0 0.0
        %3467 = vmatpush.xpose.msra.mxu0 0.0
        %3468 = vmatpush.xpose.msra.mxu0 0.0
        %3469 = vmatpush.xpose.msra.mxu0 0.0
        %3470 = vmatpush.xpose.msra.mxu0 0.0
        %3471 = vmatpush.xpose.msra.mxu0 0.0
        %3472 = vmatpush.xpose.msra.mxu0 0.0
        %3473 = vmatpush.xpose.msra.mxu0 0.0
        %3474 = vmatpush.xpose.msra.mxu0 0.0
        %v3475 = vand.u32 %v3334, 4294901760
        %3476 = vmatpush.xpose.msra.mxu0 %v3475
        %v3477 = vand.u32 %v3332, 4294901760
        %3478 = vmatmul.f32.gmra.mxu0 %v3477
        %v3479 = vpop.f32.mrf.mxu0
        %v3480 = vadd.f32 %v3458, %v3479
        %3481 = vdwg.mxu0
        %v3482 = vsel %vm647, %v3326, -inf
        %3483 = vmax.xlane.f32.xlu0 %v3482
        %v3484 = vpop.xlane.xlu0 %3483
        %v3485 = vsel %vm647, %v3480, -inf
        %3486 = vmax.xlane.f32.xlu0 %v3485
        %v3487 = vpop.xlane.xlu0 %3486
        %v3488 = vsub.f32 %v3326, %v3484
        %v3489 = vsub.f32 %v3480, %v3487
        %v3490 = vmul.f32 %v3488, 1.442695
        %v3491 = vpow.pop %v3490
        %v3492 = vmul.f32 %v3489, 1.442695
        %v3493 = vpow.pop %v3492
        %v3494 = vsel %vm647, %v3491, 0.0
        %3495 = vadd.xlane.f32.xlu0 %v3494
        %v3496 = vpop.xlane.xlu0 %3495
        %v3497 = vsel %vm647, %v3493, 0.0
        %3498 = vadd.xlane.f32.xlu0 %v3497
        %v3499 = vpop.xlane.xlu0 %3498
        %v3500 = vrcp.pop %v3496
        %v3501 = vmul.f32 %v3496, %v3500
        %v3502 = vsub.f32 1.0, %v3501
        %v3503 = vmul.f32 %v3500, %v3502
        %v3504 = vadd.f32 %v3500, %v3503
        %vm3505 = vweird.f32 %v3496
        %vm3506 = vweird.f32 %v3500
        %vm3507 = vmor %vm3505, %vm3506
        %v3508 = vsel %vm3507, %v3500, %v3504
        %v3509 = vand.u32 2147483647, %v3496
        %vm3510 = vcmp.eq.f32.partialorder %v3509, 8.507059e+37
        %v3511 = vand.u32 %v3496, 2147483648
        %v3512 = vor.u32 1.1754944e-38, %v3511
        %v3513 = vsel %vm3510, %v3512, %v3508
        %v3514 = vrcp.pop %v3499
        %v3515 = vmul.f32 %v3499, %v3514
        %v3516 = vsub.f32 1.0, %v3515
        %v3517 = vmul.f32 %v3514, %v3516
        %v3518 = vadd.f32 %v3514, %v3517
        %vm3519 = vweird.f32 %v3499
        %vm3520 = vweird.f32 %v3514
        %vm3521 = vmor %vm3519, %vm3520
        %v3522 = vsel %vm3521, %v3514, %v3518
        %v3523 = vand.u32 2147483647, %v3499
        %vm3524 = vcmp.eq.f32.partialorder %v3523, 8.507059e+37
        %v3525 = vand.u32 %v3499, 2147483648
        %v3526 = vor.u32 1.1754944e-38, %v3525
        %v3527 = vsel %vm3524, %v3526, %v3522
        %v3528 = vmul.f32 %v3491, %v3513
        %v3529 = vmul.f32 %v3493, %v3527
        %3530 = vrot.lane.b32.xlu0 %v633, 40
        %v3531 = vpop.permute.xlu0 %3530
        %v3534 = vsel %vm647, %v3528, 0
        %3536 = vmatpush.msra.mxu0 0.0
        %3537 = vmatpush.msra.mxu0 0.0
        %3538 = vmatpush.msra.mxu0 0.0
        %3539 = vmatpush.msra.mxu0 0.0
        %3540 = vmatpush.msra.mxu0 0.0
        %3541 = vmatpush.msra.mxu0 0.0
        %3542 = vmatpush.msra.mxu0 0.0
        %3543 = vmatpush.msra.mxu0 0.0
        %3544 = vmatpush.msra.mxu0 0.0
        %3545 = vmatpush.msra.mxu0 0.0
        %3546 = vmatpush.msra.mxu0 0.0
        %3547 = vmatpush.msra.mxu0 0.0
        %3548 = vmatpush.msra.mxu0 0.0
        %3549 = vmatpush.msra.mxu0 0.0
        %3550 = vmatpush.msra.mxu0 0.0
        %v3551 = vand.u32 %v3531, 4294901760
        %3552 = vmatpush.msra.mxu0 %v3551
        %v3553 = vand.u32 %v3534, 4294901760
        %v3554 = vsub.f32 %v3534, %v3553
        %v3555 = vand.u32 %v3554, 4294901760
        %v3556 = vsub.f32 %v3554, %v3555
        %v3557 = vand.u32 %v3556, 4294901760
        %3558 = vmatmul.f32.gmra.mxu0 %v3557
        %v3559 = vpop.f32.mrf.mxu0
        %v3560 = vadd.f32 0.0, %v3559
        %3561 = vdwg.mxu0
        %3562 = vmatpush.msra.mxu0 0.0
        %3563 = vmatpush.msra.mxu0 0.0
        %3564 = vmatpush.msra.mxu0 0.0
        %3565 = vmatpush.msra.mxu0 0.0
        %3566 = vmatpush.msra.mxu0 0.0
        %3567 = vmatpush.msra.mxu0 0.0
        %3568 = vmatpush.msra.mxu0 0.0
        %3569 = vmatpush.msra.mxu0 0.0
        %3570 = vmatpush.msra.mxu0 0.0
        %3571 = vmatpush.msra.mxu0 0.0
        %3572 = vmatpush.msra.mxu0 0.0
        %3573 = vmatpush.msra.mxu0 0.0
        %3574 = vmatpush.msra.mxu0 0.0
        %3575 = vmatpush.msra.mxu0 0.0
        %3576 = vmatpush.msra.mxu0 0.0
        %v3577 = vand.u32 %v3531, 4294901760
        %v3578 = vsub.f32 %v3531, %v3577
        %v3579 = vand.u32 %v3578, 4294901760
        %v3580 = vsub.f32 %v3578, %v3579
        %v3581 = vand.u32 %v3580, 4294901760
        %3582 = vmatpush.msra.mxu0 %v3581
        %v3583 = vand.u32 %v3534, 4294901760
        %3584 = vmatmul.f32.gmra.mxu0 %v3583
        %v3585 = vpop.f32.mrf.mxu0
        %v3586 = vadd.f32 %v3560, %v3585
        %3587 = vdwg.mxu0
        %3588 = vmatpush.msra.mxu0 0.0
        %3589 = vmatpush.msra.mxu0 0.0
        %3590 = vmatpush.msra.mxu0 0.0
        %3591 = vmatpush.msra.mxu0 0.0
        %3592 = vmatpush.msra.mxu0 0.0
        %3593 = vmatpush.msra.mxu0 0.0
        %3594 = vmatpush.msra.mxu0 0.0
        %3595 = vmatpush.msra.mxu0 0.0
        %3596 = vmatpush.msra.mxu0 0.0
        %3597 = vmatpush.msra.mxu0 0.0
        %3598 = vmatpush.msra.mxu0 0.0
        %3599 = vmatpush.msra.mxu0 0.0
        %3600 = vmatpush.msra.mxu0 0.0
        %3601 = vmatpush.msra.mxu0 0.0
        %3602 = vmatpush.msra.mxu0 0.0
        %v3603 = vand.u32 %v3531, 4294901760
        %v3604 = vsub.f32 %v3531, %v3603
        %3605 = vmatpush.msra.mxu0 %v3604
        %v3606 = vand.u32 %v3534, 4294901760
        %v3607 = vsub.f32 %v3534, %v3606
        %3608 = vmatmul.f32.gmra.mxu0 %v3607
        %v3609 = vpop.f32.mrf.mxu0
        %v3610 = vadd.f32 %v3586, %v3609
        %3611 = vdwg.mxu0
        %3612 = vmatpush.msra.mxu0 0.0
        %3613 = vmatpush.msra.mxu0 0.0
        %3614 = vmatpush.msra.mxu0 0.0
        %3615 = vmatpush.msra.mxu0 0.0
        %3616 = vmatpush.msra.mxu0 0.0
        %3617 = vmatpush.msra.mxu0 0.0
        %3618 = vmatpush.msra.mxu0 0.0
        %3619 = vmatpush.msra.mxu0 0.0
        %3620 = vmatpush.msra.mxu0 0.0
        %3621 = vmatpush.msra.mxu0 0.0
        %3622 = vmatpush.msra.mxu0 0.0
        %3623 = vmatpush.msra.mxu0 0.0
        %3624 = vmatpush.msra.mxu0 0.0
        %3625 = vmatpush.msra.mxu0 0.0
        %3626 = vmatpush.msra.mxu0 0.0
        %v3627 = vand.u32 %v3531, 4294901760
        %3628 = vmatpush.msra.mxu0 %v3627
        %v3629 = vand.u32 %v3534, 4294901760
        %v3630 = vsub.f32 %v3534, %v3629
        %v3631 = vand.u32 %v3630, 4294901760
        %3632 = vmatmul.f32.gmra.mxu0 %v3631
        %v3633 = vpop.f32.mrf.mxu0
        %v3634 = vadd.f32 %v3610, %v3633
        %3635 = vdwg.mxu0
        %3636 = vmatpush.msra.mxu0 0.0
        %3637 = vmatpush.msra.mxu0 0.0
        %3638 = vmatpush.msra.mxu0 0.0
        %3639 = vmatpush.msra.mxu0 0.0
        %3640 = vmatpush.msra.mxu0 0.0
        %3641 = vmatpush.msra.mxu0 0.0
        %3642 = vmatpush.msra.mxu0 0.0
        %3643 = vmatpush.msra.mxu0 0.0
        %3644 = vmatpush.msra.mxu0 0.0
        %3645 = vmatpush.msra.mxu0 0.0
        %3646 = vmatpush.msra.mxu0 0.0
        %3647 = vmatpush.msra.mxu0 0.0
        %3648 = vmatpush.msra.mxu0 0.0
        %3649 = vmatpush.msra.mxu0 0.0
        %3650 = vmatpush.msra.mxu0 0.0
        %v3651 = vand.u32 %v3531, 4294901760
        %v3652 = vsub.f32 %v3531, %v3651
        %v3653 = vand.u32 %v3652, 4294901760
        %3654 = vmatpush.msra.mxu0 %v3653
        %v3655 = vand.u32 %v3534, 4294901760
        %3656 = vmatmul.f32.gmra.mxu0 %v3655
        %v3657 = vpop.f32.mrf.mxu0
        %v3658 = vadd.f32 %v3634, %v3657
        %3659 = vdwg.mxu0
        %3660 = vmatpush.msra.mxu0 0.0
        %3661 = vmatpush.msra.mxu0 0.0
        %3662 = vmatpush.msra.mxu0 0.0
        %3663 = vmatpush.msra.mxu0 0.0
        %3664 = vmatpush.msra.mxu0 0.0
        %3665 = vmatpush.msra.mxu0 0.0
        %3666 = vmatpush.msra.mxu0 0.0
        %3667 = vmatpush.msra.mxu0 0.0
        %3668 = vmatpush.msra.mxu0 0.0
        %3669 = vmatpush.msra.mxu0 0.0
        %3670 = vmatpush.msra.mxu0 0.0
        %3671 = vmatpush.msra.mxu0 0.0
        %3672 = vmatpush.msra.mxu0 0.0
        %3673 = vmatpush.msra.mxu0 0.0
        %3674 = vmatpush.msra.mxu0 0.0
        %v3675 = vand.u32 %v3531, 4294901760
        %3676 = vmatpush.msra.mxu0 %v3675
        %v3677 = vand.u32 %v3534, 4294901760
        %3678 = vmatmul.f32.gmra.mxu0 %v3677
        %v3679 = vpop.f32.mrf.mxu0
        %v3680 = vadd.f32 %v3658, %v3679
        %3681 = vdwg.mxu0
        %3682 = vrot.lane.b32.xlu0 %v637, 40
        %v3683 = vpop.permute.xlu0 %3682
        %v3686 = vsel %vm647, %v3529, 0
        %3688 = vmatpush.msra.mxu0 0.0
        %3689 = vmatpush.msra.mxu0 0.0
        %3690 = vmatpush.msra.mxu0 0.0
        %3691 = vmatpush.msra.mxu0 0.0
        %3692 = vmatpush.msra.mxu0 0.0
        %3693 = vmatpush.msra.mxu0 0.0
        %3694 = vmatpush.msra.mxu0 0.0
        %3695 = vmatpush.msra.mxu0 0.0
        %3696 = vmatpush.msra.mxu0 0.0
        %3697 = vmatpush.msra.mxu0 0.0
        %3698 = vmatpush.msra.mxu0 0.0
        %3699 = vmatpush.msra.mxu0 0.0
        %3700 = vmatpush.msra.mxu0 0.0
        %3701 = vmatpush.msra.mxu0 0.0
        %3702 = vmatpush.msra.mxu0 0.0
        %v3703 = vand.u32 %v3683, 4294901760
        %3704 = vmatpush.msra.mxu0 %v3703
        %v3705 = vand.u32 %v3686, 4294901760
        %v3706 = vsub.f32 %v3686, %v3705
        %v3707 = vand.u32 %v3706, 4294901760
        %v3708 = vsub.f32 %v3706, %v3707
        %v3709 = vand.u32 %v3708, 4294901760
        %3710 = vmatmul.f32.gmra.mxu0 %v3709
        %v3711 = vpop.f32.mrf.mxu0
        %v3712 = vadd.f32 0.0, %v3711
        %3713 = vdwg.mxu0
        %3714 = vmatpush.msra.mxu0 0.0
        %3715 = vmatpush.msra.mxu0 0.0
        %3716 = vmatpush.msra.mxu0 0.0
        %3717 = vmatpush.msra.mxu0 0.0
        %3718 = vmatpush.msra.mxu0 0.0
        %3719 = vmatpush.msra.mxu0 0.0
        %3720 = vmatpush.msra.mxu0 0.0
        %3721 = vmatpush.msra.mxu0 0.0
        %3722 = vmatpush.msra.mxu0 0.0
        %3723 = vmatpush.msra.mxu0 0.0
        %3724 = vmatpush.msra.mxu0 0.0
        %3725 = vmatpush.msra.mxu0 0.0
        %3726 = vmatpush.msra.mxu0 0.0
        %3727 = vmatpush.msra.mxu0 0.0
        %3728 = vmatpush.msra.mxu0 0.0
        %v3729 = vand.u32 %v3683, 4294901760
        %v3730 = vsub.f32 %v3683, %v3729
        %v3731 = vand.u32 %v3730, 4294901760
        %v3732 = vsub.f32 %v3730, %v3731
        %v3733 = vand.u32 %v3732, 4294901760
        %3734 = vmatpush.msra.mxu0 %v3733
        %v3735 = vand.u32 %v3686, 4294901760
        %3736 = vmatmul.f32.gmra.mxu0 %v3735
        %v3737 = vpop.f32.mrf.mxu0
        %v3738 = vadd.f32 %v3712, %v3737
        %3739 = vdwg.mxu0
        %3740 = vmatpush.msra.mxu0 0.0
        %3741 = vmatpush.msra.mxu0 0.0
        %3742 = vmatpush.msra.mxu0 0.0
        %3743 = vmatpush.msra.mxu0 0.0
        %3744 = vmatpush.msra.mxu0 0.0
        %3745 = vmatpush.msra.mxu0 0.0
        %3746 = vmatpush.msra.mxu0 0.0
        %3747 = vmatpush.msra.mxu0 0.0
        %3748 = vmatpush.msra.mxu0 0.0
        %3749 = vmatpush.msra.mxu0 0.0
        %3750 = vmatpush.msra.mxu0 0.0
        %3751 = vmatpush.msra.mxu0 0.0
        %3752 = vmatpush.msra.mxu0 0.0
        %3753 = vmatpush.msra.mxu0 0.0
        %3754 = vmatpush.msra.mxu0 0.0
        %v3755 = vand.u32 %v3683, 4294901760
        %v3756 = vsub.f32 %v3683, %v3755
        %3757 = vmatpush.msra.mxu0 %v3756
        %v3758 = vand.u32 %v3686, 4294901760
        %v3759 = vsub.f32 %v3686, %v3758
        %3760 = vmatmul.f32.gmra.mxu0 %v3759
        %v3761 = vpop.f32.mrf.mxu0
        %v3762 = vadd.f32 %v3738, %v3761
        %3763 = vdwg.mxu0
        %3764 = vmatpush.msra.mxu0 0.0
        %3765 = vmatpush.msra.mxu0 0.0
        %3766 = vmatpush.msra.mxu0 0.0
        %3767 = vmatpush.msra.mxu0 0.0
        %3768 = vmatpush.msra.mxu0 0.0
        %3769 = vmatpush.msra.mxu0 0.0
        %3770 = vmatpush.msra.mxu0 0.0
        %3771 = vmatpush.msra.mxu0 0.0
        %3772 = vmatpush.msra.mxu0 0.0
        %3773 = vmatpush.msra.mxu0 0.0
        %3774 = vmatpush.msra.mxu0 0.0
        %3775 = vmatpush.msra.mxu0 0.0
        %3776 = vmatpush.msra.mxu0 0.0
        %3777 = vmatpush.msra.mxu0 0.0
        %3778 = vmatpush.msra.mxu0 0.0
        %v3779 = vand.u32 %v3683, 4294901760
        %3780 = vmatpush.msra.mxu0 %v3779
        %v3781 = vand.u32 %v3686, 4294901760
        %v3782 = vsub.f32 %v3686, %v3781
        %v3783 = vand.u32 %v3782, 4294901760
        %3784 = vmatmul.f32.gmra.mxu0 %v3783
        %v3785 = vpop.f32.mrf.mxu0
        %v3786 = vadd.f32 %v3762, %v3785
        %3787 = vdwg.mxu0
        %3788 = vmatpush.msra.mxu0 0.0
        %3789 = vmatpush.msra.mxu0 0.0
        %3790 = vmatpush.msra.mxu0 0.0
        %3791 = vmatpush.msra.mxu0 0.0
        %3792 = vmatpush.msra.mxu0 0.0
        %3793 = vmatpush.msra.mxu0 0.0
        %3794 = vmatpush.msra.mxu0 0.0
        %3795 = vmatpush.msra.mxu0 0.0
        %3796 = vmatpush.msra.mxu0 0.0
        %3797 = vmatpush.msra.mxu0 0.0
        %3798 = vmatpush.msra.mxu0 0.0
        %3799 = vmatpush.msra.mxu0 0.0
        %3800 = vmatpush.msra.mxu0 0.0
        %3801 = vmatpush.msra.mxu0 0.0
        %3802 = vmatpush.msra.mxu0 0.0
        %v3803 = vand.u32 %v3683, 4294901760
        %v3804 = vsub.f32 %v3683, %v3803
        %v3805 = vand.u32 %v3804, 4294901760
        %3806 = vmatpush.msra.mxu0 %v3805
        %v3807 = vand.u32 %v3686, 4294901760
        %3808 = vmatmul.f32.gmra.mxu0 %v3807
        %v3809 = vpop.f32.mrf.mxu0
        %v3810 = vadd.f32 %v3786, %v3809
        %3811 = vdwg.mxu0
        %3812 = vmatpush.msra.mxu0 0.0
        %3813 = vmatpush.msra.mxu0 0.0
        %3814 = vmatpush.msra.mxu0 0.0
        %3815 = vmatpush.msra.mxu0 0.0
        %3816 = vmatpush.msra.mxu0 0.0
        %3817 = vmatpush.msra.mxu0 0.0
        %3818 = vmatpush.msra.mxu0 0.0
        %3819 = vmatpush.msra.mxu0 0.0
        %3820 = vmatpush.msra.mxu0 0.0
        %3821 = vmatpush.msra.mxu0 0.0
        %3822 = vmatpush.msra.mxu0 0.0
        %3823 = vmatpush.msra.mxu0 0.0
        %3824 = vmatpush.msra.mxu0 0.0
        %3825 = vmatpush.msra.mxu0 0.0
        %3826 = vmatpush.msra.mxu0 0.0
        %v3827 = vand.u32 %v3683, 4294901760
        %3828 = vmatpush.msra.mxu0 %v3827
        %v3829 = vand.u32 %v3686, 4294901760
        %3830 = vmatmul.f32.gmra.mxu0 %v3829
        %v3831 = vpop.f32.mrf.mxu0
        %v3832 = vadd.f32 %v3810, %v3831
        %3833 = vdwg.mxu0
        %v3835 = vsel %vm647, %v3680, 0
        %v3838 = vsel %vm647, %v3832, 0
        %3840 = vmatpush.msra.mxu0 0.0
        %3841 = vmatpush.msra.mxu0 0.0
        %3842 = vmatpush.msra.mxu0 0.0
        %3843 = vmatpush.msra.mxu0 0.0
        %3844 = vmatpush.msra.mxu0 0.0
        %3845 = vmatpush.msra.mxu0 0.0
        %3846 = vmatpush.msra.mxu0 0.0
        %3847 = vmatpush.msra.mxu0 0.0
        %3848 = vmatpush.msra.mxu0 0.0
        %3849 = vmatpush.msra.mxu0 0.0
        %3850 = vmatpush.msra.mxu0 0.0
        %3851 = vmatpush.msra.mxu0 0.0
        %3852 = vmatpush.msra.mxu0 0.0
        %3853 = vmatpush.msra.mxu0 0.0
        %3854 = vmatpush.msra.mxu0 0.0
        %v3855 = vand.u32 %v642, 4294901760
        %3856 = vmatpush.msra.mxu0 %v3855
        %v3857 = vand.u32 %v3835, 4294901760
        %v3858 = vsub.f32 %v3835, %v3857
        %v3859 = vand.u32 %v3858, 4294901760
        %v3860 = vsub.f32 %v3858, %v3859
        %v3861 = vand.u32 %v3860, 4294901760
        %3862 = vmatmul.f32.gmra.mxu0 %v3861
        %v3863 = vpop.f32.mrf.mxu0
        %v3864 = vadd.f32 0.0, %v3863
        %v3865 = vand.u32 %v3838, 4294901760
        %v3866 = vsub.f32 %v3838, %v3865
        %v3867 = vand.u32 %v3866, 4294901760
        %v3868 = vsub.f32 %v3866, %v3867
        %v3869 = vand.u32 %v3868, 4294901760
        %3870 = vmatmul.f32.gmra.mxu0 %v3869
        %v3871 = vpop.f32.mrf.mxu0
        %v3872 = vadd.f32 0.0, %v3871
        %3873 = vdwg.mxu0
        %3874 = vmatpush.msra.mxu0 0.0
        %3875 = vmatpush.msra.mxu0 0.0
        %3876 = vmatpush.msra.mxu0 0.0
        %3877 = vmatpush.msra.mxu0 0.0
        %3878 = vmatpush.msra.mxu0 0.0
        %3879 = vmatpush.msra.mxu0 0.0
        %3880 = vmatpush.msra.mxu0 0.0
        %3881 = vmatpush.msra.mxu0 0.0
        %3882 = vmatpush.msra.mxu0 0.0
        %3883 = vmatpush.msra.mxu0 0.0
        %3884 = vmatpush.msra.mxu0 0.0
        %3885 = vmatpush.msra.mxu0 0.0
        %3886 = vmatpush.msra.mxu0 0.0
        %3887 = vmatpush.msra.mxu0 0.0
        %3888 = vmatpush.msra.mxu0 0.0
        %v3889 = vand.u32 %v642, 4294901760
        %v3890 = vsub.f32 %v642, %v3889
        %v3891 = vand.u32 %v3890, 4294901760
        %v3892 = vsub.f32 %v3890, %v3891
        %v3893 = vand.u32 %v3892, 4294901760
        %3894 = vmatpush.msra.mxu0 %v3893
        %v3895 = vand.u32 %v3835, 4294901760
        %3896 = vmatmul.f32.gmra.mxu0 %v3895
        %v3897 = vpop.f32.mrf.mxu0
        %v3898 = vadd.f32 %v3864, %v3897
        %v3899 = vand.u32 %v3838, 4294901760
        %3900 = vmatmul.f32.gmra.mxu0 %v3899
        %v3901 = vpop.f32.mrf.mxu0
        %v3902 = vadd.f32 %v3872, %v3901
        %3903 = vdwg.mxu0
        %3904 = vmatpush.msra.mxu0 0.0
        %3905 = vmatpush.msra.mxu0 0.0
        %3906 = vmatpush.msra.mxu0 0.0
        %3907 = vmatpush.msra.mxu0 0.0
        %3908 = vmatpush.msra.mxu0 0.0
        %3909 = vmatpush.msra.mxu0 0.0
        %3910 = vmatpush.msra.mxu0 0.0
        %3911 = vmatpush.msra.mxu0 0.0
        %3912 = vmatpush.msra.mxu0 0.0
        %3913 = vmatpush.msra.mxu0 0.0
        %3914 = vmatpush.msra.mxu0 0.0
        %3915 = vmatpush.msra.mxu0 0.0
        %3916 = vmatpush.msra.mxu0 0.0
        %3917 = vmatpush.msra.mxu0 0.0
        %3918 = vmatpush.msra.mxu0 0.0
        %v3919 = vand.u32 %v642, 4294901760
        %v3920 = vsub.f32 %v642, %v3919
        %3921 = vmatpush.msra.mxu0 %v3920
        %v3922 = vand.u32 %v3835, 4294901760
        %v3923 = vsub.f32 %v3835, %v3922
        %3924 = vmatmul.f32.gmra.mxu0 %v3923
        %v3925 = vpop.f32.mrf.mxu0
        %v3926 = vadd.f32 %v3898, %v3925
        %v3927 = vand.u32 %v3838, 4294901760
        %v3928 = vsub.f32 %v3838, %v3927
        %3929 = vmatmul.f32.gmra.mxu0 %v3928
        %v3930 = vpop.f32.mrf.mxu0
        %v3931 = vadd.f32 %v3902, %v3930
        %3932 = vdwg.mxu0
        %3933 = vmatpush.msra.mxu0 0.0
        %3934 = vmatpush.msra.mxu0 0.0
        %3935 = vmatpush.msra.mxu0 0.0
        %3936 = vmatpush.msra.mxu0 0.0
        %3937 = vmatpush.msra.mxu0 0.0
        %3938 = vmatpush.msra.mxu0 0.0
        %3939 = vmatpush.msra.mxu0 0.0
        %3940 = vmatpush.msra.mxu0 0.0
        %3941 = vmatpush.msra.mxu0 0.0
        %3942 = vmatpush.msra.mxu0 0.0
        %3943 = vmatpush.msra.mxu0 0.0
        %3944 = vmatpush.msra.mxu0 0.0
        %3945 = vmatpush.msra.mxu0 0.0
        %3946 = vmatpush.msra.mxu0 0.0
        %3947 = vmatpush.msra.mxu0 0.0
        %v3948 = vand.u32 %v642, 4294901760
        %3949 = vmatpush.msra.mxu0 %v3948
        %v3950 = vand.u32 %v3835, 4294901760
        %v3951 = vsub.f32 %v3835, %v3950
        %v3952 = vand.u32 %v3951, 4294901760
        %3953 = vmatmul.f32.gmra.mxu0 %v3952
        %v3954 = vpop.f32.mrf.mxu0
        %v3955 = vadd.f32 %v3926, %v3954
        %v3956 = vand.u32 %v3838, 4294901760
        %v3957 = vsub.f32 %v3838, %v3956
        %v3958 = vand.u32 %v3957, 4294901760
        %3959 = vmatmul.f32.gmra.mxu0 %v3958
        %v3960 = vpop.f32.mrf.mxu0
        %v3961 = vadd.f32 %v3931, %v3960
        %3962 = vdwg.mxu0
        %3963 = vmatpush.msra.mxu0 0.0
        %3964 = vmatpush.msra.mxu0 0.0
        %3965 = vmatpush.msra.mxu0 0.0
        %3966 = vmatpush.msra.mxu0 0.0
        %3967 = vmatpush.msra.mxu0 0.0
        %3968 = vmatpush.msra.mxu0 0.0
        %3969 = vmatpush.msra.mxu0 0.0
        %3970 = vmatpush.msra.mxu0 0.0
        %3971 = vmatpush.msra.mxu0 0.0
        %3972 = vmatpush.msra.mxu0 0.0
        %3973 = vmatpush.msra.mxu0 0.0
        %3974 = vmatpush.msra.mxu0 0.0
        %3975 = vmatpush.msra.mxu0 0.0
        %3976 = vmatpush.msra.mxu0 0.0
        %3977 = vmatpush.msra.mxu0 0.0
        %v3978 = vand.u32 %v642, 4294901760
        %v3979 = vsub.f32 %v642, %v3978
        %v3980 = vand.u32 %v3979, 4294901760
        %3981 = vmatpush.msra.mxu0 %v3980
        %v3982 = vand.u32 %v3835, 4294901760
        %3983 = vmatmul.f32.gmra.mxu0 %v3982
        %v3984 = vpop.f32.mrf.mxu0
        %v3985 = vadd.f32 %v3955, %v3984
        %v3986 = vand.u32 %v3838, 4294901760
        %3987 = vmatmul.f32.gmra.mxu0 %v3986
        %v3988 = vpop.f32.mrf.mxu0
        %v3989 = vadd.f32 %v3961, %v3988
        %3990 = vdwg.mxu0
        %3991 = vmatpush.msra.mxu0 0.0
        %3992 = vmatpush.msra.mxu0 0.0
        %3993 = vmatpush.msra.mxu0 0.0
        %3994 = vmatpush.msra.mxu0 0.0
        %3995 = vmatpush.msra.mxu0 0.0
        %3996 = vmatpush.msra.mxu0 0.0
        %3997 = vmatpush.msra.mxu0 0.0
        %3998 = vmatpush.msra.mxu0 0.0
        %3999 = vmatpush.msra.mxu0 0.0
        %4000 = vmatpush.msra.mxu0 0.0
        %4001 = vmatpush.msra.mxu0 0.0
        %4002 = vmatpush.msra.mxu0 0.0
        %4003 = vmatpush.msra.mxu0 0.0
        %4004 = vmatpush.msra.mxu0 0.0
        %4005 = vmatpush.msra.mxu0 0.0
        %v4006 = vand.u32 %v642, 4294901760
        %4007 = vmatpush.msra.mxu0 %v4006
        %v4008 = vand.u32 %v3835, 4294901760
        %4009 = vmatmul.f32.gmra.mxu0 %v4008
        %v4010 = vpop.f32.mrf.mxu0
        %v4011 = vadd.f32 %v3985, %v4010
        %v4012 = vand.u32 %v3838, 4294901760
        %4013 = vmatmul.f32.gmra.mxu0 %v4012
        %v4014 = vpop.f32.mrf.mxu0
        %v4015 = vadd.f32 %v3989, %v4014
        %4016 = vdwg.mxu0
        %v4017 = vadd.f32 %v3172, %v4011
        %v4018 = vadd.f32 %v3173, %v4015
        %v4019 = vperm.slane %v643, 0
        %v4020 = vadd.f32 %v4017, %v4019
        %v4021 = vadd.f32 %v4018, %v4019
        %v4022 = vadd.f32 %v4020, %v406
        %v4023 = vadd.f32 %v4021, %v407
        %v4024 = vsel %vm416, %v4022, 0.0
        %4025 = vadd.xlane.f32.xlu0 %v4024
        %v4026 = vpop.xlane.xlu0 %4025
        %v4027 = vsel %vm416, %v4023, 0.0
        %4028 = vadd.xlane.f32.xlu0 %v4027
        %v4029 = vpop.xlane.xlu0 %4028
        %v4030 = vrcp.pop 32.0
        %v4031 = vmul.f32 32.0, %v4030
        %v4032 = vsub.f32 1.0, %v4031
        %v4033 = vmul.f32 %v4030, %v4032
        %v4034 = vadd.f32 %v4030, %v4033
        %vm4035 = vweird.f32 %v4030
        %v4036 = vsel %vm4035, %v4030, %v4034
        %v4037 = vmul.f32 %v4026, %v4036
        %v4038 = vmul.f32 %v4029, %v4036
        %v4039 = vsub.f32 %v4022, %v4037
        %v4040 = vsub.f32 %v4023, %v4038
        %v4041 = vmul.f32 %v4039, %v4039
        %v4042 = vmul.f32 %v4040, %v4040
        %v4043 = vsel %vm416, %v4041, 0.0
        %4044 = vadd.xlane.f32.xlu0 %v4043
        %v4045 = vpop.xlane.xlu0 %4044
        %v4046 = vsel %vm416, %v4042, 0.0
        %4047 = vadd.xlane.f32.xlu0 %v4046
        %v4048 = vpop.xlane.xlu0 %4047
        %v4049 = vmul.f32 %v4045, %v4036
        %v4050 = vmul.f32 %v4048, %v4036
        %v4051 = vadd.f32 %v4049, 1e-05
        %v4052 = vadd.f32 %v4050, 1e-05
        %v4053 = vrsqrt.pop %v4051
        %v4054 = vmul.f32 %v4053, %v4051
        %v4055 = vmul.f32 %v4054, %v4053
        %v4056 = vmul.f32 0.5, %v4055
        %v4057 = vsub.f32 1.5, %v4056
        %v4058 = vmul.f32 %v4053, %v4057
        %vm4059 = vweird.f32 %v4051
        %vm4060 = vweird.f32 %v4053
        %vm4061 = vmor %vm4059, %vm4060
        %v4062 = vsel %vm4061, %v4053, %v4058
        %v4063 = vrsqrt.pop %v4052
        %v4064 = vmul.f32 %v4063, %v4052
        %v4065 = vmul.f32 %v4064, %v4063
        %v4066 = vmul.f32 0.5, %v4065
        %v4067 = vsub.f32 1.5, %v4066
        %v4068 = vmul.f32 %v4063, %v4067
        %vm4069 = vweird.f32 %v4052
        %vm4070 = vweird.f32 %v4063
        %vm4071 = vmor %vm4069, %vm4070
        %v4072 = vsel %vm4071, %v4063, %v4068
        %v4073 = vmul.f32 %v4039, %v4062
        %v4074 = vmul.f32 %v4040, %v4072
        %v4075 = vperm.slane %v643, 1
        %v4076 = vmul.f32 %v4073, %v4075
        %v4077 = vmul.f32 %v4074, %v4075
        %v4078 = vperm.slane %v643, 2
        %v4079 = vadd.f32 %v4076, %v4078
        %v4080 = vadd.f32 %v4077, %v4078
        %v4081 = vld [vmem:[%s384] sm:$0xff]
        %v4082 = vld [vmem:[%s384 + $0x8] sm:$0xff]
        %v4083 = vld [vmem:[%s384 + $0x10] sm:$0xff]
        %v4084 = vld [vmem:[%s384 + $0x18] sm:$0xff]
        %v4085 = vld [vmem:[%s387] sm:$0x1]
        %v4087 = vperm.slane %v4085, 0
        %v4090 = vsel %vm416, %v4079, 0
        %v4093 = vsel %vm416, %v4080, 0
        %4095 = vmatpush.msra.mxu0 0.0
        %4096 = vmatpush.msra.mxu0 0.0
        %4097 = vmatpush.msra.mxu0 0.0
        %4098 = vmatpush.msra.mxu0 0.0
        %4099 = vmatpush.msra.mxu0 0.0
        %4100 = vmatpush.msra.mxu0 0.0
        %4101 = vmatpush.msra.mxu0 0.0
        %4102 = vmatpush.msra.mxu0 0.0
        %4103 = vmatpush.msra.mxu0 0.0
        %4104 = vmatpush.msra.mxu0 0.0
        %4105 = vmatpush.msra.mxu0 0.0
        %4106 = vmatpush.msra.mxu0 0.0
        %v4107 = vand.u32 %v4084, 4294901760
        %4108 = vmatpush.msra.mxu0 %v4107
        %v4109 = vand.u32 %v4083, 4294901760
        %4110 = vmatpush.msra.mxu0 %v4109
        %v4111 = vand.u32 %v4082, 4294901760
        %4112 = vmatpush.msra.mxu0 %v4111
        %v4113 = vand.u32 %v4081, 4294901760
        %4114 = vmatpush.msra.mxu0 %v4113
        %v4115 = vand.u32 %v4090, 4294901760
        %v4116 = vsub.f32 %v4090, %v4115
        %v4117 = vand.u32 %v4116, 4294901760
        %v4118 = vsub.f32 %v4116, %v4117
        %v4119 = vand.u32 %v4118, 4294901760
        %4120 = vmatmul.f32.gmra.mxu0 %v4119
        %v4121 = vpop.f32.mrf.mxu0
        %v4122 = vadd.f32 %v4087, %v4121
        %v4123 = vand.u32 %v4093, 4294901760
        %v4124 = vsub.f32 %v4093, %v4123
        %v4125 = vand.u32 %v4124, 4294901760
        %v4126 = vsub.f32 %v4124, %v4125
        %v4127 = vand.u32 %v4126, 4294901760
        %4128 = vmatmul.f32.gmra.mxu0 %v4127
        %v4129 = vpop.f32.mrf.mxu0
        %v4130 = vadd.f32 %v4087, %v4129
        %4131 = vdwg.mxu0
        %4132 = vmatpush.msra.mxu0 0.0
        %4133 = vmatpush.msra.mxu0 0.0
        %4134 = vmatpush.msra.mxu0 0.0
        %4135 = vmatpush.msra.mxu0 0.0
        %4136 = vmatpush.msra.mxu0 0.0
        %4137 = vmatpush.msra.mxu0 0.0
        %4138 = vmatpush.msra.mxu0 0.0
        %4139 = vmatpush.msra.mxu0 0.0
        %4140 = vmatpush.msra.mxu0 0.0
        %4141 = vmatpush.msra.mxu0 0.0
        %4142 = vmatpush.msra.mxu0 0.0
        %4143 = vmatpush.msra.mxu0 0.0
        %v4144 = vand.u32 %v4084, 4294901760
        %v4145 = vsub.f32 %v4084, %v4144
        %v4146 = vand.u32 %v4145, 4294901760
        %v4147 = vsub.f32 %v4145, %v4146
        %v4148 = vand.u32 %v4147, 4294901760
        %4149 = vmatpush.msra.mxu0 %v4148
        %v4150 = vand.u32 %v4083, 4294901760
        %v4151 = vsub.f32 %v4083, %v4150
        %v4152 = vand.u32 %v4151, 4294901760
        %v4153 = vsub.f32 %v4151, %v4152
        %v4154 = vand.u32 %v4153, 4294901760
        %4155 = vmatpush.msra.mxu0 %v4154
        %v4156 = vand.u32 %v4082, 4294901760
        %v4157 = vsub.f32 %v4082, %v4156
        %v4158 = vand.u32 %v4157, 4294901760
        %v4159 = vsub.f32 %v4157, %v4158
        %v4160 = vand.u32 %v4159, 4294901760
        %4161 = vmatpush.msra.mxu0 %v4160
        %v4162 = vand.u32 %v4081, 4294901760
        %v4163 = vsub.f32 %v4081, %v4162
        %v4164 = vand.u32 %v4163, 4294901760
        %v4165 = vsub.f32 %v4163, %v4164
        %v4166 = vand.u32 %v4165, 4294901760
        %4167 = vmatpush.msra.mxu0 %v4166
        %v4168 = vand.u32 %v4090, 4294901760
        %4169 = vmatmul.f32.gmra.mxu0 %v4168
        %v4170 = vpop.f32.mrf.mxu0
        %v4171 = vadd.f32 %v4122, %v4170
        %v4172 = vand.u32 %v4093, 4294901760
        %4173 = vmatmul.f32.gmra.mxu0 %v4172
        %v4174 = vpop.f32.mrf.mxu0
        %v4175 = vadd.f32 %v4130, %v4174
        %4176 = vdwg.mxu0
        %4177 = vmatpush.msra.mxu0 0.0
        %4178 = vmatpush.msra.mxu0 0.0
        %4179 = vmatpush.msra.mxu0 0.0
        %4180 = vmatpush.msra.mxu0 0.0
        %4181 = vmatpush.msra.mxu0 0.0
        %4182 = vmatpush.msra.mxu0 0.0
        %4183 = vmatpush.msra.mxu0 0.0
        %4184 = vmatpush.msra.mxu0 0.0
        %4185 = vmatpush.msra.mxu0 0.0
        %4186 = vmatpush.msra.mxu0 0.0
        %4187 = vmatpush.msra.mxu0 0.0
        %4188 = vmatpush.msra.mxu0 0.0
        %v4189 = vand.u32 %v4084, 4294901760
        %v4190 = vsub.f32 %v4084, %v4189
        %4191 = vmatpush.msra.mxu0 %v4190
        %v4192 = vand.u32 %v4083, 4294901760
        %v4193 = vsub.f32 %v4083, %v4192
        %4194 = vmatpush.msra.mxu0 %v4193
        %v4195 = vand.u32 %v4082, 4294901760
        %v4196 = vsub.f32 %v4082, %v4195
        %4197 = vmatpush.msra.mxu0 %v4196
        %v4198 = vand.u32 %v4081, 4294901760
        %v4199 = vsub.f32 %v4081, %v4198
        %4200 = vmatpush.msra.mxu0 %v4199
        %v4201 = vand.u32 %v4090, 4294901760
        %v4202 = vsub.f32 %v4090, %v4201
        %4203 = vmatmul.f32.gmra.mxu0 %v4202
        %v4204 = vpop.f32.mrf.mxu0
        %v4205 = vadd.f32 %v4171, %v4204
        %v4206 = vand.u32 %v4093, 4294901760
        %v4207 = vsub.f32 %v4093, %v4206
        %4208 = vmatmul.f32.gmra.mxu0 %v4207
        %v4209 = vpop.f32.mrf.mxu0
        %v4210 = vadd.f32 %v4175, %v4209
        %4211 = vdwg.mxu0
        %4212 = vmatpush.msra.mxu0 0.0
        %4213 = vmatpush.msra.mxu0 0.0
        %4214 = vmatpush.msra.mxu0 0.0
        %4215 = vmatpush.msra.mxu0 0.0
        %4216 = vmatpush.msra.mxu0 0.0
        %4217 = vmatpush.msra.mxu0 0.0
        %4218 = vmatpush.msra.mxu0 0.0
        %4219 = vmatpush.msra.mxu0 0.0
        %4220 = vmatpush.msra.mxu0 0.0
        %4221 = vmatpush.msra.mxu0 0.0
        %4222 = vmatpush.msra.mxu0 0.0
        %4223 = vmatpush.msra.mxu0 0.0
        %v4224 = vand.u32 %v4084, 4294901760
        %4225 = vmatpush.msra.mxu0 %v4224
        %v4226 = vand.u32 %v4083, 4294901760
        %4227 = vmatpush.msra.mxu0 %v4226
        %v4228 = vand.u32 %v4082, 4294901760
        %4229 = vmatpush.msra.mxu0 %v4228
        %v4230 = vand.u32 %v4081, 4294901760
        %4231 = vmatpush.msra.mxu0 %v4230
        %v4232 = vand.u32 %v4090, 4294901760
        %v4233 = vsub.f32 %v4090, %v4232
        %v4234 = vand.u32 %v4233, 4294901760
        %4235 = vmatmul.f32.gmra.mxu0 %v4234
        %v4236 = vpop.f32.mrf.mxu0
        %v4237 = vadd.f32 %v4205, %v4236
        %v4238 = vand.u32 %v4093, 4294901760
        %v4239 = vsub.f32 %v4093, %v4238
        %v4240 = vand.u32 %v4239, 4294901760
        %4241 = vmatmul.f32.gmra.mxu0 %v4240
        %v4242 = vpop.f32.mrf.mxu0
        %v4243 = vadd.f32 %v4210, %v4242
        %4244 = vdwg.mxu0
        %4245 = vmatpush.msra.mxu0 0.0
        %4246 = vmatpush.msra.mxu0 0.0
        %4247 = vmatpush.msra.mxu0 0.0
        %4248 = vmatpush.msra.mxu0 0.0
        %4249 = vmatpush.msra.mxu0 0.0
        %4250 = vmatpush.msra.mxu0 0.0
        %4251 = vmatpush.msra.mxu0 0.0
        %4252 = vmatpush.msra.mxu0 0.0
        %4253 = vmatpush.msra.mxu0 0.0
        %4254 = vmatpush.msra.mxu0 0.0
        %4255 = vmatpush.msra.mxu0 0.0
        %4256 = vmatpush.msra.mxu0 0.0
        %v4257 = vand.u32 %v4084, 4294901760
        %v4258 = vsub.f32 %v4084, %v4257
        %v4259 = vand.u32 %v4258, 4294901760
        %4260 = vmatpush.msra.mxu0 %v4259
        %v4261 = vand.u32 %v4083, 4294901760
        %v4262 = vsub.f32 %v4083, %v4261
        %v4263 = vand.u32 %v4262, 4294901760
        %4264 = vmatpush.msra.mxu0 %v4263
        %v4265 = vand.u32 %v4082, 4294901760
        %v4266 = vsub.f32 %v4082, %v4265
        %v4267 = vand.u32 %v4266, 4294901760
        %4268 = vmatpush.msra.mxu0 %v4267
        %v4269 = vand.u32 %v4081, 4294901760
        %v4270 = vsub.f32 %v4081, %v4269
        %v4271 = vand.u32 %v4270, 4294901760
        %4272 = vmatpush.msra.mxu0 %v4271
        %v4273 = vand.u32 %v4090, 4294901760
        %4274 = vmatmul.f32.gmra.mxu0 %v4273
        %v4275 = vpop.f32.mrf.mxu0
        %v4276 = vadd.f32 %v4237, %v4275
        %v4277 = vand.u32 %v4093, 4294901760
        %4278 = vmatmul.f32.gmra.mxu0 %v4277
        %v4279 = vpop.f32.mrf.mxu0
        %v4280 = vadd.f32 %v4243, %v4279
        %4281 = vdwg.mxu0
        %4282 = vmatpush.msra.mxu0 0.0
        %4283 = vmatpush.msra.mxu0 0.0
        %4284 = vmatpush.msra.mxu0 0.0
        %4285 = vmatpush.msra.mxu0 0.0
        %4286 = vmatpush.msra.mxu0 0.0
        %4287 = vmatpush.msra.mxu0 0.0
        %4288 = vmatpush.msra.mxu0 0.0
        %4289 = vmatpush.msra.mxu0 0.0
        %4290 = vmatpush.msra.mxu0 0.0
        %4291 = vmatpush.msra.mxu0 0.0
        %4292 = vmatpush.msra.mxu0 0.0
        %4293 = vmatpush.msra.mxu0 0.0
        %v4294 = vand.u32 %v4084, 4294901760
        %4295 = vmatpush.msra.mxu0 %v4294
        %v4296 = vand.u32 %v4083, 4294901760
        %4297 = vmatpush.msra.mxu0 %v4296
        %v4298 = vand.u32 %v4082, 4294901760
        %4299 = vmatpush.msra.mxu0 %v4298
        %v4300 = vand.u32 %v4081, 4294901760
        %4301 = vmatpush.msra.mxu0 %v4300
        %v4302 = vand.u32 %v4090, 4294901760
        %4303 = vmatmul.f32.gmra.mxu0 %v4302
        %v4304 = vpop.f32.mrf.mxu0
        %v4305 = vadd.f32 %v4276, %v4304
        %v4306 = vand.u32 %v4093, 4294901760
        %4307 = vmatmul.f32.gmra.mxu0 %v4306
        %v4308 = vpop.f32.mrf.mxu0
        %v4309 = vadd.f32 %v4280, %v4308
        %4310 = vdwg.mxu0
        %v4311 = vmax.f32 %v4305, 0.0
        %v4312 = vmax.f32 %v4309, 0.0
        %v4313 = vld [vmem:[%s392] sm:$0xff]
        %v4314 = vld [vmem:[%s392 + $0x8] sm:$0xff]
        %v4315 = vld [vmem:[%s392 + $0x10] sm:$0xff]
        %v4316 = vld [vmem:[%s392 + $0x18] sm:$0xff]
        %v4317 = vld [vmem:[%s392 + $0x20] sm:$0xff]
        %v4318 = vld [vmem:[%s392 + $0x28] sm:$0xff]
        %v4319 = vld [vmem:[%s392 + $0x30] sm:$0xff]
        %v4320 = vld [vmem:[%s392 + $0x38] sm:$0xff]
        %v4321 = vperm.slane %v643, 3
        %vm4322 = vcmask 523264
        %v4324 = vsel %vm4322, %v4311, 0
        %v4327 = vsel %vm4322, %v4312, 0
        %4329 = vmatpush.msra.mxu0 0.0
        %4330 = vmatpush.msra.mxu0 0.0
        %4331 = vmatpush.msra.mxu0 0.0
        %4332 = vmatpush.msra.mxu0 0.0
        %4333 = vmatpush.msra.mxu0 0.0
        %4334 = vmatpush.msra.mxu0 0.0
        %4335 = vmatpush.msra.mxu0 0.0
        %4336 = vmatpush.msra.mxu0 0.0
        %v4337 = vand.u32 %v4320, 4294901760
        %4338 = vmatpush.msra.mxu0 %v4337
        %v4339 = vand.u32 %v4319, 4294901760
        %4340 = vmatpush.msra.mxu0 %v4339
        %v4341 = vand.u32 %v4318, 4294901760
        %4342 = vmatpush.msra.mxu0 %v4341
        %v4343 = vand.u32 %v4317, 4294901760
        %4344 = vmatpush.msra.mxu0 %v4343
        %v4345 = vand.u32 %v4316, 4294901760
        %4346 = vmatpush.msra.mxu0 %v4345
        %v4347 = vand.u32 %v4315, 4294901760
        %4348 = vmatpush.msra.mxu0 %v4347
        %v4349 = vand.u32 %v4314, 4294901760
        %4350 = vmatpush.msra.mxu0 %v4349
        %v4351 = vand.u32 %v4313, 4294901760
        %4352 = vmatpush.msra.mxu0 %v4351
        %v4353 = vand.u32 %v4324, 4294901760
        %v4354 = vsub.f32 %v4324, %v4353
        %v4355 = vand.u32 %v4354, 4294901760
        %v4356 = vsub.f32 %v4354, %v4355
        %v4357 = vand.u32 %v4356, 4294901760
        %4358 = vmatmul.f32.gmra.mxu0 %v4357
        %v4359 = vpop.f32.mrf.mxu0
        %v4360 = vadd.f32 %v4321, %v4359
        %v4361 = vand.u32 %v4327, 4294901760
        %v4362 = vsub.f32 %v4327, %v4361
        %v4363 = vand.u32 %v4362, 4294901760
        %v4364 = vsub.f32 %v4362, %v4363
        %v4365 = vand.u32 %v4364, 4294901760
        %4366 = vmatmul.f32.gmra.mxu0 %v4365
        %v4367 = vpop.f32.mrf.mxu0
        %v4368 = vadd.f32 %v4321, %v4367
        %4369 = vdwg.mxu0
        %4370 = vmatpush.msra.mxu0 0.0
        %4371 = vmatpush.msra.mxu0 0.0
        %4372 = vmatpush.msra.mxu0 0.0
        %4373 = vmatpush.msra.mxu0 0.0
        %4374 = vmatpush.msra.mxu0 0.0
        %4375 = vmatpush.msra.mxu0 0.0
        %4376 = vmatpush.msra.mxu0 0.0
        %4377 = vmatpush.msra.mxu0 0.0
        %v4378 = vand.u32 %v4320, 4294901760
        %v4379 = vsub.f32 %v4320, %v4378
        %v4380 = vand.u32 %v4379, 4294901760
        %v4381 = vsub.f32 %v4379, %v4380
        %v4382 = vand.u32 %v4381, 4294901760
        %4383 = vmatpush.msra.mxu0 %v4382
        %v4384 = vand.u32 %v4319, 4294901760
        %v4385 = vsub.f32 %v4319, %v4384
        %v4386 = vand.u32 %v4385, 4294901760
        %v4387 = vsub.f32 %v4385, %v4386
        %v4388 = vand.u32 %v4387, 4294901760
        %4389 = vmatpush.msra.mxu0 %v4388
        %v4390 = vand.u32 %v4318, 4294901760
        %v4391 = vsub.f32 %v4318, %v4390
        %v4392 = vand.u32 %v4391, 4294901760
        %v4393 = vsub.f32 %v4391, %v4392
        %v4394 = vand.u32 %v4393, 4294901760
        %4395 = vmatpush.msra.mxu0 %v4394
        %v4396 = vand.u32 %v4317, 4294901760
        %v4397 = vsub.f32 %v4317, %v4396
        %v4398 = vand.u32 %v4397, 4294901760
        %v4399 = vsub.f32 %v4397, %v4398
        %v4400 = vand.u32 %v4399, 4294901760
        %4401 = vmatpush.msra.mxu0 %v4400
        %v4402 = vand.u32 %v4316, 4294901760
        %v4403 = vsub.f32 %v4316, %v4402
        %v4404 = vand.u32 %v4403, 4294901760
        %v4405 = vsub.f32 %v4403, %v4404
        %v4406 = vand.u32 %v4405, 4294901760
        %4407 = vmatpush.msra.mxu0 %v4406
        %v4408 = vand.u32 %v4315, 4294901760
        %v4409 = vsub.f32 %v4315, %v4408
        %v4410 = vand.u32 %v4409, 4294901760
        %v4411 = vsub.f32 %v4409, %v4410
        %v4412 = vand.u32 %v4411, 4294901760
        %4413 = vmatpush.msra.mxu0 %v4412
        %v4414 = vand.u32 %v4314, 4294901760
        %v4415 = vsub.f32 %v4314, %v4414
        %v4416 = vand.u32 %v4415, 4294901760
        %v4417 = vsub.f32 %v4415, %v4416
        %v4418 = vand.u32 %v4417, 4294901760
        %4419 = vmatpush.msra.mxu0 %v4418
        %v4420 = vand.u32 %v4313, 4294901760
        %v4421 = vsub.f32 %v4313, %v4420
        %v4422 = vand.u32 %v4421, 4294901760
        %v4423 = vsub.f32 %v4421, %v4422
        %v4424 = vand.u32 %v4423, 4294901760
        %4425 = vmatpush.msra.mxu0 %v4424
        %v4426 = vand.u32 %v4324, 4294901760
        %4427 = vmatmul.f32.gmra.mxu0 %v4426
        %v4428 = vpop.f32.mrf.mxu0
        %v4429 = vadd.f32 %v4360, %v4428
        %v4430 = vand.u32 %v4327, 4294901760
        %4431 = vmatmul.f32.gmra.mxu0 %v4430
        %v4432 = vpop.f32.mrf.mxu0
        %v4433 = vadd.f32 %v4368, %v4432
        %4434 = vdwg.mxu0
        %4435 = vmatpush.msra.mxu0 0.0
        %4436 = vmatpush.msra.mxu0 0.0
        %4437 = vmatpush.msra.mxu0 0.0
        %4438 = vmatpush.msra.mxu0 0.0
        %4439 = vmatpush.msra.mxu0 0.0
        %4440 = vmatpush.msra.mxu0 0.0
        %4441 = vmatpush.msra.mxu0 0.0
        %4442 = vmatpush.msra.mxu0 0.0
        %v4443 = vand.u32 %v4320, 4294901760
        %v4444 = vsub.f32 %v4320, %v4443
        %4445 = vmatpush.msra.mxu0 %v4444
        %v4446 = vand.u32 %v4319, 4294901760
        %v4447 = vsub.f32 %v4319, %v4446
        %4448 = vmatpush.msra.mxu0 %v4447
        %v4449 = vand.u32 %v4318, 4294901760
        %v4450 = vsub.f32 %v4318, %v4449
        %4451 = vmatpush.msra.mxu0 %v4450
        %v4452 = vand.u32 %v4317, 4294901760
        %v4453 = vsub.f32 %v4317, %v4452
        %4454 = vmatpush.msra.mxu0 %v4453
        %v4455 = vand.u32 %v4316, 4294901760
        %v4456 = vsub.f32 %v4316, %v4455
        %4457 = vmatpush.msra.mxu0 %v4456
        %v4458 = vand.u32 %v4315, 4294901760
        %v4459 = vsub.f32 %v4315, %v4458
        %4460 = vmatpush.msra.mxu0 %v4459
        %v4461 = vand.u32 %v4314, 4294901760
        %v4462 = vsub.f32 %v4314, %v4461
        %4463 = vmatpush.msra.mxu0 %v4462
        %v4464 = vand.u32 %v4313, 4294901760
        %v4465 = vsub.f32 %v4313, %v4464
        %4466 = vmatpush.msra.mxu0 %v4465
        %v4467 = vand.u32 %v4324, 4294901760
        %v4468 = vsub.f32 %v4324, %v4467
        %4469 = vmatmul.f32.gmra.mxu0 %v4468
        %v4470 = vpop.f32.mrf.mxu0
        %v4471 = vadd.f32 %v4429, %v4470
        %v4472 = vand.u32 %v4327, 4294901760
        %v4473 = vsub.f32 %v4327, %v4472
        %4474 = vmatmul.f32.gmra.mxu0 %v4473
        %v4475 = vpop.f32.mrf.mxu0
        %v4476 = vadd.f32 %v4433, %v4475
        %4477 = vdwg.mxu0
        %4478 = vmatpush.msra.mxu0 0.0
        %4479 = vmatpush.msra.mxu0 0.0
        %4480 = vmatpush.msra.mxu0 0.0
        %4481 = vmatpush.msra.mxu0 0.0
        %4482 = vmatpush.msra.mxu0 0.0
        %4483 = vmatpush.msra.mxu0 0.0
        %4484 = vmatpush.msra.mxu0 0.0
        %4485 = vmatpush.msra.mxu0 0.0
        %v4486 = vand.u32 %v4320, 4294901760
        %4487 = vmatpush.msra.mxu0 %v4486
        %v4488 = vand.u32 %v4319, 4294901760
        %4489 = vmatpush.msra.mxu0 %v4488
        %v4490 = vand.u32 %v4318, 4294901760
        %4491 = vmatpush.msra.mxu0 %v4490
        %v4492 = vand.u32 %v4317, 4294901760
        %4493 = vmatpush.msra.mxu0 %v4492
        %v4494 = vand.u32 %v4316, 4294901760
        %4495 = vmatpush.msra.mxu0 %v4494
        %v4496 = vand.u32 %v4315, 4294901760
        %4497 = vmatpush.msra.mxu0 %v4496
        %v4498 = vand.u32 %v4314, 4294901760
        %4499 = vmatpush.msra.mxu0 %v4498
        %v4500 = vand.u32 %v4313, 4294901760
        %4501 = vmatpush.msra.mxu0 %v4500
        %v4502 = vand.u32 %v4324, 4294901760
        %v4503 = vsub.f32 %v4324, %v4502
        %v4504 = vand.u32 %v4503, 4294901760
        %4505 = vmatmul.f32.gmra.mxu0 %v4504
        %v4506 = vpop.f32.mrf.mxu0
        %v4507 = vadd.f32 %v4471, %v4506
        %v4508 = vand.u32 %v4327, 4294901760
        %v4509 = vsub.f32 %v4327, %v4508
        %v4510 = vand.u32 %v4509, 4294901760
        %4511 = vmatmul.f32.gmra.mxu0 %v4510
        %v4512 = vpop.f32.mrf.mxu0
        %v4513 = vadd.f32 %v4476, %v4512
        %4514 = vdwg.mxu0
        %4515 = vmatpush.msra.mxu0 0.0
        %4516 = vmatpush.msra.mxu0 0.0
        %4517 = vmatpush.msra.mxu0 0.0
        %4518 = vmatpush.msra.mxu0 0.0
        %4519 = vmatpush.msra.mxu0 0.0
        %4520 = vmatpush.msra.mxu0 0.0
        %4521 = vmatpush.msra.mxu0 0.0
        %4522 = vmatpush.msra.mxu0 0.0
        %v4523 = vand.u32 %v4320, 4294901760
        %v4524 = vsub.f32 %v4320, %v4523
        %v4525 = vand.u32 %v4524, 4294901760
        %4526 = vmatpush.msra.mxu0 %v4525
        %v4527 = vand.u32 %v4319, 4294901760
        %v4528 = vsub.f32 %v4319, %v4527
        %v4529 = vand.u32 %v4528, 4294901760
        %4530 = vmatpush.msra.mxu0 %v4529
        %v4531 = vand.u32 %v4318, 4294901760
        %v4532 = vsub.f32 %v4318, %v4531
        %v4533 = vand.u32 %v4532, 4294901760
        %4534 = vmatpush.msra.mxu0 %v4533
        %v4535 = vand.u32 %v4317, 4294901760
        %v4536 = vsub.f32 %v4317, %v4535
        %v4537 = vand.u32 %v4536, 4294901760
        %4538 = vmatpush.msra.mxu0 %v4537
        %v4539 = vand.u32 %v4316, 4294901760
        %v4540 = vsub.f32 %v4316, %v4539
        %v4541 = vand.u32 %v4540, 4294901760
        %4542 = vmatpush.msra.mxu0 %v4541
        %v4543 = vand.u32 %v4315, 4294901760
        %v4544 = vsub.f32 %v4315, %v4543
        %v4545 = vand.u32 %v4544, 4294901760
        %4546 = vmatpush.msra.mxu0 %v4545
        %v4547 = vand.u32 %v4314, 4294901760
        %v4548 = vsub.f32 %v4314, %v4547
        %v4549 = vand.u32 %v4548, 4294901760
        %4550 = vmatpush.msra.mxu0 %v4549
        %v4551 = vand.u32 %v4313, 4294901760
        %v4552 = vsub.f32 %v4313, %v4551
        %v4553 = vand.u32 %v4552, 4294901760
        %4554 = vmatpush.msra.mxu0 %v4553
        %v4555 = vand.u32 %v4324, 4294901760
        %4556 = vmatmul.f32.gmra.mxu0 %v4555
        %v4557 = vpop.f32.mrf.mxu0
        %v4558 = vadd.f32 %v4507, %v4557
        %v4559 = vand.u32 %v4327, 4294901760
        %4560 = vmatmul.f32.gmra.mxu0 %v4559
        %v4561 = vpop.f32.mrf.mxu0
        %v4562 = vadd.f32 %v4513, %v4561
        %4563 = vdwg.mxu0
        %4564 = vmatpush.msra.mxu0 0.0
        %4565 = vmatpush.msra.mxu0 0.0
        %4566 = vmatpush.msra.mxu0 0.0
        %4567 = vmatpush.msra.mxu0 0.0
        %4568 = vmatpush.msra.mxu0 0.0
        %4569 = vmatpush.msra.mxu0 0.0
        %4570 = vmatpush.msra.mxu0 0.0
        %4571 = vmatpush.msra.mxu0 0.0
        %v4572 = vand.u32 %v4320, 4294901760
        %4573 = vmatpush.msra.mxu0 %v4572
        %v4574 = vand.u32 %v4319, 4294901760
        %4575 = vmatpush.msra.mxu0 %v4574
        %v4576 = vand.u32 %v4318, 4294901760
        %4577 = vmatpush.msra.mxu0 %v4576
        %v4578 = vand.u32 %v4317, 4294901760
        %4579 = vmatpush.msra.mxu0 %v4578
        %v4580 = vand.u32 %v4316, 4294901760
        %4581 = vmatpush.msra.mxu0 %v4580
        %v4582 = vand.u32 %v4315, 4294901760
        %4583 = vmatpush.msra.mxu0 %v4582
        %v4584 = vand.u32 %v4314, 4294901760
        %4585 = vmatpush.msra.mxu0 %v4584
        %v4586 = vand.u32 %v4313, 4294901760
        %4587 = vmatpush.msra.mxu0 %v4586
        %v4588 = vand.u32 %v4324, 4294901760
        %4589 = vmatmul.f32.gmra.mxu0 %v4588
        %v4590 = vpop.f32.mrf.mxu0
        %v4591 = vadd.f32 %v4558, %v4590
        %v4592 = vand.u32 %v4327, 4294901760
        %4593 = vmatmul.f32.gmra.mxu0 %v4592
        %v4594 = vpop.f32.mrf.mxu0
        %v4595 = vadd.f32 %v4562, %v4594
        %4596 = vdwg.mxu0
        %v4597 = vadd.f32 %v4591, %v4079
        %v4598 = vadd.f32 %v4595, %v4080
        %v4599 = vsel %vm416, %v4597, 0.0
        %4600 = vadd.xlane.f32.xlu0 %v4599
        %v4601 = vpop.xlane.xlu0 %4600
        %v4602 = vsel %vm416, %v4598, 0.0
        %4603 = vadd.xlane.f32.xlu0 %v4602
        %v4604 = vpop.xlane.xlu0 %4603
        %v4605 = vmul.f32 %v4601, %v4036
        %v4606 = vmul.f32 %v4604, %v4036
        %v4607 = vsub.f32 %v4597, %v4605
        %v4608 = vsub.f32 %v4598, %v4606
        %v4609 = vmul.f32 %v4607, %v4607
        %v4610 = vmul.f32 %v4608, %v4608
        %v4611 = vsel %vm416, %v4609, 0.0
        %4612 = vadd.xlane.f32.xlu0 %v4611
        %v4613 = vpop.xlane.xlu0 %4612
        %v4614 = vsel %vm416, %v4610, 0.0
        %4615 = vadd.xlane.f32.xlu0 %v4614
        %v4616 = vpop.xlane.xlu0 %4615
        %v4617 = vmul.f32 %v4613, %v4036
        %v4618 = vmul.f32 %v4616, %v4036
        %v4619 = vadd.f32 %v4617, 1e-05
        %v4620 = vadd.f32 %v4618, 1e-05
        %v4621 = vrsqrt.pop %v4619
        %v4622 = vmul.f32 %v4621, %v4619
        %v4623 = vmul.f32 %v4622, %v4621
        %v4624 = vmul.f32 0.5, %v4623
        %v4625 = vsub.f32 1.5, %v4624
        %v4626 = vmul.f32 %v4621, %v4625
        %vm4627 = vweird.f32 %v4619
        %vm4628 = vweird.f32 %v4621
        %vm4629 = vmor %vm4627, %vm4628
        %v4630 = vsel %vm4629, %v4621, %v4626
        %v4631 = vrsqrt.pop %v4620
        %v4632 = vmul.f32 %v4631, %v4620
        %v4633 = vmul.f32 %v4632, %v4631
        %v4634 = vmul.f32 0.5, %v4633
        %v4635 = vsub.f32 1.5, %v4634
        %v4636 = vmul.f32 %v4631, %v4635
        %vm4637 = vweird.f32 %v4620
        %vm4638 = vweird.f32 %v4631
        %vm4639 = vmor %vm4637, %vm4638
        %v4640 = vsel %vm4639, %v4631, %v4636
        %v4641 = vmul.f32 %v4607, %v4630
        %v4642 = vmul.f32 %v4608, %v4640
        %v4643 = vperm.slane %v643, 4
        %v4644 = vmul.f32 %v4641, %v4643
        %v4645 = vmul.f32 %v4642, %v4643
        %v4646 = vperm.slane %v643, 5
        %v4647 = vadd.f32 %v4644, %v4646
        %v4648 = vadd.f32 %v4645, %v4646
        %4649 = vst.msk [vmem:[#allocation2] sm:$0xff] %vm416, %v4647
        %4650 = vst.msk [vmem:[#allocation2 + $0x8] sm:$0xff] %vm416, %v4648
        %4651 = vst.msk [vmem:[#allocation3] sm:$0xff] %vm416, %v4647
        %4652 = vst.msk [vmem:[#allocation3 + $0x8] sm:$0xff] %vm416, %v4648
        // Predicated region
        $region57: #{tpu_custom_call.1} parent=51 // pred_check
          %p4653 = pneg %p236
        $region58: #{tpu_custom_call.1} parent=51 // pred_check_branch
          %4655 = sbr.rel (%p4653) target = $region60
        $region59: #{tpu_custom_call.1} parent=51 // pred_region
          %4657 = vsyncadd [#allocation4], 0
          %s4658 = sshll.u32 [#allocation3], 4
          %s4659 = int_to_ptr.vmem [resolvable:$true] %s4658
          %s4660 = sshll.u32 %s8, 4
          %s4661 = int_to_ptr.hbm [resolvable:$true] %s4660
          %4666 = dma.vmem_to_hbm [thread:$0]  %s4659, 256, %s4661, [#allocation4], 128, 128, 8
        $region60: #{tpu_custom_call.1} parent=51 // pred_fallthru
          _
        // Predicated region
        $region61: #{tpu_custom_call.1} parent=51 // pred_check
          %p4667 = pneg %p236
        $region62: #{tpu_custom_call.1} parent=51 // pred_check_branch
          %4669 = sbr.rel (%p4667) target = $region64
        $region63: #{tpu_custom_call.1} parent=51 // pred_region
          %4671 = dma.done [#allocation4], 256
        $region64: #{tpu_custom_call.1} parent=51 // pred_fallthru
          _
      $region52: #{tpu_custom_call.1} parent=5 // pred_fallthru
        _
      %p4672 = scmp.le.s32.totalorder 2, %s15
      // Predicated region
      $region65: #{tpu_custom_call.1} parent=5 // pred_check
        %p4673 = pneg %p4672
      $region66: #{tpu_custom_call.1} parent=5 // pred_check_branch
        %4675 = sbr.rel (%p4673) target = $region68
      $region67: #{tpu_custom_call.1} parent=5 // pred_region
        %s4676 = ssub.s32 %s15, 2
      $region68: #{tpu_custom_call.1} parent=5 // pred_fallthru
        _
    $region6: #{tpu_custom_call.1} parent=1 // loop_footer
      %s19 = sadd.s32 1, %s15
    $region7: #{tpu_custom_call.1} parent=1 // loop_footer_branch
      %14 = sbr.rel target = $region3
    $region8: #{tpu_custom_call.1} parent=1 // loop_exit
      _
    %4677 = vsyncpa [#allocation4], 1
    %s4678 = scalar_lea.sflag [#allocation4], 1
    %4679 = vsyncpa %s4678, 1

</llo_original>
